<compile_context>
chip_gen: v6e
topology: v6e:2x2x1
jax: 0.10.0
libtpu: 0.0.40
codegen_flags: <defaults>
</compile_context>

<pallas_src>
import functools

import jax
import jax.numpy as jnp
from jax.experimental import pallas as pl
from jax.experimental.pallas import tpu as pltpu


def _sentence_encoder_kernel(x_ref, mask_ref, maskrev_ref,
                             wih_ref, bih_ref, whh_ref,
                             aw_ref, ab_ref, bw_ref,
                             out_ref,
                             proj_ref, mgate_ref, hcat_ref, *, hidden):
    H = hidden
    x = x_ref[...]                       # (B, T, 2D): [x_t | x_{T-1-t}]
    B, T, D2 = x.shape

    # ---- Hoisted input projection: both directions, all timesteps, one matmul. ----
    proj = (jnp.dot(x.reshape(B * T, D2), wih_ref[...],
                    preferred_element_type=jnp.float32)
            + bih_ref[...])              # (B*T, 8H), biases folded in once
    # Stage in VMEM so the unrolled recurrence reads one (B, 8H) slice per step.
    proj_ref[...] = proj.reshape(B, T, 8 * H)

    # ---- Per-step gating mask, fwd/bwd halves, staged once (off the serial path). ----
    m = mask_ref[...]                    # (B, T) float32, 1.0 = valid (fwd time order)
    mr = maskrev_ref[...]                # (B, T) time-reversed mask (bwd direction)
    mgate_ref[:, :, 0:H] = jnp.broadcast_to(m[:, :, None], (B, T, H))
    mgate_ref[:, :, H:2 * H] = jnp.broadcast_to(mr[:, :, None], (B, T, H))

    whh = whh_ref[...]                   # (2H, 8H) block-diagonal, cols i,i,f,f,o,o,g,g

    # ---- Fused bidirectional recurrence: one matmul per timestep. ----
    h = jnp.zeros((B, 2 * H), jnp.float32)   # [h_fwd | h_bwd]
    c = jnp.zeros((B, 2 * H), jnp.float32)
    for s in range(T):                   # T is small & static -> fully unrolled
        gates = proj_ref[:, s, :] + jnp.dot(h, whh,
                                            preferred_element_type=jnp.float32)
        sig = jax.nn.sigmoid(gates[:, :6 * H])     # i|f|o, both directions
        i = sig[:, 0:2 * H]
        f = sig[:, 2 * H:4 * H]
        o = sig[:, 4 * H:6 * H]
        g = jnp.tanh(gates[:, 6 * H:8 * H])        # g, both directions
        c_new = f * c + i * g
        h_new = o * jnp.tanh(c_new)
        # PackedSequence semantics: padded steps do not advance the state.
        mt = mgate_ref[:, s, :]                    # (B, 2H)
        h = jnp.where(mt > 0.0, h_new, h)
        c = jnp.where(mt > 0.0, c_new, c)
        # fwd hidden belongs to time s, bwd hidden to time T-1-s.
        hcat_ref[:, s, 0:H] = h[:, 0:H]
        hcat_ref[:, T - 1 - s, H:2 * H] = h[:, H:2 * H]

    hcat = hcat_ref[...]                 # (B, T, 2H), time-aligned [hf | hb]

    # ---- Self-attention: one (B*T, 2H)@(2H, H) matmul + VPU score reduction. ----
    f_att = jnp.tanh(
        jnp.dot(hcat.reshape(B * T, 2 * H), aw_ref[...],
                preferred_element_type=jnp.float32)
        + ab_ref[...])                                              # (B*T, H)
    s_sc = jnp.sum(f_att.reshape(B, T, H) * bw_ref[...], axis=-1)   # (B, T)

    # Mask invalid positions, softmax over T.
    s_sc = jnp.where(m > 0.0, s_sc, jnp.float32(-1e9))
    mx = jnp.max(s_sc, axis=-1, keepdims=True)
    e = jnp.exp(s_sc - mx)
    attn = e / jnp.sum(e, axis=-1, keepdims=True)                   # (B, T)

    # ---- Attention-weighted pooling: single reduction over T, no concatenate. ----
    out_ref[...] = jnp.sum(hcat * attn[:, :, None], axis=1).astype(out_ref.dtype)


def _fuse_weights(params):
    """Build block-diagonal, gate-reordered, pre-transposed (lane-dense) weights."""
    H = params["whh_f"].shape[1]
    D = params["wih_f"].shape[1]
    f32 = jnp.float32

    # PyTorch gate order inside the 4H axis: 0=i, 1=f, 2=g, 3=o.
    def gate_w(w, k):                    # (4H, K) -> (K, H) transposed gate block
        return w[k * H:(k + 1) * H, :].T.astype(f32)

    def gate_b(b, k):                    # (1, 4H) -> (1, H)
        return b[:, k * H:(k + 1) * H].astype(f32)

    zd = jnp.zeros((D, H), f32)
    zh = jnp.zeros((H, H), f32)

    # Fused gate-column order (each block H wide): i_f,i_b,f_f,f_b,o_f,o_b,g_f,g_b
    wih_cols, whh_cols, b_cols = [], [], []
    for k in (0, 1, 3, 2):               # i, f, o, g
        wih_cols.append(jnp.concatenate([gate_w(params["wih_f"], k), zd], axis=0))
        wih_cols.append(jnp.concatenate([zd, gate_w(params["wih_b"], k)], axis=0))
        whh_cols.append(jnp.concatenate([gate_w(params["whh_f"], k), zh], axis=0))
        whh_cols.append(jnp.concatenate([zh, gate_w(params["whh_b"], k)], axis=0))
        b_cols.append(gate_b(params["b_f"], k))
        b_cols.append(gate_b(params["b_b"], k))

    wih_fused = jnp.concatenate(wih_cols, axis=1)    # (2D, 8H) block-diagonal
    whh_fused = jnp.concatenate(whh_cols, axis=1)    # (2H, 8H) block-diagonal
    bih_fused = jnp.concatenate(b_cols, axis=1)      # (1, 8H)
    aw_t = params["aW"].T.astype(f32)                # (2H, H)
    return wih_fused, bih_fused, whh_fused, aw_t, params["ab"], params["bW"]


def sentence_encoder(x, mask, params, *, batch_tile=None):
    """x: (B, T, D) float32, mask: (B, T) int/bool (1 = valid token)."""
    B, T, D = x.shape
    H = params["whh_f"].shape[1]

    wih, bih, whh, aw_t, ab, bw = _fuse_weights(params)

    # Batch tile: as large as possible (bigger MXU M) up to 128 rows; >=2 grid
    # points naturally appear for large B (both v7x TensorCores get work).
    if batch_tile is None:
        batch_tile = ((B + 7) // 8) * 8 if B <= 128 else 128
    bp = -(-B // batch_tile) * batch_tile

    mask_f = mask.astype(jnp.float32)
    if bp != B:
        x = jnp.pad(x, ((0, bp - B), (0, 0), (0, 0)))
        mask_f = jnp.pad(mask_f, ((0, bp - B), (0, 0)))

    # Backward-direction inputs & mask time-reversed in the wrapper so kernel step s
    # reads contiguous fwd/bwd gate inputs for times s and T-1-s respectively.
    x_fused = jnp.concatenate([x, x[:, ::-1, :]], axis=-1)           # (bp, T, 2D)
    mask_rev = mask_f[:, ::-1]                                        # (bp, T)

    kernel = functools.partial(_sentence_encoder_kernel, hidden=H)
    full = lambda b: (0, 0)

    # Explicit VMEM budget (v7x has 64 MiB physical / 32 MiB scoped default):
    # inputs (double-buffered), weights, output, plus the three scratch buffers.
    tile_bytes = 4 * (
        2 * (batch_tile * T * (2 * D + 2) + batch_tile * 2 * H)      # tiled I/O x2
        + (2 * D + 2 * H) * 8 * H + 8 * H + 2 * H * H + 2 * H        # weights
        + batch_tile * T * 12 * H)                                    # scratch 8H+2H+2H
    vmem_limit = int(min(60 * 1024 * 1024, max(16 * 1024 * 1024, 2 * tile_bytes)))

    out = pl.pallas_call(
        kernel,
        out_shape=jax.ShapeDtypeStruct((bp, 2 * H), jnp.float32),
        grid_spec=pltpu.PrefetchScalarGridSpec(
            num_scalar_prefetch=0,
            grid=(bp // batch_tile,),
            in_specs=[
                pl.BlockSpec((batch_tile, T, 2 * D), lambda b: (b, 0, 0)),  # x_fused
                pl.BlockSpec((batch_tile, T), lambda b: (b, 0)),            # mask
                pl.BlockSpec((batch_tile, T), lambda b: (b, 0)),            # mask_rev
                pl.BlockSpec((2 * D, 8 * H), full),                         # W_ih fused
                pl.BlockSpec((1, 8 * H), full),                             # bias fused
                pl.BlockSpec((2 * H, 8 * H), full),                         # W_hh fused
                pl.BlockSpec((2 * H, H), full),                             # aW.T
                pl.BlockSpec((1, H), full),                                 # ab
                pl.BlockSpec((1, H), full),                                 # bW
            ],
            out_specs=pl.BlockSpec((batch_tile, 2 * H), lambda b: (b, 0)),
            scratch_shapes=[
                pltpu.VMEM((batch_tile, T, 8 * H), jnp.float32),   # staged gate inputs
                pltpu.VMEM((batch_tile, T, 2 * H), jnp.float32),   # staged step masks
                pltpu.VMEM((batch_tile, T, 2 * H), jnp.float32),   # [hf | hb] hiddens
            ],
        ),
        compiler_params=pltpu.CompilerParams(
            dimension_semantics=("parallel",),
            vmem_limit_bytes=vmem_limit),
    )(x_fused, mask_f, mask_rev, wih, bih, whh, aw_t, ab, bw)
    return out[:B]


def init_params(key, word_dim, hidden_dim):
    H, D = hidden_dim, word_dim
    ks = jax.random.split(key, 9)
    scale = 0.1
    return {
        # forward-direction LSTM (PyTorch layout: (4H, D)/(4H, H), gate order i,f,g,o)
        "wih_f": scale * jax.random.normal(ks[0], (4 * H, D), jnp.float32),
        "whh_f": scale * jax.random.normal(ks[1], (4 * H, H), jnp.float32),
        "b_f":   scale * jax.random.normal(ks[2], (1, 4 * H), jnp.float32),
        # backward-direction LSTM
        "wih_b": scale * jax.random.normal(ks[3], (4 * H, D), jnp.float32),
        "whh_b": scale * jax.random.normal(ks[4], (4 * H, H), jnp.float32),
        "b_b":   scale * jax.random.normal(ks[5], (1, 4 * H), jnp.float32),
        # SelfAttentionLayer: a = Linear(2H -> H, bias), b = Linear(H -> 1, no bias)
        "aW":    scale * jax.random.normal(ks[6], (H, 2 * H), jnp.float32),
        "ab":    scale * jax.random.normal(ks[7], (1, H), jnp.float32),
        "bW":    scale * jax.random.normal(ks[8], (1, H), jnp.float32),
    }


def sentence_encoder_ref(x, mask, params):
    """Pure-JAX reference (same masked-recurrence semantics as the kernel)."""
    B, T, D = x.shape
    H = params["whh_f"].shape[1]
    m = mask.astype(jnp.float32)

    def run_dir(wih, whh, b, reverse):
        h = jnp.zeros((B, H), jnp.float32)
        c = jnp.zeros((B, H), jnp.float32)
        hs = [None] * T
        order = range(T - 1, -1, -1) if reverse else range(T)
        for t in order:
            gates = x[:, t, :] @ wih.T + h @ whh.T + b
            i = jax.nn.sigmoid(gates[:, :H])
            f = jax.nn.sigmoid(gates[:, H:2 * H])
            g = jnp.tanh(gates[:, 2 * H:3 * H])
            o = jax.nn.sigmoid(gates[:, 3 * H:])
            c_new = f * c + i * g
            h_new = o * jnp.tanh(c_new)
            mt = m[:, t:t + 1]
            h = mt * h_new + (1.0 - mt) * h
            c = mt * c_new + (1.0 - mt) * c
            hs[t] = h
        return jnp.stack(hs, axis=1)    # (B, T, H)

    hf = run_dir(params["wih_f"], params["whh_f"], params["b_f"], False)
    hb = run_dir(params["wih_b"], params["whh_b"], params["b_b"], True)
    hcat = jnp.concatenate([hf, hb], axis=-1)              # (B, T, 2H)
    f_att = jnp.tanh(hcat @ params["aW"].T + params["ab"])
    s = (f_att @ params["bW"].T)[..., 0]                   # (B, T)
    s = jnp.where(mask > 0, s, jnp.float32(-1e9))
    attn = jax.nn.softmax(s, axis=-1)
    return jnp.sum(hcat * attn[:, :, None], axis=1)        # (B, 2H)


if __name__ == "__main__":
    B, T = 2, 8          # batch, sequence length
    word_dim = 32        # opt['word_dim']
    hidden_dim = 32      # opt['hidden_dim']

    key = jax.random.PRNGKey(0)
    kx, kp = jax.random.split(key)
    x = jax.random.normal(kx, (B, T, word_dim), jnp.float32)
    # valid-token mask: first sequence full length, second shorter
    lengths = jnp.array([T, T - 3], jnp.int32)
    mask = (jnp.arange(T)[None, :] < lengths[:, None]).astype(jnp.int32)

    params = init_params(kp, word_dim, hidden_dim)

    out = sentence_encoder(x, mask, params)
    jax.block_until_ready(out)
    assert out.shape == (B, 2 * hidden_dim)

    ref = sentence_encoder_ref(x, mask, params)
    assert jnp.allclose(out, ref, atol=2e-3, rtol=2e-3), float(
        jnp.max(jnp.abs(out - ref)))
    print("KERNEL_OK")
</pallas_src>

<mosaic_0001>
module attributes {stable_mosaic.version = 11 : i64} {
  func.func @_sentence_encoder_kernel(%arg0: i32, %arg1: memref<8x8x64xf32, #tpu.memory_space<vmem>>, %arg2: memref<8x8xf32, #tpu.memory_space<vmem>>, %arg3: memref<8x8xf32, #tpu.memory_space<vmem>>, %arg4: memref<64x256xf32, #tpu.memory_space<vmem>>, %arg5: memref<1x256xf32, #tpu.memory_space<vmem>>, %arg6: memref<64x256xf32, #tpu.memory_space<vmem>>, %arg7: memref<64x32xf32, #tpu.memory_space<vmem>>, %arg8: memref<1x32xf32, #tpu.memory_space<vmem>>, %arg9: memref<1x32xf32, #tpu.memory_space<vmem>>, %arg10: memref<8x64xf32, #tpu.memory_space<vmem>>, %arg11: memref<8x8x256xf32, #tpu.memory_space<vmem>>, %arg12: memref<8x8x64xf32, #tpu.memory_space<vmem>>, %arg13: memref<8x8x64xf32, #tpu.memory_space<vmem>>) attributes {dimension_semantics = [#tpu.dimension_semantics<parallel>], iteration_bounds = array<i64: 1>, scalar_prefetch = 0 : i64, scratch_operands = 3 : i64, tpu.core_type = #tpu.core_type<tc>, window_params = [{transform_indices = @transform_0, window_bounds = array<i64: 8, 8, 64>}, {transform_indices = @transform_1, window_bounds = array<i64: 8, 8>}, {transform_indices = @transform_2, window_bounds = array<i64: 8, 8>}, {pipeline_mode = #tpu.pipeline_mode<synchronous>, transform_indices = @transform_3, window_bounds = array<i64: 64, 256>}, {pipeline_mode = #tpu.pipeline_mode<synchronous>, transform_indices = @transform_4, window_bounds = array<i64: 1, 256>}, {pipeline_mode = #tpu.pipeline_mode<synchronous>, transform_indices = @transform_5, window_bounds = array<i64: 64, 256>}, {pipeline_mode = #tpu.pipeline_mode<synchronous>, transform_indices = @transform_6, window_bounds = array<i64: 64, 32>}, {pipeline_mode = #tpu.pipeline_mode<synchronous>, transform_indices = @transform_7, window_bounds = array<i64: 1, 32>}, {pipeline_mode = #tpu.pipeline_mode<synchronous>, transform_indices = @transform_8, window_bounds = array<i64: 1, 32>}, {transform_indices = @transform_9, window_bounds = array<i64: 8, 64>}]} {
    %c0 = arith.constant 0 : index
    %c0_0 = arith.constant 0 : index
    %c0_1 = arith.constant 0 : index
    %0 = vector.load %arg1[%c0, %c0_0, %c0_1] : memref<8x8x64xf32, #tpu.memory_space<vmem>>, vector<8x8x64xf32>
    %1 = vector.shape_cast %0 : vector<8x8x64xf32> to vector<64x64xf32>
    %c0_2 = arith.constant 0 : index
    %c0_3 = arith.constant 0 : index
    %2 = vector.load %arg4[%c0_2, %c0_3] : memref<64x256xf32, #tpu.memory_space<vmem>>, vector<64x256xf32>
    %cst = arith.constant dense<0.000000e+00> : vector<64x256xf32>
    %3 = tpu.matmul %1, %2, %cst {dimension_numbers = #tpu.dot_dimension_numbers<[1], [0], [0], [1], [0, 0, 1, 1], [], []>} : vector<64x64xf32>, vector<64x256xf32>, vector<64x256xf32> -> vector<64x256xf32>
    %c0_4 = arith.constant 0 : index
    %c0_5 = arith.constant 0 : index
    %4 = vector.load %arg5[%c0_4, %c0_5] : memref<1x256xf32, #tpu.memory_space<vmem>>, vector<1x256xf32>
    %5 = vector.broadcast %4 : vector<1x256xf32> to vector<64x256xf32>
    %6 = arith.addf %3, %5 : vector<64x256xf32>
    %7 = vector.shape_cast %6 : vector<64x256xf32> to vector<8x8x256xf32>
    %c0_6 = arith.constant 0 : index
    %c0_7 = arith.constant 0 : index
    %c0_8 = arith.constant 0 : index
    %8 = vector.load %arg11[%c0_6, %c0_7, %c0_8] : memref<8x8x256xf32, #tpu.memory_space<vmem>>, vector<8x8x256xf32>
    tpu.vector_store %arg11[%c0_6, %c0_7, %c0_8], %7 {strides = array<i32>} : memref<8x8x256xf32, #tpu.memory_space<vmem>>, vector<8x8x256xf32>,
    %c0_9 = arith.constant 0 : index
    %c0_10 = arith.constant 0 : index
    %9 = vector.load %arg2[%c0_9, %c0_10] : memref<8x8xf32, #tpu.memory_space<vmem>>, vector<8x8xf32>
    %c0_11 = arith.constant 0 : index
    %c0_12 = arith.constant 0 : index
    %10 = vector.load %arg3[%c0_11, %c0_12] : memref<8x8xf32, #tpu.memory_space<vmem>>, vector<8x8xf32>
    %11 = vector.shape_cast %9 : vector<8x8xf32> to vector<8x8x1xf32>
    %12 = vector.shape_cast %11 : vector<8x8x1xf32> to vector<8x8x1xf32>
    %13 = vector.broadcast %12 : vector<8x8x1xf32> to vector<8x8x32xf32>
    %c0_13 = arith.constant 0 : index
    %c0_14 = arith.constant 0 : index
    %c0_15 = arith.constant 0 : index
    %14 = vector.load %arg12[%c0_13, %c0_14, %c0_15] : memref<8x8x64xf32, #tpu.memory_space<vmem>>, vector<8x8x32xf32>
    tpu.vector_store %arg12[%c0_13, %c0_14, %c0_15], %13 {strides = array<i32>} : memref<8x8x64xf32, #tpu.memory_space<vmem>>, vector<8x8x32xf32>,
    %15 = vector.shape_cast %10 : vector<8x8xf32> to vector<8x8x1xf32>
    %16 = vector.shape_cast %15 : vector<8x8x1xf32> to vector<8x8x1xf32>
    %17 = vector.broadcast %16 : vector<8x8x1xf32> to vector<8x8x32xf32>
    %c0_16 = arith.constant 0 : index
    %c0_17 = arith.constant 0 : index
    %c32 = arith.constant 32 : index
    %18 = vector.load %arg12[%c0_16, %c0_17, %c32] : memref<8x8x64xf32, #tpu.memory_space<vmem>>, vector<8x8x32xf32>
    tpu.vector_store %arg12[%c0_16, %c0_17, %c32], %17 {strides = array<i32>} : memref<8x8x64xf32, #tpu.memory_space<vmem>>, vector<8x8x32xf32>,
    %c0_18 = arith.constant 0 : index
    %c0_19 = arith.constant 0 : index
    %19 = vector.load %arg6[%c0_18, %c0_19] : memref<64x256xf32, #tpu.memory_space<vmem>>, vector<64x256xf32>
    %cst_20 = arith.constant 0.000000e+00 : f32
    %20 = vector.broadcast %cst_20 : f32 to vector<8x64xf32>
    %cst_21 = arith.constant 0.000000e+00 : f32
    %21 = vector.broadcast %cst_21 : f32 to vector<8x64xf32>
    %c0_22 = arith.constant 0 : index
    %c0_23 = arith.constant 0 : index
    %c0_24 = arith.constant 0 : index
    %22 = vector.load %arg11[%c0_22, %c0_23, %c0_24] : memref<8x8x256xf32, #tpu.memory_space<vmem>>, vector<8x1x256xf32>
    %23 = vector.shape_cast %22 : vector<8x1x256xf32> to vector<8x256xf32>
    %cst_25 = arith.constant dense<0.000000e+00> : vector<8x256xf32>
    %24 = tpu.matmul %20, %19, %cst_25 {dimension_numbers = #tpu.dot_dimension_numbers<[1], [0], [0], [1], [0, 0, 1, 1], [], []>} : vector<8x64xf32>, vector<64x256xf32>, vector<8x256xf32> -> vector<8x256xf32>
    %25 = arith.addf %23, %24 : vector<8x256xf32>
    %26 = vector.extract_strided_slice %25 {offsets = [0, 0], sizes = [8, 192], strides = [1, 1]} : vector<8x256xf32> to vector<8x192xf32>
    %27 = arith.negf %26 : vector<8x192xf32>
    %28 = math.exp %27 : vector<8x192xf32>
    %cst_26 = arith.constant 1.000000e+00 : f32
    %29 = vector.broadcast %cst_26 : f32 to vector<8x192xf32>
    %30 = arith.addf %29, %28 : vector<8x192xf32>
    %31 = arith.divf %29, %30 : vector<8x192xf32>
    %32 = vector.extract_strided_slice %31 {offsets = [0, 0], sizes = [8, 64], strides = [1, 1]} : vector<8x192xf32> to vector<8x64xf32>
    %33 = vector.extract_strided_slice %31 {offsets = [0, 64], sizes = [8, 64], strides = [1, 1]} : vector<8x192xf32> to vector<8x64xf32>
    %34 = vector.extract_strided_slice %31 {offsets = [0, 128], sizes = [8, 64], strides = [1, 1]} : vector<8x192xf32> to vector<8x64xf32>
    %35 = vector.extract_strided_slice %25 {offsets = [0, 192], sizes = [8, 64], strides = [1, 1]} : vector<8x256xf32> to vector<8x64xf32>
    %36 = math.tanh %35 : vector<8x64xf32>
    %37 = arith.mulf %33, %21 : vector<8x64xf32>
    %38 = arith.mulf %32, %36 : vector<8x64xf32>
    %39 = arith.addf %37, %38 : vector<8x64xf32>
    %40 = math.tanh %39 : vector<8x64xf32>
    %41 = arith.mulf %34, %40 : vector<8x64xf32>
    %c0_27 = arith.constant 0 : index
    %c0_28 = arith.constant 0 : index
    %c0_29 = arith.constant 0 : index
    %42 = vector.load %arg12[%c0_27, %c0_28, %c0_29] : memref<8x8x64xf32, #tpu.memory_space<vmem>>, vector<8x1x64xf32>
    %43 = vector.shape_cast %42 : vector<8x1x64xf32> to vector<8x64xf32>
    %cst_30 = arith.constant 0.000000e+00 : f32
    %44 = vector.broadcast %cst_30 : f32 to vector<8x64xf32>
    %45 = arith.cmpf ogt, %43, %44 : vector<8x64xf32>
    %46 = arith.select %45, %41, %20 : vector<8x64xi1>, vector<8x64xf32>
    %cst_31 = arith.constant 0.000000e+00 : f32
    %47 = vector.broadcast %cst_31 : f32 to vector<8x64xf32>
    %48 = arith.cmpf ogt, %43, %47 : vector<8x64xf32>
    %49 = arith.select %48, %39, %21 : vector<8x64xi1>, vector<8x64xf32>
    %50 = vector.extract_strided_slice %46 {offsets = [0, 0], sizes = [8, 32], strides = [1, 1]} : vector<8x64xf32> to vector<8x32xf32>
    %c0_32 = arith.constant 0 : index
    %c0_33 = arith.constant 0 : index
    %c0_34 = arith.constant 0 : index
    %51 = vector.load %arg13[%c0_32, %c0_33, %c0_34] : memref<8x8x64xf32, #tpu.memory_space<vmem>>, vector<8x1x32xf32>
    %52 = vector.shape_cast %51 : vector<8x1x32xf32> to vector<8x32xf32>
    %53 = vector.shape_cast %50 : vector<8x32xf32> to vector<8x1x32xf32>
    tpu.vector_store %arg13[%c0_32, %c0_33, %c0_34], %53 {strides = array<i32>} : memref<8x8x64xf32, #tpu.memory_space<vmem>>, vector<8x1x32xf32>,
    %54 = vector.extract_strided_slice %46 {offsets = [0, 32], sizes = [8, 32], strides = [1, 1]} : vector<8x64xf32> to vector<8x32xf32>
    %c0_35 = arith.constant 0 : index
    %c7 = arith.constant 7 : index
    %c32_36 = arith.constant 32 : index
    %55 = vector.load %arg13[%c0_35, %c7, %c32_36] : memref<8x8x64xf32, #tpu.memory_space<vmem>>, vector<8x1x32xf32>
    %56 = vector.shape_cast %55 : vector<8x1x32xf32> to vector<8x32xf32>
    %57 = vector.shape_cast %54 : vector<8x32xf32> to vector<8x1x32xf32>
    tpu.vector_store %arg13[%c0_35, %c7, %c32_36], %57 {strides = array<i32>} : memref<8x8x64xf32, #tpu.memory_space<vmem>>, vector<8x1x32xf32>,
    %c0_37 = arith.constant 0 : index
    %c1 = arith.constant 1 : index
    %c0_38 = arith.constant 0 : index
    %58 = vector.load %arg11[%c0_37, %c1, %c0_38] : memref<8x8x256xf32, #tpu.memory_space<vmem>>, vector<8x1x256xf32>
    %59 = vector.shape_cast %58 : vector<8x1x256xf32> to vector<8x256xf32>
    %cst_39 = arith.constant dense<0.000000e+00> : vector<8x256xf32>
    %60 = tpu.matmul %46, %19, %cst_39 {dimension_numbers = #tpu.dot_dimension_numbers<[1], [0], [0], [1], [0, 0, 1, 1], [], []>} : vector<8x64xf32>, vector<64x256xf32>, vector<8x256xf32> -> vector<8x256xf32>
    %61 = arith.addf %59, %60 : vector<8x256xf32>
    %62 = vector.extract_strided_slice %61 {offsets = [0, 0], sizes = [8, 192], strides = [1, 1]} : vector<8x256xf32> to vector<8x192xf32>
    %63 = arith.negf %62 : vector<8x192xf32>
    %64 = math.exp %63 : vector<8x192xf32>
    %cst_40 = arith.constant 1.000000e+00 : f32
    %65 = vector.broadcast %cst_40 : f32 to vector<8x192xf32>
    %66 = arith.addf %65, %64 : vector<8x192xf32>
    %67 = arith.divf %65, %66 : vector<8x192xf32>
    %68 = vector.extract_strided_slice %67 {offsets = [0, 0], sizes = [8, 64], strides = [1, 1]} : vector<8x192xf32> to vector<8x64xf32>
    %69 = vector.extract_strided_slice %67 {offsets = [0, 64], sizes = [8, 64], strides = [1, 1]} : vector<8x192xf32> to vector<8x64xf32>
    %70 = vector.extract_strided_slice %67 {offsets = [0, 128], sizes = [8, 64], strides = [1, 1]} : vector<8x192xf32> to vector<8x64xf32>
    %71 = vector.extract_strided_slice %61 {offsets = [0, 192], sizes = [8, 64], strides = [1, 1]} : vector<8x256xf32> to vector<8x64xf32>
    %72 = math.tanh %71 : vector<8x64xf32>
    %73 = arith.mulf %69, %49 : vector<8x64xf32>
    %74 = arith.mulf %68, %72 : vector<8x64xf32>
    %75 = arith.addf %73, %74 : vector<8x64xf32>
    %76 = math.tanh %75 : vector<8x64xf32>
    %77 = arith.mulf %70, %76 : vector<8x64xf32>
    %c0_41 = arith.constant 0 : index
    %c1_42 = arith.constant 1 : index
    %c0_43 = arith.constant 0 : index
    %78 = vector.load %arg12[%c0_41, %c1_42, %c0_43] : memref<8x8x64xf32, #tpu.memory_space<vmem>>, vector<8x1x64xf32>
    %79 = vector.shape_cast %78 : vector<8x1x64xf32> to vector<8x64xf32>
    %cst_44 = arith.constant 0.000000e+00 : f32
    %80 = vector.broadcast %cst_44 : f32 to vector<8x64xf32>
    %81 = arith.cmpf ogt, %79, %80 : vector<8x64xf32>
    %82 = arith.select %81, %77, %46 : vector<8x64xi1>, vector<8x64xf32>
    %cst_45 = arith.constant 0.000000e+00 : f32
    %83 = vector.broadcast %cst_45 : f32 to vector<8x64xf32>
    %84 = arith.cmpf ogt, %79, %83 : vector<8x64xf32>
    %85 = arith.select %84, %75, %49 : vector<8x64xi1>, vector<8x64xf32>
    %86 = vector.extract_strided_slice %82 {offsets = [0, 0], sizes = [8, 32], strides = [1, 1]} : vector<8x64xf32> to vector<8x32xf32>
    %c0_46 = arith.constant 0 : index
    %c1_47 = arith.constant 1 : index
    %c0_48 = arith.constant 0 : index
    %87 = vector.load %arg13[%c0_46, %c1_47, %c0_48] : memref<8x8x64xf32, #tpu.memory_space<vmem>>, vector<8x1x32xf32>
    %88 = vector.shape_cast %87 : vector<8x1x32xf32> to vector<8x32xf32>
    %89 = vector.shape_cast %86 : vector<8x32xf32> to vector<8x1x32xf32>
    tpu.vector_store %arg13[%c0_46, %c1_47, %c0_48], %89 {strides = array<i32>} : memref<8x8x64xf32, #tpu.memory_space<vmem>>, vector<8x1x32xf32>,
    %90 = vector.extract_strided_slice %82 {offsets = [0, 32], sizes = [8, 32], strides = [1, 1]} : vector<8x64xf32> to vector<8x32xf32>
    %c0_49 = arith.constant 0 : index
    %c6 = arith.constant 6 : index
    %c32_50 = arith.constant 32 : index
    %91 = vector.load %arg13[%c0_49, %c6, %c32_50] : memref<8x8x64xf32, #tpu.memory_space<vmem>>, vector<8x1x32xf32>
    %92 = vector.shape_cast %91 : vector<8x1x32xf32> to vector<8x32xf32>
    %93 = vector.shape_cast %90 : vector<8x32xf32> to vector<8x1x32xf32>
    tpu.vector_store %arg13[%c0_49, %c6, %c32_50], %93 {strides = array<i32>} : memref<8x8x64xf32, #tpu.memory_space<vmem>>, vector<8x1x32xf32>,
    %c0_51 = arith.constant 0 : index
    %c2 = arith.constant 2 : index
    %c0_52 = arith.constant 0 : index
    %94 = vector.load %arg11[%c0_51, %c2, %c0_52] : memref<8x8x256xf32, #tpu.memory_space<vmem>>, vector<8x1x256xf32>
    %95 = vector.shape_cast %94 : vector<8x1x256xf32> to vector<8x256xf32>
    %cst_53 = arith.constant dense<0.000000e+00> : vector<8x256xf32>
    %96 = tpu.matmul %82, %19, %cst_53 {dimension_numbers = #tpu.dot_dimension_numbers<[1], [0], [0], [1], [0, 0, 1, 1], [], []>} : vector<8x64xf32>, vector<64x256xf32>, vector<8x256xf32> -> vector<8x256xf32>
    %97 = arith.addf %95, %96 : vector<8x256xf32>
    %98 = vector.extract_strided_slice %97 {offsets = [0, 0], sizes = [8, 192], strides = [1, 1]} : vector<8x256xf32> to vector<8x192xf32>
    %99 = arith.negf %98 : vector<8x192xf32>
    %100 = math.exp %99 : vector<8x192xf32>
    %cst_54 = arith.constant 1.000000e+00 : f32
    %101 = vector.broadcast %cst_54 : f32 to vector<8x192xf32>
    %102 = arith.addf %101, %100 : vector<8x192xf32>
    %103 = arith.divf %101, %102 : vector<8x192xf32>
    %104 = vector.extract_strided_slice %103 {offsets = [0, 0], sizes = [8, 64], strides = [1, 1]} : vector<8x192xf32> to vector<8x64xf32>
    %105 = vector.extract_strided_slice %103 {offsets = [0, 64], sizes = [8, 64], strides = [1, 1]} : vector<8x192xf32> to vector<8x64xf32>
    %106 = vector.extract_strided_slice %103 {offsets = [0, 128], sizes = [8, 64], strides = [1, 1]} : vector<8x192xf32> to vector<8x64xf32>
    %107 = vector.extract_strided_slice %97 {offsets = [0, 192], sizes = [8, 64], strides = [1, 1]} : vector<8x256xf32> to vector<8x64xf32>
    %108 = math.tanh %107 : vector<8x64xf32>
    %109 = arith.mulf %105, %85 : vector<8x64xf32>
    %110 = arith.mulf %104, %108 : vector<8x64xf32>
    %111 = arith.addf %109, %110 : vector<8x64xf32>
    %112 = math.tanh %111 : vector<8x64xf32>
    %113 = arith.mulf %106, %112 : vector<8x64xf32>
    %c0_55 = arith.constant 0 : index
    %c2_56 = arith.constant 2 : index
    %c0_57 = arith.constant 0 : index
    %114 = vector.load %arg12[%c0_55, %c2_56, %c0_57] : memref<8x8x64xf32, #tpu.memory_space<vmem>>, vector<8x1x64xf32>
    %115 = vector.shape_cast %114 : vector<8x1x64xf32> to vector<8x64xf32>
    %cst_58 = arith.constant 0.000000e+00 : f32
    %116 = vector.broadcast %cst_58 : f32 to vector<8x64xf32>
    %117 = arith.cmpf ogt, %115, %116 : vector<8x64xf32>
    %118 = arith.select %117, %113, %82 : vector<8x64xi1>, vector<8x64xf32>
    %cst_59 = arith.constant 0.000000e+00 : f32
    %119 = vector.broadcast %cst_59 : f32 to vector<8x64xf32>
    %120 = arith.cmpf ogt, %115, %119 : vector<8x64xf32>
    %121 = arith.select %120, %111, %85 : vector<8x64xi1>, vector<8x64xf32>
    %122 = vector.extract_strided_slice %118 {offsets = [0, 0], sizes = [8, 32], strides = [1, 1]} : vector<8x64xf32> to vector<8x32xf32>
    %c0_60 = arith.constant 0 : index
    %c2_61 = arith.constant 2 : index
    %c0_62 = arith.constant 0 : index
    %123 = vector.load %arg13[%c0_60, %c2_61, %c0_62] : memref<8x8x64xf32, #tpu.memory_space<vmem>>, vector<8x1x32xf32>
    %124 = vector.shape_cast %123 : vector<8x1x32xf32> to vector<8x32xf32>
    %125 = vector.shape_cast %122 : vector<8x32xf32> to vector<8x1x32xf32>
    tpu.vector_store %arg13[%c0_60, %c2_61, %c0_62], %125 {strides = array<i32>} : memref<8x8x64xf32, #tpu.memory_space<vmem>>, vector<8x1x32xf32>,
    %126 = vector.extract_strided_slice %118 {offsets = [0, 32], sizes = [8, 32], strides = [1, 1]} : vector<8x64xf32> to vector<8x32xf32>
    %c0_63 = arith.constant 0 : index
    %c5 = arith.constant 5 : index
    %c32_64 = arith.constant 32 : index
    %127 = vector.load %arg13[%c0_63, %c5, %c32_64] : memref<8x8x64xf32, #tpu.memory_space<vmem>>, vector<8x1x32xf32>
    %128 = vector.shape_cast %127 : vector<8x1x32xf32> to vector<8x32xf32>
    %129 = vector.shape_cast %126 : vector<8x32xf32> to vector<8x1x32xf32>
    tpu.vector_store %arg13[%c0_63, %c5, %c32_64], %129 {strides = array<i32>} : memref<8x8x64xf32, #tpu.memory_space<vmem>>, vector<8x1x32xf32>,
    %c0_65 = arith.constant 0 : index
    %c3 = arith.constant 3 : index
    %c0_66 = arith.constant 0 : index
    %130 = vector.load %arg11[%c0_65, %c3, %c0_66] : memref<8x8x256xf32, #tpu.memory_space<vmem>>, vector<8x1x256xf32>
    %131 = vector.shape_cast %130 : vector<8x1x256xf32> to vector<8x256xf32>
    %cst_67 = arith.constant dense<0.000000e+00> : vector<8x256xf32>
    %132 = tpu.matmul %118, %19, %cst_67 {dimension_numbers = #tpu.dot_dimension_numbers<[1], [0], [0], [1], [0, 0, 1, 1], [], []>} : vector<8x64xf32>, vector<64x256xf32>, vector<8x256xf32> -> vector<8x256xf32>
    %133 = arith.addf %131, %132 : vector<8x256xf32>
    %134 = vector.extract_strided_slice %133 {offsets = [0, 0], sizes = [8, 192], strides = [1, 1]} : vector<8x256xf32> to vector<8x192xf32>
    %135 = arith.negf %134 : vector<8x192xf32>
    %136 = math.exp %135 : vector<8x192xf32>
    %cst_68 = arith.constant 1.000000e+00 : f32
    %137 = vector.broadcast %cst_68 : f32 to vector<8x192xf32>
    %138 = arith.addf %137, %136 : vector<8x192xf32>
    %139 = arith.divf %137, %138 : vector<8x192xf32>
    %140 = vector.extract_strided_slice %139 {offsets = [0, 0], sizes = [8, 64], strides = [1, 1]} : vector<8x192xf32> to vector<8x64xf32>
    %141 = vector.extract_strided_slice %139 {offsets = [0, 64], sizes = [8, 64], strides = [1, 1]} : vector<8x192xf32> to vector<8x64xf32>
    %142 = vector.extract_strided_slice %139 {offsets = [0, 128], sizes = [8, 64], strides = [1, 1]} : vector<8x192xf32> to vector<8x64xf32>
    %143 = vector.extract_strided_slice %133 {offsets = [0, 192], sizes = [8, 64], strides = [1, 1]} : vector<8x256xf32> to vector<8x64xf32>
    %144 = math.tanh %143 : vector<8x64xf32>
    %145 = arith.mulf %141, %121 : vector<8x64xf32>
    %146 = arith.mulf %140, %144 : vector<8x64xf32>
    %147 = arith.addf %145, %146 : vector<8x64xf32>
    %148 = math.tanh %147 : vector<8x64xf32>
    %149 = arith.mulf %142, %148 : vector<8x64xf32>
    %c0_69 = arith.constant 0 : index
    %c3_70 = arith.constant 3 : index
    %c0_71 = arith.constant 0 : index
    %150 = vector.load %arg12[%c0_69, %c3_70, %c0_71] : memref<8x8x64xf32, #tpu.memory_space<vmem>>, vector<8x1x64xf32>
    %151 = vector.shape_cast %150 : vector<8x1x64xf32> to vector<8x64xf32>
    %cst_72 = arith.constant 0.000000e+00 : f32
    %152 = vector.broadcast %cst_72 : f32 to vector<8x64xf32>
    %153 = arith.cmpf ogt, %151, %152 : vector<8x64xf32>
    %154 = arith.select %153, %149, %118 : vector<8x64xi1>, vector<8x64xf32>
    %cst_73 = arith.constant 0.000000e+00 : f32
    %155 = vector.broadcast %cst_73 : f32 to vector<8x64xf32>
    %156 = arith.cmpf ogt, %151, %155 : vector<8x64xf32>
    %157 = arith.select %156, %147, %121 : vector<8x64xi1>, vector<8x64xf32>
    %158 = vector.extract_strided_slice %154 {offsets = [0, 0], sizes = [8, 32], strides = [1, 1]} : vector<8x64xf32> to vector<8x32xf32>
    %c0_74 = arith.constant 0 : index
    %c3_75 = arith.constant 3 : index
    %c0_76 = arith.constant 0 : index
    %159 = vector.load %arg13[%c0_74, %c3_75, %c0_76] : memref<8x8x64xf32, #tpu.memory_space<vmem>>, vector<8x1x32xf32>
    %160 = vector.shape_cast %159 : vector<8x1x32xf32> to vector<8x32xf32>
    %161 = vector.shape_cast %158 : vector<8x32xf32> to vector<8x1x32xf32>
    tpu.vector_store %arg13[%c0_74, %c3_75, %c0_76], %161 {strides = array<i32>} : memref<8x8x64xf32, #tpu.memory_space<vmem>>, vector<8x1x32xf32>,
    %162 = vector.extract_strided_slice %154 {offsets = [0, 32], sizes = [8, 32], strides = [1, 1]} : vector<8x64xf32> to vector<8x32xf32>
    %c0_77 = arith.constant 0 : index
    %c4 = arith.constant 4 : index
    %c32_78 = arith.constant 32 : index
    %163 = vector.load %arg13[%c0_77, %c4, %c32_78] : memref<8x8x64xf32, #tpu.memory_space<vmem>>, vector<8x1x32xf32>
    %164 = vector.shape_cast %163 : vector<8x1x32xf32> to vector<8x32xf32>
    %165 = vector.shape_cast %162 : vector<8x32xf32> to vector<8x1x32xf32>
    tpu.vector_store %arg13[%c0_77, %c4, %c32_78], %165 {strides = array<i32>} : memref<8x8x64xf32, #tpu.memory_space<vmem>>, vector<8x1x32xf32>,
    %c0_79 = arith.constant 0 : index
    %c4_80 = arith.constant 4 : index
    %c0_81 = arith.constant 0 : index
    %166 = vector.load %arg11[%c0_79, %c4_80, %c0_81] : memref<8x8x256xf32, #tpu.memory_space<vmem>>, vector<8x1x256xf32>
    %167 = vector.shape_cast %166 : vector<8x1x256xf32> to vector<8x256xf32>
    %cst_82 = arith.constant dense<0.000000e+00> : vector<8x256xf32>
    %168 = tpu.matmul %154, %19, %cst_82 {dimension_numbers = #tpu.dot_dimension_numbers<[1], [0], [0], [1], [0, 0, 1, 1], [], []>} : vector<8x64xf32>, vector<64x256xf32>, vector<8x256xf32> -> vector<8x256xf32>
    %169 = arith.addf %167, %168 : vector<8x256xf32>
    %170 = vector.extract_strided_slice %169 {offsets = [0, 0], sizes = [8, 192], strides = [1, 1]} : vector<8x256xf32> to vector<8x192xf32>
    %171 = arith.negf %170 : vector<8x192xf32>
    %172 = math.exp %171 : vector<8x192xf32>
    %cst_83 = arith.constant 1.000000e+00 : f32
    %173 = vector.broadcast %cst_83 : f32 to vector<8x192xf32>
    %174 = arith.addf %173, %172 : vector<8x192xf32>
    %175 = arith.divf %173, %174 : vector<8x192xf32>
    %176 = vector.extract_strided_slice %175 {offsets = [0, 0], sizes = [8, 64], strides = [1, 1]} : vector<8x192xf32> to vector<8x64xf32>
    %177 = vector.extract_strided_slice %175 {offsets = [0, 64], sizes = [8, 64], strides = [1, 1]} : vector<8x192xf32> to vector<8x64xf32>
    %178 = vector.extract_strided_slice %175 {offsets = [0, 128], sizes = [8, 64], strides = [1, 1]} : vector<8x192xf32> to vector<8x64xf32>
    %179 = vector.extract_strided_slice %169 {offsets = [0, 192], sizes = [8, 64], strides = [1, 1]} : vector<8x256xf32> to vector<8x64xf32>
    %180 = math.tanh %179 : vector<8x64xf32>
    %181 = arith.mulf %177, %157 : vector<8x64xf32>
    %182 = arith.mulf %176, %180 : vector<8x64xf32>
    %183 = arith.addf %181, %182 : vector<8x64xf32>
    %184 = math.tanh %183 : vector<8x64xf32>
    %185 = arith.mulf %178, %184 : vector<8x64xf32>
    %c0_84 = arith.constant 0 : index
    %c4_85 = arith.constant 4 : index
    %c0_86 = arith.constant 0 : index
    %186 = vector.load %arg12[%c0_84, %c4_85, %c0_86] : memref<8x8x64xf32, #tpu.memory_space<vmem>>, vector<8x1x64xf32>
    %187 = vector.shape_cast %186 : vector<8x1x64xf32> to vector<8x64xf32>
    %cst_87 = arith.constant 0.000000e+00 : f32
    %188 = vector.broadcast %cst_87 : f32 to vector<8x64xf32>
    %189 = arith.cmpf ogt, %187, %188 : vector<8x64xf32>
    %190 = arith.select %189, %185, %154 : vector<8x64xi1>, vector<8x64xf32>
    %cst_88 = arith.constant 0.000000e+00 : f32
    %191 = vector.broadcast %cst_88 : f32 to vector<8x64xf32>
    %192 = arith.cmpf ogt, %187, %191 : vector<8x64xf32>
    %193 = arith.select %192, %183, %157 : vector<8x64xi1>, vector<8x64xf32>
    %194 = vector.extract_strided_slice %190 {offsets = [0, 0], sizes = [8, 32], strides = [1, 1]} : vector<8x64xf32> to vector<8x32xf32>
    %c0_89 = arith.constant 0 : index
    %c4_90 = arith.constant 4 : index
    %c0_91 = arith.constant 0 : index
    %195 = vector.load %arg13[%c0_89, %c4_90, %c0_91] : memref<8x8x64xf32, #tpu.memory_space<vmem>>, vector<8x1x32xf32>
    %196 = vector.shape_cast %195 : vector<8x1x32xf32> to vector<8x32xf32>
    %197 = vector.shape_cast %194 : vector<8x32xf32> to vector<8x1x32xf32>
    tpu.vector_store %arg13[%c0_89, %c4_90, %c0_91], %197 {strides = array<i32>} : memref<8x8x64xf32, #tpu.memory_space<vmem>>, vector<8x1x32xf32>,
    %198 = vector.extract_strided_slice %190 {offsets = [0, 32], sizes = [8, 32], strides = [1, 1]} : vector<8x64xf32> to vector<8x32xf32>
    %c0_92 = arith.constant 0 : index
    %c3_93 = arith.constant 3 : index
    %c32_94 = arith.constant 32 : index
    %199 = vector.load %arg13[%c0_92, %c3_93, %c32_94] : memref<8x8x64xf32, #tpu.memory_space<vmem>>, vector<8x1x32xf32>
    %200 = vector.shape_cast %199 : vector<8x1x32xf32> to vector<8x32xf32>
    %201 = vector.shape_cast %198 : vector<8x32xf32> to vector<8x1x32xf32>
    tpu.vector_store %arg13[%c0_92, %c3_93, %c32_94], %201 {strides = array<i32>} : memref<8x8x64xf32, #tpu.memory_space<vmem>>, vector<8x1x32xf32>,
    %c0_95 = arith.constant 0 : index
    %c5_96 = arith.constant 5 : index
    %c0_97 = arith.constant 0 : index
    %202 = vector.load %arg11[%c0_95, %c5_96, %c0_97] : memref<8x8x256xf32, #tpu.memory_space<vmem>>, vector<8x1x256xf32>
    %203 = vector.shape_cast %202 : vector<8x1x256xf32> to vector<8x256xf32>
    %cst_98 = arith.constant dense<0.000000e+00> : vector<8x256xf32>
    %204 = tpu.matmul %190, %19, %cst_98 {dimension_numbers = #tpu.dot_dimension_numbers<[1], [0], [0], [1], [0, 0, 1, 1], [], []>} : vector<8x64xf32>, vector<64x256xf32>, vector<8x256xf32> -> vector<8x256xf32>
    %205 = arith.addf %203, %204 : vector<8x256xf32>
    %206 = vector.extract_strided_slice %205 {offsets = [0, 0], sizes = [8, 192], strides = [1, 1]} : vector<8x256xf32> to vector<8x192xf32>
    %207 = arith.negf %206 : vector<8x192xf32>
    %208 = math.exp %207 : vector<8x192xf32>
    %cst_99 = arith.constant 1.000000e+00 : f32
    %209 = vector.broadcast %cst_99 : f32 to vector<8x192xf32>
    %210 = arith.addf %209, %208 : vector<8x192xf32>
    %211 = arith.divf %209, %210 : vector<8x192xf32>
    %212 = vector.extract_strided_slice %211 {offsets = [0, 0], sizes = [8, 64], strides = [1, 1]} : vector<8x192xf32> to vector<8x64xf32>
    %213 = vector.extract_strided_slice %211 {offsets = [0, 64], sizes = [8, 64], strides = [1, 1]} : vector<8x192xf32> to vector<8x64xf32>
    %214 = vector.extract_strided_slice %211 {offsets = [0, 128], sizes = [8, 64], strides = [1, 1]} : vector<8x192xf32> to vector<8x64xf32>
    %215 = vector.extract_strided_slice %205 {offsets = [0, 192], sizes = [8, 64], strides = [1, 1]} : vector<8x256xf32> to vector<8x64xf32>
    %216 = math.tanh %215 : vector<8x64xf32>
    %217 = arith.mulf %213, %193 : vector<8x64xf32>
    %218 = arith.mulf %212, %216 : vector<8x64xf32>
    %219 = arith.addf %217, %218 : vector<8x64xf32>
    %220 = math.tanh %219 : vector<8x64xf32>
    %221 = arith.mulf %214, %220 : vector<8x64xf32>
    %c0_100 = arith.constant 0 : index
    %c5_101 = arith.constant 5 : index
    %c0_102 = arith.constant 0 : index
    %222 = vector.load %arg12[%c0_100, %c5_101, %c0_102] : memref<8x8x64xf32, #tpu.memory_space<vmem>>, vector<8x1x64xf32>
    %223 = vector.shape_cast %222 : vector<8x1x64xf32> to vector<8x64xf32>
    %cst_103 = arith.constant 0.000000e+00 : f32
    %224 = vector.broadcast %cst_103 : f32 to vector<8x64xf32>
    %225 = arith.cmpf ogt, %223, %224 : vector<8x64xf32>
    %226 = arith.select %225, %221, %190 : vector<8x64xi1>, vector<8x64xf32>
    %cst_104 = arith.constant 0.000000e+00 : f32
    %227 = vector.broadcast %cst_104 : f32 to vector<8x64xf32>
    %228 = arith.cmpf ogt, %223, %227 : vector<8x64xf32>
    %229 = arith.select %228, %219, %193 : vector<8x64xi1>, vector<8x64xf32>
    %230 = vector.extract_strided_slice %226 {offsets = [0, 0], sizes = [8, 32], strides = [1, 1]} : vector<8x64xf32> to vector<8x32xf32>
    %c0_105 = arith.constant 0 : index
    %c5_106 = arith.constant 5 : index
    %c0_107 = arith.constant 0 : index
    %231 = vector.load %arg13[%c0_105, %c5_106, %c0_107] : memref<8x8x64xf32, #tpu.memory_space<vmem>>, vector<8x1x32xf32>
    %232 = vector.shape_cast %231 : vector<8x1x32xf32> to vector<8x32xf32>
    %233 = vector.shape_cast %230 : vector<8x32xf32> to vector<8x1x32xf32>
    tpu.vector_store %arg13[%c0_105, %c5_106, %c0_107], %233 {strides = array<i32>} : memref<8x8x64xf32, #tpu.memory_space<vmem>>, vector<8x1x32xf32>,
    %234 = vector.extract_strided_slice %226 {offsets = [0, 32], sizes = [8, 32], strides = [1, 1]} : vector<8x64xf32> to vector<8x32xf32>
    %c0_108 = arith.constant 0 : index
    %c2_109 = arith.constant 2 : index
    %c32_110 = arith.constant 32 : index
    %235 = vector.load %arg13[%c0_108, %c2_109, %c32_110] : memref<8x8x64xf32, #tpu.memory_space<vmem>>, vector<8x1x32xf32>
    %236 = vector.shape_cast %235 : vector<8x1x32xf32> to vector<8x32xf32>
    %237 = vector.shape_cast %234 : vector<8x32xf32> to vector<8x1x32xf32>
    tpu.vector_store %arg13[%c0_108, %c2_109, %c32_110], %237 {strides = array<i32>} : memref<8x8x64xf32, #tpu.memory_space<vmem>>, vector<8x1x32xf32>,
    %c0_111 = arith.constant 0 : index
    %c6_112 = arith.constant 6 : index
    %c0_113 = arith.constant 0 : index
    %238 = vector.load %arg11[%c0_111, %c6_112, %c0_113] : memref<8x8x256xf32, #tpu.memory_space<vmem>>, vector<8x1x256xf32>
    %239 = vector.shape_cast %238 : vector<8x1x256xf32> to vector<8x256xf32>
    %cst_114 = arith.constant dense<0.000000e+00> : vector<8x256xf32>
    %240 = tpu.matmul %226, %19, %cst_114 {dimension_numbers = #tpu.dot_dimension_numbers<[1], [0], [0], [1], [0, 0, 1, 1], [], []>} : vector<8x64xf32>, vector<64x256xf32>, vector<8x256xf32> -> vector<8x256xf32>
    %241 = arith.addf %239, %240 : vector<8x256xf32>
    %242 = vector.extract_strided_slice %241 {offsets = [0, 0], sizes = [8, 192], strides = [1, 1]} : vector<8x256xf32> to vector<8x192xf32>
    %243 = arith.negf %242 : vector<8x192xf32>
    %244 = math.exp %243 : vector<8x192xf32>
    %cst_115 = arith.constant 1.000000e+00 : f32
    %245 = vector.broadcast %cst_115 : f32 to vector<8x192xf32>
    %246 = arith.addf %245, %244 : vector<8x192xf32>
    %247 = arith.divf %245, %246 : vector<8x192xf32>
    %248 = vector.extract_strided_slice %247 {offsets = [0, 0], sizes = [8, 64], strides = [1, 1]} : vector<8x192xf32> to vector<8x64xf32>
    %249 = vector.extract_strided_slice %247 {offsets = [0, 64], sizes = [8, 64], strides = [1, 1]} : vector<8x192xf32> to vector<8x64xf32>
    %250 = vector.extract_strided_slice %247 {offsets = [0, 128], sizes = [8, 64], strides = [1, 1]} : vector<8x192xf32> to vector<8x64xf32>
    %251 = vector.extract_strided_slice %241 {offsets = [0, 192], sizes = [8, 64], strides = [1, 1]} : vector<8x256xf32> to vector<8x64xf32>
    %252 = math.tanh %251 : vector<8x64xf32>
    %253 = arith.mulf %249, %229 : vector<8x64xf32>
    %254 = arith.mulf %248, %252 : vector<8x64xf32>
    %255 = arith.addf %253, %254 : vector<8x64xf32>
    %256 = math.tanh %255 : vector<8x64xf32>
    %257 = arith.mulf %250, %256 : vector<8x64xf32>
    %c0_116 = arith.constant 0 : index
    %c6_117 = arith.constant 6 : index
    %c0_118 = arith.constant 0 : index
    %258 = vector.load %arg12[%c0_116, %c6_117, %c0_118] : memref<8x8x64xf32, #tpu.memory_space<vmem>>, vector<8x1x64xf32>
    %259 = vector.shape_cast %258 : vector<8x1x64xf32> to vector<8x64xf32>
    %cst_119 = arith.constant 0.000000e+00 : f32
    %260 = vector.broadcast %cst_119 : f32 to vector<8x64xf32>
    %261 = arith.cmpf ogt, %259, %260 : vector<8x64xf32>
    %262 = arith.select %261, %257, %226 : vector<8x64xi1>, vector<8x64xf32>
    %cst_120 = arith.constant 0.000000e+00 : f32
    %263 = vector.broadcast %cst_120 : f32 to vector<8x64xf32>
    %264 = arith.cmpf ogt, %259, %263 : vector<8x64xf32>
    %265 = arith.select %264, %255, %229 : vector<8x64xi1>, vector<8x64xf32>
    %266 = vector.extract_strided_slice %262 {offsets = [0, 0], sizes = [8, 32], strides = [1, 1]} : vector<8x64xf32> to vector<8x32xf32>
    %c0_121 = arith.constant 0 : index
    %c6_122 = arith.constant 6 : index
    %c0_123 = arith.constant 0 : index
    %267 = vector.load %arg13[%c0_121, %c6_122, %c0_123] : memref<8x8x64xf32, #tpu.memory_space<vmem>>, vector<8x1x32xf32>
    %268 = vector.shape_cast %267 : vector<8x1x32xf32> to vector<8x32xf32>
    %269 = vector.shape_cast %266 : vector<8x32xf32> to vector<8x1x32xf32>
    tpu.vector_store %arg13[%c0_121, %c6_122, %c0_123], %269 {strides = array<i32>} : memref<8x8x64xf32, #tpu.memory_space<vmem>>, vector<8x1x32xf32>,
    %270 = vector.extract_strided_slice %262 {offsets = [0, 32], sizes = [8, 32], strides = [1, 1]} : vector<8x64xf32> to vector<8x32xf32>
    %c0_124 = arith.constant 0 : index
    %c1_125 = arith.constant 1 : index
    %c32_126 = arith.constant 32 : index
    %271 = vector.load %arg13[%c0_124, %c1_125, %c32_126] : memref<8x8x64xf32, #tpu.memory_space<vmem>>, vector<8x1x32xf32>
    %272 = vector.shape_cast %271 : vector<8x1x32xf32> to vector<8x32xf32>
    %273 = vector.shape_cast %270 : vector<8x32xf32> to vector<8x1x32xf32>
    tpu.vector_store %arg13[%c0_124, %c1_125, %c32_126], %273 {strides = array<i32>} : memref<8x8x64xf32, #tpu.memory_space<vmem>>, vector<8x1x32xf32>,
    %c0_127 = arith.constant 0 : index
    %c7_128 = arith.constant 7 : index
    %c0_129 = arith.constant 0 : index
    %274 = vector.load %arg11[%c0_127, %c7_128, %c0_129] : memref<8x8x256xf32, #tpu.memory_space<vmem>>, vector<8x1x256xf32>
    %275 = vector.shape_cast %274 : vector<8x1x256xf32> to vector<8x256xf32>
    %cst_130 = arith.constant dense<0.000000e+00> : vector<8x256xf32>
    %276 = tpu.matmul %262, %19, %cst_130 {dimension_numbers = #tpu.dot_dimension_numbers<[1], [0], [0], [1], [0, 0, 1, 1], [], []>} : vector<8x64xf32>, vector<64x256xf32>, vector<8x256xf32> -> vector<8x256xf32>
    %277 = arith.addf %275, %276 : vector<8x256xf32>
    %278 = vector.extract_strided_slice %277 {offsets = [0, 0], sizes = [8, 192], strides = [1, 1]} : vector<8x256xf32> to vector<8x192xf32>
    %279 = arith.negf %278 : vector<8x192xf32>
    %280 = math.exp %279 : vector<8x192xf32>
    %cst_131 = arith.constant 1.000000e+00 : f32
    %281 = vector.broadcast %cst_131 : f32 to vector<8x192xf32>
    %282 = arith.addf %281, %280 : vector<8x192xf32>
    %283 = arith.divf %281, %282 : vector<8x192xf32>
    %284 = vector.extract_strided_slice %283 {offsets = [0, 0], sizes = [8, 64], strides = [1, 1]} : vector<8x192xf32> to vector<8x64xf32>
    %285 = vector.extract_strided_slice %283 {offsets = [0, 64], sizes = [8, 64], strides = [1, 1]} : vector<8x192xf32> to vector<8x64xf32>
    %286 = vector.extract_strided_slice %283 {offsets = [0, 128], sizes = [8, 64], strides = [1, 1]} : vector<8x192xf32> to vector<8x64xf32>
    %287 = vector.extract_strided_slice %277 {offsets = [0, 192], sizes = [8, 64], strides = [1, 1]} : vector<8x256xf32> to vector<8x64xf32>
    %288 = math.tanh %287 : vector<8x64xf32>
    %289 = arith.mulf %285, %265 : vector<8x64xf32>
    %290 = arith.mulf %284, %288 : vector<8x64xf32>
    %291 = arith.addf %289, %290 : vector<8x64xf32>
    %292 = math.tanh %291 : vector<8x64xf32>
    %293 = arith.mulf %286, %292 : vector<8x64xf32>
    %c0_132 = arith.constant 0 : index
    %c7_133 = arith.constant 7 : index
    %c0_134 = arith.constant 0 : index
    %294 = vector.load %arg12[%c0_132, %c7_133, %c0_134] : memref<8x8x64xf32, #tpu.memory_space<vmem>>, vector<8x1x64xf32>
    %295 = vector.shape_cast %294 : vector<8x1x64xf32> to vector<8x64xf32>
    %cst_135 = arith.constant 0.000000e+00 : f32
    %296 = vector.broadcast %cst_135 : f32 to vector<8x64xf32>
    %297 = arith.cmpf ogt, %295, %296 : vector<8x64xf32>
    %298 = arith.select %297, %293, %262 : vector<8x64xi1>, vector<8x64xf32>
    %299 = vector.extract_strided_slice %298 {offsets = [0, 0], sizes = [8, 32], strides = [1, 1]} : vector<8x64xf32> to vector<8x32xf32>
    %c0_136 = arith.constant 0 : index
    %c7_137 = arith.constant 7 : index
    %c0_138 = arith.constant 0 : index
    %300 = vector.load %arg13[%c0_136, %c7_137, %c0_138] : memref<8x8x64xf32, #tpu.memory_space<vmem>>, vector<8x1x32xf32>
    %301 = vector.shape_cast %300 : vector<8x1x32xf32> to vector<8x32xf32>
    %302 = vector.shape_cast %299 : vector<8x32xf32> to vector<8x1x32xf32>
    tpu.vector_store %arg13[%c0_136, %c7_137, %c0_138], %302 {strides = array<i32>} : memref<8x8x64xf32, #tpu.memory_space<vmem>>, vector<8x1x32xf32>,
    %303 = vector.extract_strided_slice %298 {offsets = [0, 32], sizes = [8, 32], strides = [1, 1]} : vector<8x64xf32> to vector<8x32xf32>
    %c0_139 = arith.constant 0 : index
    %c0_140 = arith.constant 0 : index
    %c32_141 = arith.constant 32 : index
    %304 = vector.load %arg13[%c0_139, %c0_140, %c32_141] : memref<8x8x64xf32, #tpu.memory_space<vmem>>, vector<8x1x32xf32>
    %305 = vector.shape_cast %304 : vector<8x1x32xf32> to vector<8x32xf32>
    %306 = vector.shape_cast %303 : vector<8x32xf32> to vector<8x1x32xf32>
    tpu.vector_store %arg13[%c0_139, %c0_140, %c32_141], %306 {strides = array<i32>} : memref<8x8x64xf32, #tpu.memory_space<vmem>>, vector<8x1x32xf32>,
    %c0_142 = arith.constant 0 : index
    %c0_143 = arith.constant 0 : index
    %c0_144 = arith.constant 0 : index
    %307 = vector.load %arg13[%c0_142, %c0_143, %c0_144] : memref<8x8x64xf32, #tpu.memory_space<vmem>>, vector<8x8x64xf32>
    %308 = vector.shape_cast %307 : vector<8x8x64xf32> to vector<64x64xf32>
    %c0_145 = arith.constant 0 : index
    %c0_146 = arith.constant 0 : index
    %309 = vector.load %arg7[%c0_145, %c0_146] : memref<64x32xf32, #tpu.memory_space<vmem>>, vector<64x32xf32>
    %cst_147 = arith.constant dense<0.000000e+00> : vector<64x32xf32>
    %310 = tpu.matmul %308, %309, %cst_147 {dimension_numbers = #tpu.dot_dimension_numbers<[1], [0], [0], [1], [0, 0, 1, 1], [], []>} : vector<64x64xf32>, vector<64x32xf32>, vector<64x32xf32> -> vector<64x32xf32>
    %c0_148 = arith.constant 0 : index
    %c0_149 = arith.constant 0 : index
    %311 = vector.load %arg8[%c0_148, %c0_149] : memref<1x32xf32, #tpu.memory_space<vmem>>, vector<1x32xf32>
    %312 = vector.broadcast %311 : vector<1x32xf32> to vector<64x32xf32>
    %313 = arith.addf %310, %312 : vector<64x32xf32>
    %314 = math.tanh %313 : vector<64x32xf32>
    %315 = vector.shape_cast %314 : vector<64x32xf32> to vector<8x8x32xf32>
    %c0_150 = arith.constant 0 : index
    %c0_151 = arith.constant 0 : index
    %316 = vector.load %arg9[%c0_150, %c0_151] : memref<1x32xf32, #tpu.memory_space<vmem>>, vector<1x32xf32>
    %317 = vector.shape_cast %316 : vector<1x32xf32> to vector<1x1x32xf32>
    %318 = vector.broadcast %317 : vector<1x1x32xf32> to vector<8x8x32xf32>
    %319 = arith.mulf %315, %318 : vector<8x8x32xf32>
    %cst_152 = arith.constant dense<0.000000e+00> : vector<8x8xf32>
    %320 = vector.multi_reduction <add>, %319, %cst_152 [2] : vector<8x8x32xf32> to vector<8x8xf32>
    %cst_153 = arith.constant 0.000000e+00 : f32
    %321 = vector.broadcast %cst_153 : f32 to vector<8x8xf32>
    %322 = arith.cmpf ogt, %9, %321 : vector<8x8xf32>
    %cst_154 = arith.constant -1.000000e+09 : f32
    %323 = vector.broadcast %cst_154 : f32 to vector<8x8xf32>
    %324 = arith.select %322, %320, %323 : vector<8x8xi1>, vector<8x8xf32>
    %cst_155 = arith.constant dense<0xFF800000> : vector<8xf32>
    %325 = vector.multi_reduction <maximumf>, %324, %cst_155 [1] : vector<8x8xf32> to vector<8xf32>
    %326 = vector.shape_cast %325 : vector<8xf32> to vector<8x1xf32>
    %327 = vector.broadcast %326 : vector<8x1xf32> to vector<8x8xf32>
    %328 = arith.subf %324, %327 : vector<8x8xf32>
    %329 = math.exp %328 : vector<8x8xf32>
    %cst_156 = arith.constant dense<0.000000e+00> : vector<8xf32>
    %330 = vector.multi_reduction <add>, %329, %cst_156 [1] : vector<8x8xf32> to vector<8xf32>
    %331 = vector.shape_cast %330 : vector<8xf32> to vector<8x1xf32>
    %332 = vector.broadcast %331 : vector<8x1xf32> to vector<8x8xf32>
    %333 = arith.divf %329, %332 : vector<8x8xf32>
    %334 = vector.shape_cast %333 : vector<8x8xf32> to vector<8x8x1xf32>
    %335 = vector.broadcast %334 : vector<8x8x1xf32> to vector<8x8x64xf32>
    %336 = arith.mulf %307, %335 : vector<8x8x64xf32>
    %cst_157 = arith.constant dense<0.000000e+00> : vector<8x64xf32>
    %337 = vector.multi_reduction <add>, %336, %cst_157 [1] : vector<8x8x64xf32> to vector<8x64xf32>
    %c0_158 = arith.constant 0 : index
    %c0_159 = arith.constant 0 : index
    %338 = vector.load %arg10[%c0_158, %c0_159] : memref<8x64xf32, #tpu.memory_space<vmem>>, vector<8x64xf32>
    tpu.vector_store %arg10[%c0_158, %c0_159], %337 {strides = array<i32>} : memref<8x64xf32, #tpu.memory_space<vmem>>, vector<8x64xf32>,
    return
  }
  func.func @transform_0(%arg0: i32) -> (i32, i32, i32) {
    %c0_i32 = arith.constant 0 : i32
    %c0_i32_0 = arith.constant 0 : i32
    %c0_i32_1 = arith.constant 0 : i32
    return %arg0, %c0_i32, %c0_i32_0 : i32, i32, i32
  }
  func.func @transform_1(%arg0: i32) -> (i32, i32) {
    %c0_i32 = arith.constant 0 : i32
    %c0_i32_0 = arith.constant 0 : i32
    return %arg0, %c0_i32 : i32, i32
  }
  func.func @transform_2(%arg0: i32) -> (i32, i32) {
    %c0_i32 = arith.constant 0 : i32
    %c0_i32_0 = arith.constant 0 : i32
    return %arg0, %c0_i32 : i32, i32
  }
  func.func @transform_3(%arg0: i32) -> (i32, i32) {
    %c0_i32 = arith.constant 0 : i32
    %c0_i32_0 = arith.constant 0 : i32
    %c0_i32_1 = arith.constant 0 : i32
    return %c0_i32, %c0_i32_0 : i32, i32
  }
  func.func @transform_4(%arg0: i32) -> (i32, i32) {
    %c0_i32 = arith.constant 0 : i32
    %c0_i32_0 = arith.constant 0 : i32
    %c0_i32_1 = arith.constant 0 : i32
    return %c0_i32, %c0_i32_0 : i32, i32
  }
  func.func @transform_5(%arg0: i32) -> (i32, i32) {
    %c0_i32 = arith.constant 0 : i32
    %c0_i32_0 = arith.constant 0 : i32
    %c0_i32_1 = arith.constant 0 : i32
    return %c0_i32, %c0_i32_0 : i32, i32
  }
  func.func @transform_6(%arg0: i32) -> (i32, i32) {
    %c0_i32 = arith.constant 0 : i32
    %c0_i32_0 = arith.constant 0 : i32
    %c0_i32_1 = arith.constant 0 : i32
    return %c0_i32, %c0_i32_0 : i32, i32
  }
  func.func @transform_7(%arg0: i32) -> (i32, i32) {
    %c0_i32 = arith.constant 0 : i32
    %c0_i32_0 = arith.constant 0 : i32
    %c0_i32_1 = arith.constant 0 : i32
    return %c0_i32, %c0_i32_0 : i32, i32
  }
  func.func @transform_8(%arg0: i32) -> (i32, i32) {
    %c0_i32 = arith.constant 0 : i32
    %c0_i32_0 = arith.constant 0 : i32
    %c0_i32_1 = arith.constant 0 : i32
    return %c0_i32, %c0_i32_0 : i32, i32
  }
  func.func @transform_9(%arg0: i32) -> (i32, i32) {
    %c0_i32 = arith.constant 0 : i32
    %c0_i32_0 = arith.constant 0 : i32
    return %arg0, %c0_i32 : i32, i32
  }
}

</mosaic_0001>

<llo_original>
// kernel: tpu_custom_call.1
$region0: #{tpu_custom_call.1}
  #allocation0 [shape = 'u32[]', space=smem, size = 0x4, offset = 0x4, fixed_abs, tag = 'smem constant byte address 0x4 - core index']
  #allocation1 [shape = 'u32[144,128]{1,0:T(1,128)}', space=vmem, size = 0x12000, scoped, tag = 'internal scratch']
  #allocation2 [shape = 'f32[8,8,256]{2,1,0:T(8,128)}', space=vmem, size = 0x10000, scoped, tag = 'scratch operand']
  #allocation3 [shape = 'f32[8,8,64]{2,1,0:T(8,128)}', space=vmem, size = 0x8000, scoped, tag = 'scratch operand']
  #allocation4 [shape = 'f32[8,8,64]{2,1,0:T(8,128)}', space=vmem, size = 0x8000, scoped, tag = 'scratch operand']
  %s0 = inlined_call_operand.vmem [shape: f32[8,8,64], index: 0, kind: input, shape index: {}]
  %s1 = inlined_call_operand.vmem [shape: f32[8,8], index: 1, kind: input, shape index: {}]
  %s2 = inlined_call_operand.vmem [shape: f32[8,8], index: 2, kind: input, shape index: {}]
  %s3 = inlined_call_operand.hbm [shape: f32[64,256], index: 3, kind: input, shape index: {}]
  %s4 = inlined_call_operand.vmem [shape: f32[1,256], index: 4, kind: input, shape index: {}]
  %s5 = inlined_call_operand.hbm [shape: f32[64,256], index: 5, kind: input, shape index: {}]
  %s6 = inlined_call_operand.vmem [shape: f32[64,32], index: 6, kind: input, shape index: {}]
  %s7 = inlined_call_operand.vmem [shape: f32[1,32], index: 7, kind: input, shape index: {}]
  %s8 = inlined_call_operand.vmem [shape: f32[1,32], index: 8, kind: input, shape index: {}]
  %s9 = inlined_call_operand.hbm [shape: f32[8,64], index: 9, kind: output, shape index: {}]
  %s10 = sld [smem:[#allocation0]]
  $region54: #{tpu_custom_call.1} parent=0
    _
  %s12 = ssub.s32 1, %s10
  %s13 = scalar_select 0, %s12, %s10
  $region1: #{tpu_custom_call.1} parent=0
    #allocation5 [shape = 'u8[65536]{0}', space=vmem, size = 0x10000, scoped, tag = 'input window, operand 3, single buffered']
    #allocation6 [shape = 's32[1]{0}', space=sflag, size = 0x4, scoped, tag = 'scoped memory for tpu_custom_call.1']
    #allocation7 [shape = 's32[1]{0}', space=sflag, size = 0x4, scoped, tag = 'scoped memory for tpu_custom_call.1']
    #allocation8 [shape = 'u8[65536]{0}', space=vmem, size = 0x10000, scoped, tag = 'input window, operand 5, single buffered']
    #allocation9 [shape = 's32[1]{0}', space=sflag, size = 0x4, scoped, tag = 'scoped memory for tpu_custom_call.1']
    #allocation10 [shape = 'u8[4096]{0}', space=vmem, size = 0x1000, scoped, tag = 'output window, operand 0, single buffered']
    %14 = vsyncpa [#allocation6], 0
    %15 = vsyncpa [#allocation9], 0
    %16 = vsyncpa [#allocation7], 0
    // Predicated region
    $region2: #{tpu_custom_call.1} parent=1 // pred_check
      _
    $region3: #{tpu_custom_call.1} parent=1 // pred_check_branch
      %18 = sbr.rel (0) target = $region5
    $region4: #{tpu_custom_call.1} parent=1 // pred_region
      _
    $region5: #{tpu_custom_call.1} parent=1 // pred_fallthru
      _
    // Predicated region
    $region6: #{tpu_custom_call.1} parent=1 // pred_check
      _
    $region7: #{tpu_custom_call.1} parent=1 // pred_check_branch
      %20 = sbr.rel (0) target = $region9
    $region8: #{tpu_custom_call.1} parent=1 // pred_region
      _
    $region9: #{tpu_custom_call.1} parent=1 // pred_fallthru
      _
    // Predicated region
    $region10: #{tpu_custom_call.1} parent=1 // pred_check
      _
    $region11: #{tpu_custom_call.1} parent=1 // pred_check_branch
      %22 = sbr.rel (0) target = $region13
    $region12: #{tpu_custom_call.1} parent=1 // pred_region
      _
    $region13: #{tpu_custom_call.1} parent=1 // pred_fallthru
      _
    // Predicated region
    $region14: #{tpu_custom_call.1} parent=1 // pred_check
      _
    $region15: #{tpu_custom_call.1} parent=1 // pred_check_branch
      %24 = sbr.rel (0) target = $region17
    $region16: #{tpu_custom_call.1} parent=1 // pred_region
      %s26 = ssub.s32 2048, 2048
      %27 = vsyncadd [#allocation6], %s26
      %s28 = sshll.u32 [#allocation5], 4
      %s29 = int_to_ptr.vmem [resolvable:$true] %s28
      %34 = dma.hbm_to_vmem [thread:$0]  %s3, 2048, %s29, [#allocation6], 256, 256, 16
    $region17: #{tpu_custom_call.1} parent=1 // pred_fallthru
      _
    // Predicated region
    $region18: #{tpu_custom_call.1} parent=1 // pred_check
      _
    $region19: #{tpu_custom_call.1} parent=1 // pred_check_branch
      %36 = sbr.rel (0) target = $region21
    $region20: #{tpu_custom_call.1} parent=1 // pred_region
      _
    $region21: #{tpu_custom_call.1} parent=1 // pred_fallthru
      _
    // Predicated region
    $region22: #{tpu_custom_call.1} parent=1 // pred_check
      _
    $region23: #{tpu_custom_call.1} parent=1 // pred_check_branch
      %38 = sbr.rel (0) target = $region25
    $region24: #{tpu_custom_call.1} parent=1 // pred_region
      %s40 = ssub.s32 2048, 2048
      %41 = vsyncadd [#allocation9], %s40
      %s42 = sshll.u32 [#allocation8], 4
      %s43 = int_to_ptr.vmem [resolvable:$true] %s42
      %48 = dma.hbm_to_vmem [thread:$0]  %s5, 2048, %s43, [#allocation9], 256, 256, 16
    $region25: #{tpu_custom_call.1} parent=1 // pred_fallthru
      _
    // Predicated region
    $region26: #{tpu_custom_call.1} parent=1 // pred_check
      _
    $region27: #{tpu_custom_call.1} parent=1 // pred_check_branch
      %50 = sbr.rel (0) target = $region29
    $region28: #{tpu_custom_call.1} parent=1 // pred_region
      _
    $region29: #{tpu_custom_call.1} parent=1 // pred_fallthru
      _
    // Predicated region
    $region30: #{tpu_custom_call.1} parent=1 // pred_check
      _
    $region31: #{tpu_custom_call.1} parent=1 // pred_check_branch
      %52 = sbr.rel (0) target = $region33
    $region32: #{tpu_custom_call.1} parent=1 // pred_region
      _
    $region33: #{tpu_custom_call.1} parent=1 // pred_fallthru
      _
    // Predicated region
    $region34: #{tpu_custom_call.1} parent=1 // pred_check
      _
    $region35: #{tpu_custom_call.1} parent=1 // pred_check_branch
      %54 = sbr.rel (0) target = $region37
    $region36: #{tpu_custom_call.1} parent=1 // pred_region
      _
    $region37: #{tpu_custom_call.1} parent=1 // pred_fallthru
      _
    // Predicated region
    $region38: #{tpu_custom_call.1} parent=1 // pred_check
      _
    $region39: #{tpu_custom_call.1} parent=1 // pred_check_branch
      %56 = sbr.rel (0) target = $region41
    $region40: #{tpu_custom_call.1} parent=1 // pred_region
      %57 = dma.done [#allocation6], 2048
    $region41: #{tpu_custom_call.1} parent=1 // pred_fallthru
      _
    // Predicated region
    $region42: #{tpu_custom_call.1} parent=1 // pred_check
      _
    $region43: #{tpu_custom_call.1} parent=1 // pred_check_branch
      %59 = sbr.rel (0) target = $region45
    $region44: #{tpu_custom_call.1} parent=1 // pred_region
      %60 = dma.done [#allocation9], 2048
    $region45: #{tpu_custom_call.1} parent=1 // pred_fallthru
      _
    %v61 = vld [vmem:[%s0] sm:$0xff]
    %v62 = vld [vmem:[%s0 + $0x8] sm:$0xff]
    %v63 = vld [vmem:[%s0 + $0x10] sm:$0xff]
    %v64 = vld [vmem:[%s0 + $0x18] sm:$0xff]
    %v65 = vld [vmem:[%s0 + $0x20] sm:$0xff]
    %v66 = vld [vmem:[%s0 + $0x28] sm:$0xff]
    %v67 = vld [vmem:[%s0 + $0x30] sm:$0xff]
    %v68 = vld [vmem:[%s0 + $0x38] sm:$0xff]
    %v69 = vld [vmem:[#allocation5] sm:$0xff]
    %v70 = vld [vmem:[#allocation5 + $0x8] sm:$0xff]
    %v71 = vld [vmem:[#allocation5 + $0x10] sm:$0xff]
    %v72 = vld [vmem:[#allocation5 + $0x18] sm:$0xff]
    %v73 = vld [vmem:[#allocation5 + $0x20] sm:$0xff]
    %v74 = vld [vmem:[#allocation5 + $0x28] sm:$0xff]
    %v75 = vld [vmem:[#allocation5 + $0x30] sm:$0xff]
    %v76 = vld [vmem:[#allocation5 + $0x38] sm:$0xff]
    %v77 = vld [vmem:[#allocation5 + $0x40] sm:$0xff]
    %v78 = vld [vmem:[#allocation5 + $0x48] sm:$0xff]
    %v79 = vld [vmem:[#allocation5 + $0x50] sm:$0xff]
    %v80 = vld [vmem:[#allocation5 + $0x58] sm:$0xff]
    %v81 = vld [vmem:[#allocation5 + $0x60] sm:$0xff]
    %v82 = vld [vmem:[#allocation5 + $0x68] sm:$0xff]
    %v83 = vld [vmem:[#allocation5 + $0x70] sm:$0xff]
    %v84 = vld [vmem:[#allocation5 + $0x78] sm:$0xff]
    %v85 = vld [vmem:[%s4] sm:$0x3]
    %v87 = vlaneseq
    %v88 = vshrl.u32 %v87, 7
    %v89 = vsub.s32 0, %v88
    %v90 = vrot.slane %v85, %v89
    %v91 = vlaneseq
    %v92 = vshrl.u32 %v91, 7
    %v93 = vsub.s32 1, %v92
    %v94 = vrot.slane %v85, %v93
    %vm97 = vcmask 523264
    %v99 = vsel %vm97, %v61, 0
    %v102 = vsel %vm97, %v62, 0
    %v105 = vsel %vm97, %v63, 0
    %v108 = vsel %vm97, %v64, 0
    %v111 = vsel %vm97, %v65, 0
    %v114 = vsel %vm97, %v66, 0
    %v117 = vsel %vm97, %v67, 0
    %v120 = vsel %vm97, %v68, 0
    %122 = vmatprep.subr.mxu0 0.0
    %123 = vmatpush1.msra.mxu0 0.0
    %124 = vmatprep.subr.mxu0 0.0
    %125 = vmatpush1.msra.mxu0 0.0
    %126 = vmatprep.subr.mxu0 0.0
    %127 = vmatpush1.msra.mxu0 0.0
    %128 = vmatprep.subr.mxu0 0.0
    %129 = vmatpush1.msra.mxu0 0.0
    %130 = vmatprep.subr.mxu0 0.0
    %131 = vmatpush1.msra.mxu0 0.0
    %132 = vmatprep.subr.mxu0 0.0
    %133 = vmatpush1.msra.mxu0 0.0
    %134 = vmatprep.subr.mxu0 0.0
    %135 = vmatpush1.msra.mxu0 0.0
    %136 = vmatprep.subr.mxu0 0.0
    %137 = vmatpush1.msra.mxu0 0.0
    %138 = vmatprep.subr.mxu0 %v84
    %139 = vmatpush1.msra.mxu0 %v83
    %140 = vmatprep.subr.mxu0 %v82
    %141 = vmatpush1.msra.mxu0 %v81
    %142 = vmatprep.subr.mxu0 %v80
    %143 = vmatpush1.msra.mxu0 %v79
    %144 = vmatprep.subr.mxu0 %v78
    %145 = vmatpush1.msra.mxu0 %v77
    %146 = vmatprep.subr.mxu0 %v76
    %147 = vmatpush1.msra.mxu0 %v75
    %148 = vmatprep.subr.mxu0 %v74
    %149 = vmatpush1.msra.mxu0 %v73
    %150 = vmatprep.subr.mxu0 %v72
    %151 = vmatpush1.msra.mxu0 %v71
    %152 = vmatprep.subr.mxu0 %v70
    %153 = vmatpush1.msra.mxu0 %v69
    %154 = vmatprep.subr.mxu0 0.0
    %155 = vmatpush2.msra.mxu0 0.0
    %156 = vmatprep.subr.mxu0 0.0
    %157 = vmatpush2.msra.mxu0 0.0
    %158 = vmatprep.subr.mxu0 0.0
    %159 = vmatpush2.msra.mxu0 0.0
    %160 = vmatprep.subr.mxu0 0.0
    %161 = vmatpush2.msra.mxu0 0.0
    %162 = vmatprep.subr.mxu0 0.0
    %163 = vmatpush2.msra.mxu0 0.0
    %164 = vmatprep.subr.mxu0 0.0
    %165 = vmatpush2.msra.mxu0 0.0
    %166 = vmatprep.subr.mxu0 0.0
    %167 = vmatpush2.msra.mxu0 0.0
    %168 = vmatprep.subr.mxu0 0.0
    %169 = vmatpush2.msra.mxu0 0.0
    %170 = vmatprep.subr.mxu0 0.0
    %171 = vmatpush2.msra.mxu0 0.0
    %172 = vmatprep.subr.mxu0 0.0
    %173 = vmatpush2.msra.mxu0 0.0
    %174 = vmatprep.subr.mxu0 0.0
    %175 = vmatpush2.msra.mxu0 0.0
    %176 = vmatprep.subr.mxu0 0.0
    %177 = vmatpush2.msra.mxu0 0.0
    %178 = vmatprep.subr.mxu0 0.0
    %179 = vmatpush2.msra.mxu0 0.0
    %180 = vmatprep.subr.mxu0 0.0
    %181 = vmatpush2.msra.mxu0 0.0
    %182 = vmatprep.subr.mxu0 0.0
    %183 = vmatpush2.msra.mxu0 0.0
    %184 = vmatprep.subr.mxu0 0.0
    %185 = vmatpush2.msra.mxu0 0.0
    %186 = vmatprep.mubr.f32.mxu0 0.0
    %187 = vmatmul.mubr.f32.gmra.mxu0 %v99
    %v188 = vpop.f32.mrf.mxu0
    %v189 = vadd.f32 %v90, %v188
    %v190 = vpop.f32.mrf.mxu0
    %v191 = vadd.f32 %v94, %v190
    %192 = vmatprep.mubr.f32.mxu0 0.0
    %193 = vmatmul.mubr.f32.gmra.mxu0 %v102
    %v194 = vpop.f32.mrf.mxu0
    %v195 = vadd.f32 %v90, %v194
    %v196 = vpop.f32.mrf.mxu0
    %v197 = vadd.f32 %v94, %v196
    %198 = vmatprep.mubr.f32.mxu0 0.0
    %199 = vmatmul.mubr.f32.gmra.mxu0 %v105
    %v200 = vpop.f32.mrf.mxu0
    %v201 = vadd.f32 %v90, %v200
    %v202 = vpop.f32.mrf.mxu0
    %v203 = vadd.f32 %v94, %v202
    %204 = vmatprep.mubr.f32.mxu0 0.0
    %205 = vmatmul.mubr.f32.gmra.mxu0 %v108
    %v206 = vpop.f32.mrf.mxu0
    %v207 = vadd.f32 %v90, %v206
    %v208 = vpop.f32.mrf.mxu0
    %v209 = vadd.f32 %v94, %v208
    %210 = vmatprep.mubr.f32.mxu0 0.0
    %211 = vmatmul.mubr.f32.gmra.mxu0 %v111
    %v212 = vpop.f32.mrf.mxu0
    %v213 = vadd.f32 %v90, %v212
    %v214 = vpop.f32.mrf.mxu0
    %v215 = vadd.f32 %v94, %v214
    %216 = vmatprep.mubr.f32.mxu0 0.0
    %217 = vmatmul.mubr.f32.gmra.mxu0 %v114
    %v218 = vpop.f32.mrf.mxu0
    %v219 = vadd.f32 %v90, %v218
    %v220 = vpop.f32.mrf.mxu0
    %v221 = vadd.f32 %v94, %v220
    %222 = vmatprep.mubr.f32.mxu0 0.0
    %223 = vmatmul.mubr.f32.gmra.mxu0 %v117
    %v224 = vpop.f32.mrf.mxu0
    %v225 = vadd.f32 %v90, %v224
    %v226 = vpop.f32.mrf.mxu0
    %v227 = vadd.f32 %v94, %v226
    %228 = vmatprep.mubr.f32.mxu0 0.0
    %229 = vmatmul.mubr.f32.gmra.mxu0 %v120
    %v230 = vpop.f32.mrf.mxu0
    %v231 = vadd.f32 %v90, %v230
    %v232 = vpop.f32.mrf.mxu0
    %v233 = vadd.f32 %v94, %v232
    %234 = vdwg.mxu0
    %235 = vst [vmem:[#allocation2] sm:$0xff] %v189
    %236 = vst [vmem:[#allocation2 + $0x8] sm:$0xff] %v191
    %237 = vst [vmem:[#allocation2 + $0x10] sm:$0xff] %v195
    %238 = vst [vmem:[#allocation2 + $0x18] sm:$0xff] %v197
    %239 = vst [vmem:[#allocation2 + $0x20] sm:$0xff] %v201
    %240 = vst [vmem:[#allocation2 + $0x28] sm:$0xff] %v203
    %241 = vst [vmem:[#allocation2 + $0x30] sm:$0xff] %v207
    %242 = vst [vmem:[#allocation2 + $0x38] sm:$0xff] %v209
    %243 = vst [vmem:[#allocation2 + $0x40] sm:$0xff] %v213
    %244 = vst [vmem:[#allocation2 + $0x48] sm:$0xff] %v215
    %245 = vst [vmem:[#allocation2 + $0x50] sm:$0xff] %v219
    %246 = vst [vmem:[#allocation2 + $0x58] sm:$0xff] %v221
    %247 = vst [vmem:[#allocation2 + $0x60] sm:$0xff] %v225
    %248 = vst [vmem:[#allocation2 + $0x68] sm:$0xff] %v227
    %249 = vst [vmem:[#allocation2 + $0x70] sm:$0xff] %v231
    %250 = vst [vmem:[#allocation2 + $0x78] sm:$0xff] %v233
    %v251 = vld [vmem:[%s1] sm:$0xff]
    %v252 = vld [vmem:[%s2] sm:$0xff]
    %v253 = vlaneseq
    %v254 = vshrl.u32 %v253, 7
    %v255 = vsub.s32 0, %v254
    %v256 = vrot.slane %v251, %v255
    %258 = vbcast.lane.b32.xlu0 %v256, 256
    %v259 = vpop.permute.xlu0 %258
    %v260 = vlaneseq
    %v261 = vshrl.u32 %v260, 7
    %v262 = vsub.s32 1, %v261
    %v263 = vrot.slane %v251, %v262
    %265 = vbcast.lane.b32.xlu0 %v263, 256
    %v266 = vpop.permute.xlu0 %265
    %v267 = vlaneseq
    %v268 = vshrl.u32 %v267, 7
    %v269 = vsub.s32 2, %v268
    %v270 = vrot.slane %v251, %v269
    %272 = vbcast.lane.b32.xlu0 %v270, 256
    %v273 = vpop.permute.xlu0 %272
    %v274 = vlaneseq
    %v275 = vshrl.u32 %v274, 7
    %v276 = vsub.s32 3, %v275
    %v277 = vrot.slane %v251, %v276
    %279 = vbcast.lane.b32.xlu0 %v277, 256
    %v280 = vpop.permute.xlu0 %279
    %v281 = vlaneseq
    %v282 = vshrl.u32 %v281, 7
    %v283 = vsub.s32 4, %v282
    %v284 = vrot.slane %v251, %v283
    %286 = vbcast.lane.b32.xlu0 %v284, 256
    %v287 = vpop.permute.xlu0 %286
    %v288 = vlaneseq
    %v289 = vshrl.u32 %v288, 7
    %v290 = vsub.s32 5, %v289
    %v291 = vrot.slane %v251, %v290
    %293 = vbcast.lane.b32.xlu0 %v291, 256
    %v294 = vpop.permute.xlu0 %293
    %v295 = vlaneseq
    %v296 = vshrl.u32 %v295, 7
    %v297 = vsub.s32 6, %v296
    %v298 = vrot.slane %v251, %v297
    %300 = vbcast.lane.b32.xlu0 %v298, 256
    %v301 = vpop.permute.xlu0 %300
    %v302 = vlaneseq
    %v303 = vshrl.u32 %v302, 7
    %v304 = vsub.s32 7, %v303
    %v305 = vrot.slane %v251, %v304
    %307 = vbcast.lane.b32.xlu0 %v305, 256
    %v308 = vpop.permute.xlu0 %307
    %vm309 = vcmask 261120
    %310 = vst.msk [vmem:[#allocation3] sm:$0xff] %vm309, %v259
    %311 = vst.msk [vmem:[#allocation3 + $0x8] sm:$0xff] %vm309, %v266
    %312 = vst.msk [vmem:[#allocation3 + $0x10] sm:$0xff] %vm309, %v273
    %313 = vst.msk [vmem:[#allocation3 + $0x18] sm:$0xff] %vm309, %v280
    %314 = vst.msk [vmem:[#allocation3 + $0x20] sm:$0xff] %vm309, %v287
    %315 = vst.msk [vmem:[#allocation3 + $0x28] sm:$0xff] %vm309, %v294
    %316 = vst.msk [vmem:[#allocation3 + $0x30] sm:$0xff] %vm309, %v301
    %317 = vst.msk [vmem:[#allocation3 + $0x38] sm:$0xff] %vm309, %v308
    %v318 = vlaneseq
    %v319 = vshrl.u32 %v318, 7
    %v320 = vsub.s32 0, %v319
    %v321 = vrot.slane %v252, %v320
    %323 = vbcast.lane.b32.xlu0 %v321, 256
    %v324 = vpop.permute.xlu0 %323
    %v325 = vlaneseq
    %v326 = vshrl.u32 %v325, 7
    %v327 = vsub.s32 1, %v326
    %v328 = vrot.slane %v252, %v327
    %330 = vbcast.lane.b32.xlu0 %v328, 256
    %v331 = vpop.permute.xlu0 %330
    %v332 = vlaneseq
    %v333 = vshrl.u32 %v332, 7
    %v334 = vsub.s32 2, %v333
    %v335 = vrot.slane %v252, %v334
    %337 = vbcast.lane.b32.xlu0 %v335, 256
    %v338 = vpop.permute.xlu0 %337
    %v339 = vlaneseq
    %v340 = vshrl.u32 %v339, 7
    %v341 = vsub.s32 3, %v340
    %v342 = vrot.slane %v252, %v341
    %344 = vbcast.lane.b32.xlu0 %v342, 256
    %v345 = vpop.permute.xlu0 %344
    %v346 = vlaneseq
    %v347 = vshrl.u32 %v346, 7
    %v348 = vsub.s32 4, %v347
    %v349 = vrot.slane %v252, %v348
    %351 = vbcast.lane.b32.xlu0 %v349, 256
    %v352 = vpop.permute.xlu0 %351
    %v353 = vlaneseq
    %v354 = vshrl.u32 %v353, 7
    %v355 = vsub.s32 5, %v354
    %v356 = vrot.slane %v252, %v355
    %358 = vbcast.lane.b32.xlu0 %v356, 256
    %v359 = vpop.permute.xlu0 %358
    %v360 = vlaneseq
    %v361 = vshrl.u32 %v360, 7
    %v362 = vsub.s32 6, %v361
    %v363 = vrot.slane %v252, %v362
    %365 = vbcast.lane.b32.xlu0 %v363, 256
    %v366 = vpop.permute.xlu0 %365
    %v367 = vlaneseq
    %v368 = vshrl.u32 %v367, 7
    %v369 = vsub.s32 7, %v368
    %v370 = vrot.slane %v252, %v369
    %372 = vbcast.lane.b32.xlu0 %v370, 256
    %v373 = vpop.permute.xlu0 %372
    %vm374 = vcmask 523520
    %375 = vst.msk [vmem:[#allocation3] sm:$0xff] %vm374, %v324
    %376 = vst.msk [vmem:[#allocation3 + $0x8] sm:$0xff] %vm374, %v331
    %377 = vst.msk [vmem:[#allocation3 + $0x10] sm:$0xff] %vm374, %v338
    %378 = vst.msk [vmem:[#allocation3 + $0x18] sm:$0xff] %vm374, %v345
    %379 = vst.msk [vmem:[#allocation3 + $0x20] sm:$0xff] %vm374, %v352
    %380 = vst.msk [vmem:[#allocation3 + $0x28] sm:$0xff] %vm374, %v359
    %381 = vst.msk [vmem:[#allocation3 + $0x30] sm:$0xff] %vm374, %v366
    %382 = vst.msk [vmem:[#allocation3 + $0x38] sm:$0xff] %vm374, %v373
    %v383 = vld [vmem:[#allocation8] sm:$0xff]
    %v384 = vld [vmem:[#allocation8 + $0x8] sm:$0xff]
    %v385 = vld [vmem:[#allocation8 + $0x10] sm:$0xff]
    %v386 = vld [vmem:[#allocation8 + $0x18] sm:$0xff]
    %v387 = vld [vmem:[#allocation8 + $0x20] sm:$0xff]
    %v388 = vld [vmem:[#allocation8 + $0x28] sm:$0xff]
    %v389 = vld [vmem:[#allocation8 + $0x30] sm:$0xff]
    %v390 = vld [vmem:[#allocation8 + $0x38] sm:$0xff]
    %v391 = vld [vmem:[#allocation8 + $0x40] sm:$0xff]
    %v392 = vld [vmem:[#allocation8 + $0x48] sm:$0xff]
    %v393 = vld [vmem:[#allocation8 + $0x50] sm:$0xff]
    %v394 = vld [vmem:[#allocation8 + $0x58] sm:$0xff]
    %v395 = vld [vmem:[#allocation8 + $0x60] sm:$0xff]
    %v396 = vld [vmem:[#allocation8 + $0x68] sm:$0xff]
    %v397 = vld [vmem:[#allocation8 + $0x70] sm:$0xff]
    %v398 = vld [vmem:[#allocation8 + $0x78] sm:$0xff]
    %v399 = vld [vmem:[#allocation2] ss:$8 sm:$0x3]
    %s400 = scalar_lea.vmem [#allocation2], 16
    %v401 = vld [vmem:[%s400] ss:$8 sm:$0x3]
    %s402 = scalar_lea.vmem [#allocation2], 32
    %v403 = vld [vmem:[%s402] ss:$8 sm:$0x3]
    %s404 = scalar_lea.vmem [#allocation2], 48
    %v405 = vld [vmem:[%s404] ss:$8 sm:$0x3]
    %s406 = scalar_lea.vmem [#allocation2], 64
    %v407 = vld [vmem:[%s406] ss:$8 sm:$0x3]
    %s408 = scalar_lea.vmem [#allocation2], 80
    %v409 = vld [vmem:[%s408] ss:$8 sm:$0x3]
    %s410 = scalar_lea.vmem [#allocation2], 96
    %v411 = vld [vmem:[%s410] ss:$8 sm:$0x3]
    %s412 = scalar_lea.vmem [#allocation2], 112
    %v413 = vld [vmem:[%s412] ss:$8 sm:$0x3]
    %v415 = vsel %vm97, 0.0, 0
    %417 = vmatprep.subr.mxu0 0.0
    %418 = vmatpush1.msra.mxu0 0.0
    %419 = vmatprep.subr.mxu0 0.0
    %420 = vmatpush1.msra.mxu0 0.0
    %421 = vmatprep.subr.mxu0 0.0
    %422 = vmatpush1.msra.mxu0 0.0
    %423 = vmatprep.subr.mxu0 0.0
    %424 = vmatpush1.msra.mxu0 0.0
    %425 = vmatprep.subr.mxu0 0.0
    %426 = vmatpush1.msra.mxu0 0.0
    %427 = vmatprep.subr.mxu0 0.0
    %428 = vmatpush1.msra.mxu0 0.0
    %429 = vmatprep.subr.mxu0 0.0
    %430 = vmatpush1.msra.mxu0 0.0
    %431 = vmatprep.subr.mxu0 0.0
    %432 = vmatpush1.msra.mxu0 0.0
    %433 = vmatprep.subr.mxu0 %v398
    %434 = vmatpush1.msra.mxu0 %v397
    %435 = vmatprep.subr.mxu0 %v396
    %436 = vmatpush1.msra.mxu0 %v395
    %437 = vmatprep.subr.mxu0 %v394
    %438 = vmatpush1.msra.mxu0 %v393
    %439 = vmatprep.subr.mxu0 %v392
    %440 = vmatpush1.msra.mxu0 %v391
    %441 = vmatprep.subr.mxu0 %v390
    %442 = vmatpush1.msra.mxu0 %v389
    %443 = vmatprep.subr.mxu0 %v388
    %444 = vmatpush1.msra.mxu0 %v387
    %445 = vmatprep.subr.mxu0 %v386
    %446 = vmatpush1.msra.mxu0 %v385
    %447 = vmatprep.subr.mxu0 %v384
    %448 = vmatpush1.msra.mxu0 %v383
    %449 = vmatprep.subr.mxu0 0.0
    %450 = vmatpush2.msra.mxu0 0.0
    %451 = vmatprep.subr.mxu0 0.0
    %452 = vmatpush2.msra.mxu0 0.0
    %453 = vmatprep.subr.mxu0 0.0
    %454 = vmatpush2.msra.mxu0 0.0
    %455 = vmatprep.subr.mxu0 0.0
    %456 = vmatpush2.msra.mxu0 0.0
    %457 = vmatprep.subr.mxu0 0.0
    %458 = vmatpush2.msra.mxu0 0.0
    %459 = vmatprep.subr.mxu0 0.0
    %460 = vmatpush2.msra.mxu0 0.0
    %461 = vmatprep.subr.mxu0 0.0
    %462 = vmatpush2.msra.mxu0 0.0
    %463 = vmatprep.subr.mxu0 0.0
    %464 = vmatpush2.msra.mxu0 0.0
    %465 = vmatprep.subr.mxu0 0.0
    %466 = vmatpush2.msra.mxu0 0.0
    %467 = vmatprep.subr.mxu0 0.0
    %468 = vmatpush2.msra.mxu0 0.0
    %469 = vmatprep.subr.mxu0 0.0
    %470 = vmatpush2.msra.mxu0 0.0
    %471 = vmatprep.subr.mxu0 0.0
    %472 = vmatpush2.msra.mxu0 0.0
    %473 = vmatprep.subr.mxu0 0.0
    %474 = vmatpush2.msra.mxu0 0.0
    %475 = vmatprep.subr.mxu0 0.0
    %476 = vmatpush2.msra.mxu0 0.0
    %477 = vmatprep.subr.mxu0 0.0
    %478 = vmatpush2.msra.mxu0 0.0
    %479 = vmatprep.subr.mxu0 0.0
    %480 = vmatpush2.msra.mxu0 0.0
    %481 = vmatprep.mubr.f32.mxu0 0.0
    %482 = vmatmul.mubr.f32.gmra.mxu0 %v415
    %v483 = vpop.f32.mrf.mxu0
    %v484 = vadd.f32 0.0, %v483
    %v485 = vpop.f32.mrf.mxu0
    %v486 = vadd.f32 0.0, %v485
    %487 = vdwg.mxu0
    %v490 = vcombine.low %v484, %v486
    %v491 = vcombine.high %v484, %v486
    %v493 = vunpack.c.l.s4 1966171168
    %v494 = vunpack.c.0.s8 %v493
    %v495 = vlaneseq
    %v496 = vshrl.u32 %v495, 7
    %v497 = vsub.s32 %v494, %v496
    %v498 = vrot.slane %v490, %v497
    %v500 = vunpack.c.l.s4 1966171168
    %v501 = vunpack.c.0.s8 %v500
    %v502 = vlaneseq
    %v503 = vshrl.u32 %v502, 7
    %v504 = vsub.s32 %v501, %v503
    %v505 = vrot.slane %v491, %v504
    %v506 = vcombine.high %v498, %v498
    %v507 = vcombine.high %v505, %v505
    %v509 = vunpack.c.l.s4 1966171168
    %v510 = vunpack.c.0.s8 %v509
    %v511 = vlaneseq
    %v512 = vshrl.u32 %v511, 7
    %v513 = vsub.s32 %v510, %v512
    %v514 = vrot.slane %v498, %v513
    %v516 = vunpack.c.l.s4 1966171168
    %v517 = vunpack.c.0.s8 %v516
    %v518 = vlaneseq
    %v519 = vshrl.u32 %v518, 7
    %v520 = vsub.s32 %v517, %v519
    %v521 = vrot.slane %v505, %v520
    %v523 = vunpack.c.l.s4 1966171168
    %v524 = vunpack.c.0.s8 %v523
    %v525 = vlaneseq
    %v526 = vshrl.u32 %v525, 7
    %v527 = vsub.s32 %v524, %v526
    %v528 = vrot.slane %v506, %v527
    %v530 = vunpack.c.l.s4 1966171168
    %v531 = vunpack.c.0.s8 %v530
    %v532 = vlaneseq
    %v533 = vshrl.u32 %v532, 7
    %v534 = vsub.s32 %v531, %v533
    %v535 = vrot.slane %v507, %v534
    %v536 = vcombine.high %v514, %v514
    %v537 = vcombine.high %v521, %v521
    %v538 = vcombine.high %v528, %v528
    %v539 = vcombine.high %v535, %v535
    %v548 = vadd.f32 %v399, %v514
    %v549 = vadd.f32 %v401, %v528
    %v550 = vadd.f32 %v403, %v536
    %v551 = vadd.f32 %v405, %v538
    %v552 = vadd.f32 %v407, %v521
    %v553 = vadd.f32 %v409, %v535
    %v554 = vadd.f32 %v411, %v537
    %v555 = vadd.f32 %v413, %v539
    %v556 = vxor.u32 %v548, 2147483648
    %v557 = vxor.u32 %v549, 2147483648
    %v558 = vxor.u32 %v550, 2147483648
    %v559 = vxor.u32 %v551, 2147483648
    %v560 = vxor.u32 %v552, 2147483648
    %v561 = vxor.u32 %v553, 2147483648
    %v562 = vxor.u32 %v554, 2147483648
    %v563 = vxor.u32 %v555, 2147483648
    %v564 = vmul.f32 %v556, 1.442695
    %v565 = vpow.pop %v564
    %v566 = vmul.f32 %v557, 1.442695
    %v567 = vpow.pop %v566
    %v568 = vmul.f32 %v558, 1.442695
    %v569 = vpow.pop %v568
    %v570 = vmul.f32 %v559, 1.442695
    %v571 = vpow.pop %v570
    %v572 = vmul.f32 %v560, 1.442695
    %v573 = vpow.pop %v572
    %v574 = vmul.f32 %v561, 1.442695
    %v575 = vpow.pop %v574
    %v576 = vmul.f32 %v562, 1.442695
    %v577 = vpow.pop %v576
    %v578 = vmul.f32 %v563, 1.442695
    %v579 = vpow.pop %v578
    %v580 = vadd.f32 %v565, 1.0
    %v581 = vadd.f32 %v567, 1.0
    %v582 = vadd.f32 %v569, 1.0
    %v583 = vadd.f32 %v571, 1.0
    %v584 = vadd.f32 %v573, 1.0
    %v585 = vadd.f32 %v575, 1.0
    %v586 = vadd.f32 %v577, 1.0
    %v587 = vadd.f32 %v579, 1.0
    %v588 = vrcp.pop %v580
    %v589 = vmul.f32 1.0, %v588
    %v590 = vrcp.pop %v581
    %v591 = vmul.f32 1.0, %v590
    %v592 = vrcp.pop %v582
    %v593 = vmul.f32 1.0, %v592
    %v594 = vrcp.pop %v583
    %v595 = vmul.f32 1.0, %v594
    %v596 = vrcp.pop %v584
    %v597 = vmul.f32 1.0, %v596
    %v598 = vrcp.pop %v585
    %v599 = vmul.f32 1.0, %v598
    %v600 = vrcp.pop %v586
    %v601 = vmul.f32 1.0, %v600
    %v602 = vrcp.pop %v587
    %v603 = vmul.f32 1.0, %v602
    %612 = vrot.lane.b32.xlu0 %v548, 64
    %v613 = vpop.permute.xlu0 %612
    %614 = vrot.lane.b32.xlu0 %v549, 64
    %v615 = vpop.permute.xlu0 %614
    %616 = vrot.lane.b32.xlu0 %v550, 64
    %v617 = vpop.permute.xlu0 %616
    %618 = vrot.lane.b32.xlu0 %v551, 64
    %v619 = vpop.permute.xlu0 %618
    %620 = vrot.lane.b32.xlu0 %v552, 64
    %v621 = vpop.permute.xlu0 %620
    %622 = vrot.lane.b32.xlu0 %v553, 64
    %v623 = vpop.permute.xlu0 %622
    %624 = vrot.lane.b32.xlu0 %v554, 64
    %v625 = vpop.permute.xlu0 %624
    %626 = vrot.lane.b32.xlu0 %v555, 64
    %v627 = vpop.permute.xlu0 %626
    %v628 = vrot.slane %v613, 1
    %v629 = vrot.slane %v615, 1
    %v630 = vrot.slane %v617, 1
    %v631 = vrot.slane %v619, 1
    %v632 = vrot.slane %v621, 1
    %v633 = vrot.slane %v623, 1
    %v634 = vrot.slane %v625, 1
    %v635 = vrot.slane %v627, 1
    %v644 = vtanh.pop %v628
    %v645 = vtanh.pop %v629
    %v646 = vtanh.pop %v630
    %v647 = vtanh.pop %v631
    %v648 = vtanh.pop %v632
    %v649 = vtanh.pop %v633
    %v650 = vtanh.pop %v634
    %v651 = vtanh.pop %v635
    %v652 = vmul.f32 %v589, 0.0
    %v653 = vmul.f32 %v591, 0.0
    %v654 = vmul.f32 %v593, 0.0
    %v655 = vmul.f32 %v595, 0.0
    %v656 = vmul.f32 %v597, 0.0
    %v657 = vmul.f32 %v599, 0.0
    %v658 = vmul.f32 %v601, 0.0
    %v659 = vmul.f32 %v603, 0.0
    %v660 = vmul.f32 %v589, %v644
    %v661 = vmul.f32 %v591, %v645
    %v662 = vmul.f32 %v593, %v646
    %v663 = vmul.f32 %v595, %v647
    %v664 = vmul.f32 %v597, %v648
    %v665 = vmul.f32 %v599, %v649
    %v666 = vmul.f32 %v601, %v650
    %v667 = vmul.f32 %v603, %v651
    %676 = vrot.lane.b32.xlu0 %v660, 64
    %v677 = vpop.permute.xlu0 %676
    %678 = vrot.lane.b32.xlu0 %v661, 64
    %v679 = vpop.permute.xlu0 %678
    %680 = vrot.lane.b32.xlu0 %v662, 64
    %v681 = vpop.permute.xlu0 %680
    %682 = vrot.lane.b32.xlu0 %v663, 64
    %v683 = vpop.permute.xlu0 %682
    %684 = vrot.lane.b32.xlu0 %v664, 64
    %v685 = vpop.permute.xlu0 %684
    %686 = vrot.lane.b32.xlu0 %v665, 64
    %v687 = vpop.permute.xlu0 %686
    %688 = vrot.lane.b32.xlu0 %v666, 64
    %v689 = vpop.permute.xlu0 %688
    %690 = vrot.lane.b32.xlu0 %v667, 64
    %v691 = vpop.permute.xlu0 %690
    %v700 = vadd.f32 %v652, %v677
    %v701 = vadd.f32 %v653, %v679
    %v702 = vadd.f32 %v654, %v681
    %v703 = vadd.f32 %v655, %v683
    %v704 = vadd.f32 %v656, %v685
    %v705 = vadd.f32 %v657, %v687
    %v706 = vadd.f32 %v658, %v689
    %v707 = vadd.f32 %v659, %v691
    %v708 = vtanh.pop %v700
    %v709 = vtanh.pop %v701
    %v710 = vtanh.pop %v702
    %v711 = vtanh.pop %v703
    %v712 = vtanh.pop %v704
    %v713 = vtanh.pop %v705
    %v714 = vtanh.pop %v706
    %v715 = vtanh.pop %v707
    %v724 = vrot.slane %v589, 1
    %v725 = vrot.slane %v591, 1
    %v726 = vrot.slane %v593, 1
    %v727 = vrot.slane %v595, 1
    %v728 = vrot.slane %v597, 1
    %v729 = vrot.slane %v599, 1
    %v730 = vrot.slane %v601, 1
    %v731 = vrot.slane %v603, 1
    %748 = vrot.lane.b32.xlu0 %v708, 64
    %v749 = vpop.permute.xlu0 %748
    %750 = vrot.lane.b32.xlu0 %v709, 64
    %v751 = vpop.permute.xlu0 %750
    %752 = vrot.lane.b32.xlu0 %v710, 64
    %v753 = vpop.permute.xlu0 %752
    %754 = vrot.lane.b32.xlu0 %v711, 64
    %v755 = vpop.permute.xlu0 %754
    %756 = vrot.lane.b32.xlu0 %v712, 64
    %v757 = vpop.permute.xlu0 %756
    %758 = vrot.lane.b32.xlu0 %v713, 64
    %v759 = vpop.permute.xlu0 %758
    %760 = vrot.lane.b32.xlu0 %v714, 64
    %v761 = vpop.permute.xlu0 %760
    %762 = vrot.lane.b32.xlu0 %v715, 64
    %v763 = vpop.permute.xlu0 %762
    %v772 = vmul.f32 %v724, %v749
    %v773 = vmul.f32 %v725, %v751
    %v774 = vmul.f32 %v726, %v753
    %v775 = vmul.f32 %v727, %v755
    %v776 = vmul.f32 %v728, %v757
    %v777 = vmul.f32 %v729, %v759
    %v778 = vmul.f32 %v730, %v761
    %v779 = vmul.f32 %v731, %v763
    %v780 = vld [vmem:[#allocation3] sm:$0x1]
    %v781 = vld [vmem:[#allocation3 + $0x8] sm:$0x1]
    %v782 = vld [vmem:[#allocation3 + $0x10] sm:$0x1]
    %v783 = vld [vmem:[#allocation3 + $0x18] sm:$0x1]
    %v784 = vld [vmem:[#allocation3 + $0x20] sm:$0x1]
    %v785 = vld [vmem:[#allocation3 + $0x28] sm:$0x1]
    %v786 = vld [vmem:[#allocation3 + $0x30] sm:$0x1]
    %v787 = vld [vmem:[#allocation3 + $0x38] sm:$0x1]
    %vm788 = vcmp.gt.f32.partialorder %v780, 0.0
    %vm789 = vcmp.gt.f32.partialorder %v781, 0.0
    %vm790 = vcmp.gt.f32.partialorder %v782, 0.0
    %vm791 = vcmp.gt.f32.partialorder %v783, 0.0
    %vm792 = vcmp.gt.f32.partialorder %v784, 0.0
    %vm793 = vcmp.gt.f32.partialorder %v785, 0.0
    %vm794 = vcmp.gt.f32.partialorder %v786, 0.0
    %vm795 = vcmp.gt.f32.partialorder %v787, 0.0
    %v796 = vsel %vm788, %v772, 0.0
    %v797 = vsel %vm789, %v773, 0.0
    %v798 = vsel %vm790, %v774, 0.0
    %v799 = vsel %vm791, %v775, 0.0
    %v800 = vsel %vm792, %v776, 0.0
    %v801 = vsel %vm793, %v777, 0.0
    %v802 = vsel %vm794, %v778, 0.0
    %v803 = vsel %vm795, %v779, 0.0
    %v812 = vlaneseq
    %v813 = vshrl.u32 %v812, 7
    %v814 = vsub.s32 0, %v813
    %v815 = vrot.slane %v700, %v814
    %v816 = vlaneseq
    %v817 = vshrl.u32 %v816, 7
    %v818 = vsub.s32 0, %v817
    %v819 = vrot.slane %v701, %v818
    %v820 = vlaneseq
    %v821 = vshrl.u32 %v820, 7
    %v822 = vsub.s32 0, %v821
    %v823 = vrot.slane %v702, %v822
    %v824 = vlaneseq
    %v825 = vshrl.u32 %v824, 7
    %v826 = vsub.s32 0, %v825
    %v827 = vrot.slane %v703, %v826
    %v828 = vlaneseq
    %v829 = vshrl.u32 %v828, 7
    %v830 = vsub.s32 0, %v829
    %v831 = vrot.slane %v704, %v830
    %v832 = vlaneseq
    %v833 = vshrl.u32 %v832, 7
    %v834 = vsub.s32 0, %v833
    %v835 = vrot.slane %v705, %v834
    %v836 = vlaneseq
    %v837 = vshrl.u32 %v836, 7
    %v838 = vsub.s32 0, %v837
    %v839 = vrot.slane %v706, %v838
    %v840 = vlaneseq
    %v841 = vshrl.u32 %v840, 7
    %v842 = vsub.s32 0, %v841
    %v843 = vrot.slane %v707, %v842
    %844 = vrot.lane.b32.xlu0 %v815, 64
    %v845 = vpop.permute.xlu0 %844
    %846 = vrot.lane.b32.xlu0 %v819, 64
    %v847 = vpop.permute.xlu0 %846
    %848 = vrot.lane.b32.xlu0 %v823, 64
    %v849 = vpop.permute.xlu0 %848
    %850 = vrot.lane.b32.xlu0 %v827, 64
    %v851 = vpop.permute.xlu0 %850
    %852 = vrot.lane.b32.xlu0 %v831, 64
    %v853 = vpop.permute.xlu0 %852
    %854 = vrot.lane.b32.xlu0 %v835, 64
    %v855 = vpop.permute.xlu0 %854
    %856 = vrot.lane.b32.xlu0 %v839, 64
    %v857 = vpop.permute.xlu0 %856
    %858 = vrot.lane.b32.xlu0 %v843, 64
    %v859 = vpop.permute.xlu0 %858
    %v868 = vsel %vm788, %v845, 0.0
    %v869 = vsel %vm789, %v847, 0.0
    %v870 = vsel %vm790, %v849, 0.0
    %v871 = vsel %vm791, %v851, 0.0
    %v872 = vsel %vm792, %v853, 0.0
    %v873 = vsel %vm793, %v855, 0.0
    %v874 = vsel %vm794, %v857, 0.0
    %v875 = vsel %vm795, %v859, 0.0
    %vm876 = vcmask 253952
    %877 = vst.msk [vmem:[#allocation4] sm:$0x1] %vm876, %v796
    %878 = vst.msk [vmem:[#allocation4 + $0x8] sm:$0x1] %vm876, %v797
    %879 = vst.msk [vmem:[#allocation4 + $0x10] sm:$0x1] %vm876, %v798
    %880 = vst.msk [vmem:[#allocation4 + $0x18] sm:$0x1] %vm876, %v799
    %881 = vst.msk [vmem:[#allocation4 + $0x20] sm:$0x1] %vm876, %v800
    %882 = vst.msk [vmem:[#allocation4 + $0x28] sm:$0x1] %vm876, %v801
    %883 = vst.msk [vmem:[#allocation4 + $0x30] sm:$0x1] %vm876, %v802
    %884 = vst.msk [vmem:[#allocation4 + $0x38] sm:$0x1] %vm876, %v803
    %vm885 = vcmask 516352
    %886 = vst.msk [vmem:[#allocation4 + $0x7] sm:$0x1] %vm885, %v796
    %887 = vst.msk [vmem:[#allocation4 + $0xf] sm:$0x1] %vm885, %v797
    %888 = vst.msk [vmem:[#allocation4 + $0x17] sm:$0x1] %vm885, %v798
    %889 = vst.msk [vmem:[#allocation4 + $0x1f] sm:$0x1] %vm885, %v799
    %890 = vst.msk [vmem:[#allocation4 + $0x27] sm:$0x1] %vm885, %v800
    %891 = vst.msk [vmem:[#allocation4 + $0x2f] sm:$0x1] %vm885, %v801
    %892 = vst.msk [vmem:[#allocation4 + $0x37] sm:$0x1] %vm885, %v802
    %893 = vst.msk [vmem:[#allocation4 + $0x3f] sm:$0x1] %vm885, %v803
    %s894 = scalar_lea.vmem [#allocation2], 1
    %v895 = vld [vmem:[%s894] ss:$8 sm:$0x3]
    %s896 = scalar_lea.vmem [#allocation2], 17
    %v897 = vld [vmem:[%s896] ss:$8 sm:$0x3]
    %s898 = scalar_lea.vmem [#allocation2], 33
    %v899 = vld [vmem:[%s898] ss:$8 sm:$0x3]
    %s900 = scalar_lea.vmem [#allocation2], 49
    %v901 = vld [vmem:[%s900] ss:$8 sm:$0x3]
    %s902 = scalar_lea.vmem [#allocation2], 65
    %v903 = vld [vmem:[%s902] ss:$8 sm:$0x3]
    %s904 = scalar_lea.vmem [#allocation2], 81
    %v905 = vld [vmem:[%s904] ss:$8 sm:$0x3]
    %s906 = scalar_lea.vmem [#allocation2], 97
    %v907 = vld [vmem:[%s906] ss:$8 sm:$0x3]
    %s908 = scalar_lea.vmem [#allocation2], 113
    %v909 = vld [vmem:[%s908] ss:$8 sm:$0x3]
    %v918 = vrot.slane %v797, 7
    %vm919 = vcmask 1041409
    %v920 = vsel %vm919, %v918, %v796
    %v921 = vrot.slane %v798, 6
    %vm922 = vcmask 1042434
    %v923 = vsel %vm922, %v921, %v920
    %v924 = vrot.slane %v799, 5
    %vm925 = vcmask 1043459
    %v926 = vsel %vm925, %v924, %v923
    %v927 = vrot.slane %v800, 4
    %vm928 = vcmask 1044484
    %v929 = vsel %vm928, %v927, %v926
    %v930 = vrot.slane %v801, 3
    %vm931 = vcmask 1045509
    %v932 = vsel %vm931, %v930, %v929
    %v933 = vrot.slane %v802, 2
    %vm934 = vcmask 1046534
    %v935 = vsel %vm934, %v933, %v932
    %v936 = vrot.slane %v803, 1
    %vm937 = vcmask 1047559
    %v938 = vsel %vm937, %v936, %v935
    %v939 = vsel %vm97, %v938, 0
    %941 = vmatprep.subr.mxu0 0.0
    %942 = vmatpush1.msra.mxu0 0.0
    %943 = vmatprep.subr.mxu0 0.0
    %944 = vmatpush1.msra.mxu0 0.0
    %945 = vmatprep.subr.mxu0 0.0
    %946 = vmatpush1.msra.mxu0 0.0
    %947 = vmatprep.subr.mxu0 0.0
    %948 = vmatpush1.msra.mxu0 0.0
    %949 = vmatprep.subr.mxu0 0.0
    %950 = vmatpush1.msra.mxu0 0.0
    %951 = vmatprep.subr.mxu0 0.0
    %952 = vmatpush1.msra.mxu0 0.0
    %953 = vmatprep.subr.mxu0 0.0
    %954 = vmatpush1.msra.mxu0 0.0
    %955 = vmatprep.subr.mxu0 0.0
    %956 = vmatpush1.msra.mxu0 0.0
    %957 = vmatprep.subr.mxu0 %v398
    %958 = vmatpush1.msra.mxu0 %v397
    %959 = vmatprep.subr.mxu0 %v396
    %960 = vmatpush1.msra.mxu0 %v395
    %961 = vmatprep.subr.mxu0 %v394
    %962 = vmatpush1.msra.mxu0 %v393
    %963 = vmatprep.subr.mxu0 %v392
    %964 = vmatpush1.msra.mxu0 %v391
    %965 = vmatprep.subr.mxu0 %v390
    %966 = vmatpush1.msra.mxu0 %v389
    %967 = vmatprep.subr.mxu0 %v388
    %968 = vmatpush1.msra.mxu0 %v387
    %969 = vmatprep.subr.mxu0 %v386
    %970 = vmatpush1.msra.mxu0 %v385
    %971 = vmatprep.subr.mxu0 %v384
    %972 = vmatpush1.msra.mxu0 %v383
    %973 = vmatprep.subr.mxu0 0.0
    %974 = vmatpush2.msra.mxu0 0.0
    %975 = vmatprep.subr.mxu0 0.0
    %976 = vmatpush2.msra.mxu0 0.0
    %977 = vmatprep.subr.mxu0 0.0
    %978 = vmatpush2.msra.mxu0 0.0
    %979 = vmatprep.subr.mxu0 0.0
    %980 = vmatpush2.msra.mxu0 0.0
    %981 = vmatprep.subr.mxu0 0.0
    %982 = vmatpush2.msra.mxu0 0.0
    %983 = vmatprep.subr.mxu0 0.0
    %984 = vmatpush2.msra.mxu0 0.0
    %985 = vmatprep.subr.mxu0 0.0
    %986 = vmatpush2.msra.mxu0 0.0
    %987 = vmatprep.subr.mxu0 0.0
    %988 = vmatpush2.msra.mxu0 0.0
    %989 = vmatprep.subr.mxu0 0.0
    %990 = vmatpush2.msra.mxu0 0.0
    %991 = vmatprep.subr.mxu0 0.0
    %992 = vmatpush2.msra.mxu0 0.0
    %993 = vmatprep.subr.mxu0 0.0
    %994 = vmatpush2.msra.mxu0 0.0
    %995 = vmatprep.subr.mxu0 0.0
    %996 = vmatpush2.msra.mxu0 0.0
    %997 = vmatprep.subr.mxu0 0.0
    %998 = vmatpush2.msra.mxu0 0.0
    %999 = vmatprep.subr.mxu0 0.0
    %1000 = vmatpush2.msra.mxu0 0.0
    %1001 = vmatprep.subr.mxu0 0.0
    %1002 = vmatpush2.msra.mxu0 0.0
    %1003 = vmatprep.subr.mxu0 0.0
    %1004 = vmatpush2.msra.mxu0 0.0
    %1005 = vmatprep.mubr.f32.mxu0 0.0
    %1006 = vmatmul.mubr.f32.gmra.mxu0 %v939
    %v1007 = vpop.f32.mrf.mxu0
    %v1008 = vadd.f32 0.0, %v1007
    %v1009 = vpop.f32.mrf.mxu0
    %v1010 = vadd.f32 0.0, %v1009
    %1011 = vdwg.mxu0
    %v1014 = vcombine.low %v1008, %v1010
    %v1015 = vcombine.high %v1008, %v1010
    %v1017 = vunpack.c.l.s4 1966171168
    %v1018 = vunpack.c.0.s8 %v1017
    %v1019 = vlaneseq
    %v1020 = vshrl.u32 %v1019, 7
    %v1021 = vsub.s32 %v1018, %v1020
    %v1022 = vrot.slane %v1014, %v1021
    %v1024 = vunpack.c.l.s4 1966171168
    %v1025 = vunpack.c.0.s8 %v1024
    %v1026 = vlaneseq
    %v1027 = vshrl.u32 %v1026, 7
    %v1028 = vsub.s32 %v1025, %v1027
    %v1029 = vrot.slane %v1015, %v1028
    %v1030 = vcombine.high %v1022, %v1022
    %v1031 = vcombine.high %v1029, %v1029
    %v1033 = vunpack.c.l.s4 1966171168
    %v1034 = vunpack.c.0.s8 %v1033
    %v1035 = vlaneseq
    %v1036 = vshrl.u32 %v1035, 7
    %v1037 = vsub.s32 %v1034, %v1036
    %v1038 = vrot.slane %v1022, %v1037
    %v1040 = vunpack.c.l.s4 1966171168
    %v1041 = vunpack.c.0.s8 %v1040
    %v1042 = vlaneseq
    %v1043 = vshrl.u32 %v1042, 7
    %v1044 = vsub.s32 %v1041, %v1043
    %v1045 = vrot.slane %v1029, %v1044
    %v1047 = vunpack.c.l.s4 1966171168
    %v1048 = vunpack.c.0.s8 %v1047
    %v1049 = vlaneseq
    %v1050 = vshrl.u32 %v1049, 7
    %v1051 = vsub.s32 %v1048, %v1050
    %v1052 = vrot.slane %v1030, %v1051
    %v1054 = vunpack.c.l.s4 1966171168
    %v1055 = vunpack.c.0.s8 %v1054
    %v1056 = vlaneseq
    %v1057 = vshrl.u32 %v1056, 7
    %v1058 = vsub.s32 %v1055, %v1057
    %v1059 = vrot.slane %v1031, %v1058
    %v1060 = vcombine.high %v1038, %v1038
    %v1061 = vcombine.high %v1045, %v1045
    %v1062 = vcombine.high %v1052, %v1052
    %v1063 = vcombine.high %v1059, %v1059
    %v1072 = vadd.f32 %v895, %v1038
    %v1073 = vadd.f32 %v897, %v1052
    %v1074 = vadd.f32 %v899, %v1060
    %v1075 = vadd.f32 %v901, %v1062
    %v1076 = vadd.f32 %v903, %v1045
    %v1077 = vadd.f32 %v905, %v1059
    %v1078 = vadd.f32 %v907, %v1061
    %v1079 = vadd.f32 %v909, %v1063
    %v1080 = vxor.u32 %v1072, 2147483648
    %v1081 = vxor.u32 %v1073, 2147483648
    %v1082 = vxor.u32 %v1074, 2147483648
    %v1083 = vxor.u32 %v1075, 2147483648
    %v1084 = vxor.u32 %v1076, 2147483648
    %v1085 = vxor.u32 %v1077, 2147483648
    %v1086 = vxor.u32 %v1078, 2147483648
    %v1087 = vxor.u32 %v1079, 2147483648
    %v1088 = vmul.f32 %v1080, 1.442695
    %v1089 = vpow.pop %v1088
    %v1090 = vmul.f32 %v1081, 1.442695
    %v1091 = vpow.pop %v1090
    %v1092 = vmul.f32 %v1082, 1.442695
    %v1093 = vpow.pop %v1092
    %v1094 = vmul.f32 %v1083, 1.442695
    %v1095 = vpow.pop %v1094
    %v1096 = vmul.f32 %v1084, 1.442695
    %v1097 = vpow.pop %v1096
    %v1098 = vmul.f32 %v1085, 1.442695
    %v1099 = vpow.pop %v1098
    %v1100 = vmul.f32 %v1086, 1.442695
    %v1101 = vpow.pop %v1100
    %v1102 = vmul.f32 %v1087, 1.442695
    %v1103 = vpow.pop %v1102
    %v1104 = vadd.f32 %v1089, 1.0
    %v1105 = vadd.f32 %v1091, 1.0
    %v1106 = vadd.f32 %v1093, 1.0
    %v1107 = vadd.f32 %v1095, 1.0
    %v1108 = vadd.f32 %v1097, 1.0
    %v1109 = vadd.f32 %v1099, 1.0
    %v1110 = vadd.f32 %v1101, 1.0
    %v1111 = vadd.f32 %v1103, 1.0
    %v1112 = vrcp.pop %v1104
    %v1113 = vmul.f32 1.0, %v1112
    %v1114 = vrcp.pop %v1105
    %v1115 = vmul.f32 1.0, %v1114
    %v1116 = vrcp.pop %v1106
    %v1117 = vmul.f32 1.0, %v1116
    %v1118 = vrcp.pop %v1107
    %v1119 = vmul.f32 1.0, %v1118
    %v1120 = vrcp.pop %v1108
    %v1121 = vmul.f32 1.0, %v1120
    %v1122 = vrcp.pop %v1109
    %v1123 = vmul.f32 1.0, %v1122
    %v1124 = vrcp.pop %v1110
    %v1125 = vmul.f32 1.0, %v1124
    %v1126 = vrcp.pop %v1111
    %v1127 = vmul.f32 1.0, %v1126
    %1136 = vrot.lane.b32.xlu0 %v1072, 64
    %v1137 = vpop.permute.xlu0 %1136
    %1138 = vrot.lane.b32.xlu0 %v1073, 64
    %v1139 = vpop.permute.xlu0 %1138
    %1140 = vrot.lane.b32.xlu0 %v1074, 64
    %v1141 = vpop.permute.xlu0 %1140
    %1142 = vrot.lane.b32.xlu0 %v1075, 64
    %v1143 = vpop.permute.xlu0 %1142
    %1144 = vrot.lane.b32.xlu0 %v1076, 64
    %v1145 = vpop.permute.xlu0 %1144
    %1146 = vrot.lane.b32.xlu0 %v1077, 64
    %v1147 = vpop.permute.xlu0 %1146
    %1148 = vrot.lane.b32.xlu0 %v1078, 64
    %v1149 = vpop.permute.xlu0 %1148
    %1150 = vrot.lane.b32.xlu0 %v1079, 64
    %v1151 = vpop.permute.xlu0 %1150
    %v1152 = vrot.slane %v1137, 1
    %v1153 = vrot.slane %v1139, 1
    %v1154 = vrot.slane %v1141, 1
    %v1155 = vrot.slane %v1143, 1
    %v1156 = vrot.slane %v1145, 1
    %v1157 = vrot.slane %v1147, 1
    %v1158 = vrot.slane %v1149, 1
    %v1159 = vrot.slane %v1151, 1
    %v1168 = vtanh.pop %v1152
    %v1169 = vtanh.pop %v1153
    %v1170 = vtanh.pop %v1154
    %v1171 = vtanh.pop %v1155
    %v1172 = vtanh.pop %v1156
    %v1173 = vtanh.pop %v1157
    %v1174 = vtanh.pop %v1158
    %v1175 = vtanh.pop %v1159
    %v1185 = vunpack.c.l.s4 1966171168
    %v1186 = vunpack.c.0.s8 %v1185
    %v1187 = vlaneseq
    %v1188 = vshrl.u32 %v1187, 7
    %v1189 = vsub.s32 %v1186, %v1188
    %v1190 = vrot.slane %v868, %v1189
    %v1192 = vunpack.c.l.s4 1966171168
    %v1193 = vunpack.c.0.s8 %v1192
    %v1194 = vlaneseq
    %v1195 = vshrl.u32 %v1194, 7
    %v1196 = vsub.s32 %v1193, %v1195
    %v1197 = vrot.slane %v1190, %v1196
    %v1199 = vunpack.c.l.s4 1966171168
    %v1200 = vunpack.c.0.s8 %v1199
    %v1201 = vlaneseq
    %v1202 = vshrl.u32 %v1201, 7
    %v1203 = vsub.s32 %v1200, %v1202
    %v1204 = vrot.slane %v869, %v1203
    %v1206 = vunpack.c.l.s4 1966171168
    %v1207 = vunpack.c.0.s8 %v1206
    %v1208 = vlaneseq
    %v1209 = vshrl.u32 %v1208, 7
    %v1210 = vsub.s32 %v1207, %v1209
    %v1211 = vrot.slane %v1204, %v1210
    %v1213 = vunpack.c.l.s4 1966171168
    %v1214 = vunpack.c.0.s8 %v1213
    %v1215 = vlaneseq
    %v1216 = vshrl.u32 %v1215, 7
    %v1217 = vsub.s32 %v1214, %v1216
    %v1218 = vrot.slane %v870, %v1217
    %v1220 = vunpack.c.l.s4 1966171168
    %v1221 = vunpack.c.0.s8 %v1220
    %v1222 = vlaneseq
    %v1223 = vshrl.u32 %v1222, 7
    %v1224 = vsub.s32 %v1221, %v1223
    %v1225 = vrot.slane %v1218, %v1224
    %v1227 = vunpack.c.l.s4 1966171168
    %v1228 = vunpack.c.0.s8 %v1227
    %v1229 = vlaneseq
    %v1230 = vshrl.u32 %v1229, 7
    %v1231 = vsub.s32 %v1228, %v1230
    %v1232 = vrot.slane %v871, %v1231
    %v1234 = vunpack.c.l.s4 1966171168
    %v1235 = vunpack.c.0.s8 %v1234
    %v1236 = vlaneseq
    %v1237 = vshrl.u32 %v1236, 7
    %v1238 = vsub.s32 %v1235, %v1237
    %v1239 = vrot.slane %v1232, %v1238
    %v1241 = vunpack.c.l.s4 1966171168
    %v1242 = vunpack.c.0.s8 %v1241
    %v1243 = vlaneseq
    %v1244 = vshrl.u32 %v1243, 7
    %v1245 = vsub.s32 %v1242, %v1244
    %v1246 = vrot.slane %v872, %v1245
    %v1248 = vunpack.c.l.s4 1966171168
    %v1249 = vunpack.c.0.s8 %v1248
    %v1250 = vlaneseq
    %v1251 = vshrl.u32 %v1250, 7
    %v1252 = vsub.s32 %v1249, %v1251
    %v1253 = vrot.slane %v1246, %v1252
    %v1255 = vunpack.c.l.s4 1966171168
    %v1256 = vunpack.c.0.s8 %v1255
    %v1257 = vlaneseq
    %v1258 = vshrl.u32 %v1257, 7
    %v1259 = vsub.s32 %v1256, %v1258
    %v1260 = vrot.slane %v873, %v1259
    %v1262 = vunpack.c.l.s4 1966171168
    %v1263 = vunpack.c.0.s8 %v1262
    %v1264 = vlaneseq
    %v1265 = vshrl.u32 %v1264, 7
    %v1266 = vsub.s32 %v1263, %v1265
    %v1267 = vrot.slane %v1260, %v1266
    %v1269 = vunpack.c.l.s4 1966171168
    %v1270 = vunpack.c.0.s8 %v1269
    %v1271 = vlaneseq
    %v1272 = vshrl.u32 %v1271, 7
    %v1273 = vsub.s32 %v1270, %v1272
    %v1274 = vrot.slane %v874, %v1273
    %v1276 = vunpack.c.l.s4 1966171168
    %v1277 = vunpack.c.0.s8 %v1276
    %v1278 = vlaneseq
    %v1279 = vshrl.u32 %v1278, 7
    %v1280 = vsub.s32 %v1277, %v1279
    %v1281 = vrot.slane %v1274, %v1280
    %v1283 = vunpack.c.l.s4 1966171168
    %v1284 = vunpack.c.0.s8 %v1283
    %v1285 = vlaneseq
    %v1286 = vshrl.u32 %v1285, 7
    %v1287 = vsub.s32 %v1284, %v1286
    %v1288 = vrot.slane %v875, %v1287
    %v1290 = vunpack.c.l.s4 1966171168
    %v1291 = vunpack.c.0.s8 %v1290
    %v1292 = vlaneseq
    %v1293 = vshrl.u32 %v1292, 7
    %v1294 = vsub.s32 %v1291, %v1293
    %v1295 = vrot.slane %v1288, %v1294
    %1296 = vrot.lane.b32.xlu0 %v1197, 64
    %v1297 = vpop.permute.xlu0 %1296
    %1298 = vrot.lane.b32.xlu0 %v1211, 64
    %v1299 = vpop.permute.xlu0 %1298
    %1300 = vrot.lane.b32.xlu0 %v1225, 64
    %v1301 = vpop.permute.xlu0 %1300
    %1302 = vrot.lane.b32.xlu0 %v1239, 64
    %v1303 = vpop.permute.xlu0 %1302
    %1304 = vrot.lane.b32.xlu0 %v1253, 64
    %v1305 = vpop.permute.xlu0 %1304
    %1306 = vrot.lane.b32.xlu0 %v1267, 64
    %v1307 = vpop.permute.xlu0 %1306
    %1308 = vrot.lane.b32.xlu0 %v1281, 64
    %v1309 = vpop.permute.xlu0 %1308
    %1310 = vrot.lane.b32.xlu0 %v1295, 64
    %v1311 = vpop.permute.xlu0 %1310
    %v1320 = vmul.f32 %v1113, %v1297
    %v1321 = vmul.f32 %v1115, %v1299
    %v1322 = vmul.f32 %v1117, %v1301
    %v1323 = vmul.f32 %v1119, %v1303
    %v1324 = vmul.f32 %v1121, %v1305
    %v1325 = vmul.f32 %v1123, %v1307
    %v1326 = vmul.f32 %v1125, %v1309
    %v1327 = vmul.f32 %v1127, %v1311
    %v1328 = vmul.f32 %v1113, %v1168
    %v1329 = vmul.f32 %v1115, %v1169
    %v1330 = vmul.f32 %v1117, %v1170
    %v1331 = vmul.f32 %v1119, %v1171
    %v1332 = vmul.f32 %v1121, %v1172
    %v1333 = vmul.f32 %v1123, %v1173
    %v1334 = vmul.f32 %v1125, %v1174
    %v1335 = vmul.f32 %v1127, %v1175
    %1344 = vrot.lane.b32.xlu0 %v1328, 64
    %v1345 = vpop.permute.xlu0 %1344
    %1346 = vrot.lane.b32.xlu0 %v1329, 64
    %v1347 = vpop.permute.xlu0 %1346
    %1348 = vrot.lane.b32.xlu0 %v1330, 64
    %v1349 = vpop.permute.xlu0 %1348
    %1350 = vrot.lane.b32.xlu0 %v1331, 64
    %v1351 = vpop.permute.xlu0 %1350
    %1352 = vrot.lane.b32.xlu0 %v1332, 64
    %v1353 = vpop.permute.xlu0 %1352
    %1354 = vrot.lane.b32.xlu0 %v1333, 64
    %v1355 = vpop.permute.xlu0 %1354
    %1356 = vrot.lane.b32.xlu0 %v1334, 64
    %v1357 = vpop.permute.xlu0 %1356
    %1358 = vrot.lane.b32.xlu0 %v1335, 64
    %v1359 = vpop.permute.xlu0 %1358
    %v1368 = vadd.f32 %v1320, %v1345
    %v1369 = vadd.f32 %v1321, %v1347
    %v1370 = vadd.f32 %v1322, %v1349
    %v1371 = vadd.f32 %v1323, %v1351
    %v1372 = vadd.f32 %v1324, %v1353
    %v1373 = vadd.f32 %v1325, %v1355
    %v1374 = vadd.f32 %v1326, %v1357
    %v1375 = vadd.f32 %v1327, %v1359
    %v1376 = vtanh.pop %v1368
    %v1377 = vtanh.pop %v1369
    %v1378 = vtanh.pop %v1370
    %v1379 = vtanh.pop %v1371
    %v1380 = vtanh.pop %v1372
    %v1381 = vtanh.pop %v1373
    %v1382 = vtanh.pop %v1374
    %v1383 = vtanh.pop %v1375
    %v1392 = vrot.slane %v1113, 1
    %v1393 = vrot.slane %v1115, 1
    %v1394 = vrot.slane %v1117, 1
    %v1395 = vrot.slane %v1119, 1
    %v1396 = vrot.slane %v1121, 1
    %v1397 = vrot.slane %v1123, 1
    %v1398 = vrot.slane %v1125, 1
    %v1399 = vrot.slane %v1127, 1
    %1416 = vrot.lane.b32.xlu0 %v1376, 64
    %v1417 = vpop.permute.xlu0 %1416
    %1418 = vrot.lane.b32.xlu0 %v1377, 64
    %v1419 = vpop.permute.xlu0 %1418
    %1420 = vrot.lane.b32.xlu0 %v1378, 64
    %v1421 = vpop.permute.xlu0 %1420
    %1422 = vrot.lane.b32.xlu0 %v1379, 64
    %v1423 = vpop.permute.xlu0 %1422
    %1424 = vrot.lane.b32.xlu0 %v1380, 64
    %v1425 = vpop.permute.xlu0 %1424
    %1426 = vrot.lane.b32.xlu0 %v1381, 64
    %v1427 = vpop.permute.xlu0 %1426
    %1428 = vrot.lane.b32.xlu0 %v1382, 64
    %v1429 = vpop.permute.xlu0 %1428
    %1430 = vrot.lane.b32.xlu0 %v1383, 64
    %v1431 = vpop.permute.xlu0 %1430
    %v1440 = vmul.f32 %v1392, %v1417
    %v1441 = vmul.f32 %v1393, %v1419
    %v1442 = vmul.f32 %v1394, %v1421
    %v1443 = vmul.f32 %v1395, %v1423
    %v1444 = vmul.f32 %v1396, %v1425
    %v1445 = vmul.f32 %v1397, %v1427
    %v1446 = vmul.f32 %v1398, %v1429
    %v1447 = vmul.f32 %v1399, %v1431
    %v1448 = vld [vmem:[#allocation3 + $0x1] sm:$0x1]
    %v1449 = vld [vmem:[#allocation3 + $0x9] sm:$0x1]
    %v1450 = vld [vmem:[#allocation3 + $0x11] sm:$0x1]
    %v1451 = vld [vmem:[#allocation3 + $0x19] sm:$0x1]
    %v1452 = vld [vmem:[#allocation3 + $0x21] sm:$0x1]
    %v1453 = vld [vmem:[#allocation3 + $0x29] sm:$0x1]
    %v1454 = vld [vmem:[#allocation3 + $0x31] sm:$0x1]
    %v1455 = vld [vmem:[#allocation3 + $0x39] sm:$0x1]
    %vm1456 = vcmp.gt.f32.partialorder %v1448, 0.0
    %vm1457 = vcmp.gt.f32.partialorder %v1449, 0.0
    %vm1458 = vcmp.gt.f32.partialorder %v1450, 0.0
    %vm1459 = vcmp.gt.f32.partialorder %v1451, 0.0
    %vm1460 = vcmp.gt.f32.partialorder %v1452, 0.0
    %vm1461 = vcmp.gt.f32.partialorder %v1453, 0.0
    %vm1462 = vcmp.gt.f32.partialorder %v1454, 0.0
    %vm1463 = vcmp.gt.f32.partialorder %v1455, 0.0
    %v1464 = vsel %vm1456, %v1440, %v796
    %v1465 = vsel %vm1457, %v1441, %v797
    %v1466 = vsel %vm1458, %v1442, %v798
    %v1467 = vsel %vm1459, %v1443, %v799
    %v1468 = vsel %vm1460, %v1444, %v800
    %v1469 = vsel %vm1461, %v1445, %v801
    %v1470 = vsel %vm1462, %v1446, %v802
    %v1471 = vsel %vm1463, %v1447, %v803
    %v1480 = vlaneseq
    %v1481 = vshrl.u32 %v1480, 7
    %v1482 = vsub.s32 0, %v1481
    %v1483 = vrot.slane %v1368, %v1482
    %v1484 = vlaneseq
    %v1485 = vshrl.u32 %v1484, 7
    %v1486 = vsub.s32 0, %v1485
    %v1487 = vrot.slane %v1369, %v1486
    %v1488 = vlaneseq
    %v1489 = vshrl.u32 %v1488, 7
    %v1490 = vsub.s32 0, %v1489
    %v1491 = vrot.slane %v1370, %v1490
    %v1492 = vlaneseq
    %v1493 = vshrl.u32 %v1492, 7
    %v1494 = vsub.s32 0, %v1493
    %v1495 = vrot.slane %v1371, %v1494
    %v1496 = vlaneseq
    %v1497 = vshrl.u32 %v1496, 7
    %v1498 = vsub.s32 0, %v1497
    %v1499 = vrot.slane %v1372, %v1498
    %v1500 = vlaneseq
    %v1501 = vshrl.u32 %v1500, 7
    %v1502 = vsub.s32 0, %v1501
    %v1503 = vrot.slane %v1373, %v1502
    %v1504 = vlaneseq
    %v1505 = vshrl.u32 %v1504, 7
    %v1506 = vsub.s32 0, %v1505
    %v1507 = vrot.slane %v1374, %v1506
    %v1508 = vlaneseq
    %v1509 = vshrl.u32 %v1508, 7
    %v1510 = vsub.s32 0, %v1509
    %v1511 = vrot.slane %v1375, %v1510
    %1512 = vrot.lane.b32.xlu0 %v1483, 64
    %v1513 = vpop.permute.xlu0 %1512
    %1514 = vrot.lane.b32.xlu0 %v1487, 64
    %v1515 = vpop.permute.xlu0 %1514
    %1516 = vrot.lane.b32.xlu0 %v1491, 64
    %v1517 = vpop.permute.xlu0 %1516
    %1518 = vrot.lane.b32.xlu0 %v1495, 64
    %v1519 = vpop.permute.xlu0 %1518
    %1520 = vrot.lane.b32.xlu0 %v1499, 64
    %v1521 = vpop.permute.xlu0 %1520
    %1522 = vrot.lane.b32.xlu0 %v1503, 64
    %v1523 = vpop.permute.xlu0 %1522
    %1524 = vrot.lane.b32.xlu0 %v1507, 64
    %v1525 = vpop.permute.xlu0 %1524
    %1526 = vrot.lane.b32.xlu0 %v1511, 64
    %v1527 = vpop.permute.xlu0 %1526
    %v1536 = vsel %vm1456, %v1513, %v868
    %v1537 = vsel %vm1457, %v1515, %v869
    %v1538 = vsel %vm1458, %v1517, %v870
    %v1539 = vsel %vm1459, %v1519, %v871
    %v1540 = vsel %vm1460, %v1521, %v872
    %v1541 = vsel %vm1461, %v1523, %v873
    %v1542 = vsel %vm1462, %v1525, %v874
    %v1543 = vsel %vm1463, %v1527, %v875
    %1544 = vst.msk [vmem:[#allocation4 + $0x1] sm:$0x1] %vm876, %v1464
    %1545 = vst.msk [vmem:[#allocation4 + $0x9] sm:$0x1] %vm876, %v1465
    %1546 = vst.msk [vmem:[#allocation4 + $0x11] sm:$0x1] %vm876, %v1466
    %1547 = vst.msk [vmem:[#allocation4 + $0x19] sm:$0x1] %vm876, %v1467
    %1548 = vst.msk [vmem:[#allocation4 + $0x21] sm:$0x1] %vm876, %v1468
    %1549 = vst.msk [vmem:[#allocation4 + $0x29] sm:$0x1] %vm876, %v1469
    %1550 = vst.msk [vmem:[#allocation4 + $0x31] sm:$0x1] %vm876, %v1470
    %1551 = vst.msk [vmem:[#allocation4 + $0x39] sm:$0x1] %vm876, %v1471
    %1552 = vst.msk [vmem:[#allocation4 + $0x6] sm:$0x1] %vm885, %v1464
    %1553 = vst.msk [vmem:[#allocation4 + $0xe] sm:$0x1] %vm885, %v1465
    %1554 = vst.msk [vmem:[#allocation4 + $0x16] sm:$0x1] %vm885, %v1466
    %1555 = vst.msk [vmem:[#allocation4 + $0x1e] sm:$0x1] %vm885, %v1467
    %1556 = vst.msk [vmem:[#allocation4 + $0x26] sm:$0x1] %vm885, %v1468
    %1557 = vst.msk [vmem:[#allocation4 + $0x2e] sm:$0x1] %vm885, %v1469
    %1558 = vst.msk [vmem:[#allocation4 + $0x36] sm:$0x1] %vm885, %v1470
    %1559 = vst.msk [vmem:[#allocation4 + $0x3e] sm:$0x1] %vm885, %v1471
    %s1560 = scalar_lea.vmem [#allocation2], 2
    %v1561 = vld [vmem:[%s1560] ss:$8 sm:$0x3]
    %s1562 = scalar_lea.vmem [#allocation2], 18
    %v1563 = vld [vmem:[%s1562] ss:$8 sm:$0x3]
    %s1564 = scalar_lea.vmem [#allocation2], 34
    %v1565 = vld [vmem:[%s1564] ss:$8 sm:$0x3]
    %s1566 = scalar_lea.vmem [#allocation2], 50
    %v1567 = vld [vmem:[%s1566] ss:$8 sm:$0x3]
    %s1568 = scalar_lea.vmem [#allocation2], 66
    %v1569 = vld [vmem:[%s1568] ss:$8 sm:$0x3]
    %s1570 = scalar_lea.vmem [#allocation2], 82
    %v1571 = vld [vmem:[%s1570] ss:$8 sm:$0x3]
    %s1572 = scalar_lea.vmem [#allocation2], 98
    %v1573 = vld [vmem:[%s1572] ss:$8 sm:$0x3]
    %s1574 = scalar_lea.vmem [#allocation2], 114
    %v1575 = vld [vmem:[%s1574] ss:$8 sm:$0x3]
    %v1584 = vrot.slane %v1465, 7
    %v1585 = vsel %vm919, %v1584, %v1464
    %v1586 = vrot.slane %v1466, 6
    %v1587 = vsel %vm922, %v1586, %v1585
    %v1588 = vrot.slane %v1467, 5
    %v1589 = vsel %vm925, %v1588, %v1587
    %v1590 = vrot.slane %v1468, 4
    %v1591 = vsel %vm928, %v1590, %v1589
    %v1592 = vrot.slane %v1469, 3
    %v1593 = vsel %vm931, %v1592, %v1591
    %v1594 = vrot.slane %v1470, 2
    %v1595 = vsel %vm934, %v1594, %v1593
    %v1596 = vrot.slane %v1471, 1
    %v1597 = vsel %vm937, %v1596, %v1595
    %v1598 = vsel %vm97, %v1597, 0
    %1600 = vmatprep.subr.mxu0 0.0
    %1601 = vmatpush1.msra.mxu0 0.0
    %1602 = vmatprep.subr.mxu0 0.0
    %1603 = vmatpush1.msra.mxu0 0.0
    %1604 = vmatprep.subr.mxu0 0.0
    %1605 = vmatpush1.msra.mxu0 0.0
    %1606 = vmatprep.subr.mxu0 0.0
    %1607 = vmatpush1.msra.mxu0 0.0
    %1608 = vmatprep.subr.mxu0 0.0
    %1609 = vmatpush1.msra.mxu0 0.0
    %1610 = vmatprep.subr.mxu0 0.0
    %1611 = vmatpush1.msra.mxu0 0.0
    %1612 = vmatprep.subr.mxu0 0.0
    %1613 = vmatpush1.msra.mxu0 0.0
    %1614 = vmatprep.subr.mxu0 0.0
    %1615 = vmatpush1.msra.mxu0 0.0
    %1616 = vmatprep.subr.mxu0 %v398
    %1617 = vmatpush1.msra.mxu0 %v397
    %1618 = vmatprep.subr.mxu0 %v396
    %1619 = vmatpush1.msra.mxu0 %v395
    %1620 = vmatprep.subr.mxu0 %v394
    %1621 = vmatpush1.msra.mxu0 %v393
    %1622 = vmatprep.subr.mxu0 %v392
    %1623 = vmatpush1.msra.mxu0 %v391
    %1624 = vmatprep.subr.mxu0 %v390
    %1625 = vmatpush1.msra.mxu0 %v389
    %1626 = vmatprep.subr.mxu0 %v388
    %1627 = vmatpush1.msra.mxu0 %v387
    %1628 = vmatprep.subr.mxu0 %v386
    %1629 = vmatpush1.msra.mxu0 %v385
    %1630 = vmatprep.subr.mxu0 %v384
    %1631 = vmatpush1.msra.mxu0 %v383
    %1632 = vmatprep.subr.mxu0 0.0
    %1633 = vmatpush2.msra.mxu0 0.0
    %1634 = vmatprep.subr.mxu0 0.0
    %1635 = vmatpush2.msra.mxu0 0.0
    %1636 = vmatprep.subr.mxu0 0.0
    %1637 = vmatpush2.msra.mxu0 0.0
    %1638 = vmatprep.subr.mxu0 0.0
    %1639 = vmatpush2.msra.mxu0 0.0
    %1640 = vmatprep.subr.mxu0 0.0
    %1641 = vmatpush2.msra.mxu0 0.0
    %1642 = vmatprep.subr.mxu0 0.0
    %1643 = vmatpush2.msra.mxu0 0.0
    %1644 = vmatprep.subr.mxu0 0.0
    %1645 = vmatpush2.msra.mxu0 0.0
    %1646 = vmatprep.subr.mxu0 0.0
    %1647 = vmatpush2.msra.mxu0 0.0
    %1648 = vmatprep.subr.mxu0 0.0
    %1649 = vmatpush2.msra.mxu0 0.0
    %1650 = vmatprep.subr.mxu0 0.0
    %1651 = vmatpush2.msra.mxu0 0.0
    %1652 = vmatprep.subr.mxu0 0.0
    %1653 = vmatpush2.msra.mxu0 0.0
    %1654 = vmatprep.subr.mxu0 0.0
    %1655 = vmatpush2.msra.mxu0 0.0
    %1656 = vmatprep.subr.mxu0 0.0
    %1657 = vmatpush2.msra.mxu0 0.0
    %1658 = vmatprep.subr.mxu0 0.0
    %1659 = vmatpush2.msra.mxu0 0.0
    %1660 = vmatprep.subr.mxu0 0.0
    %1661 = vmatpush2.msra.mxu0 0.0
    %1662 = vmatprep.subr.mxu0 0.0
    %1663 = vmatpush2.msra.mxu0 0.0
    %1664 = vmatprep.mubr.f32.mxu0 0.0
    %1665 = vmatmul.mubr.f32.gmra.mxu0 %v1598
    %v1666 = vpop.f32.mrf.mxu0
    %v1667 = vadd.f32 0.0, %v1666
    %v1668 = vpop.f32.mrf.mxu0
    %v1669 = vadd.f32 0.0, %v1668
    %1670 = vdwg.mxu0
    %v1673 = vcombine.low %v1667, %v1669
    %v1674 = vcombine.high %v1667, %v1669
    %v1676 = vunpack.c.l.s4 1966171168
    %v1677 = vunpack.c.0.s8 %v1676
    %v1678 = vlaneseq
    %v1679 = vshrl.u32 %v1678, 7
    %v1680 = vsub.s32 %v1677, %v1679
    %v1681 = vrot.slane %v1673, %v1680
    %v1683 = vunpack.c.l.s4 1966171168
    %v1684 = vunpack.c.0.s8 %v1683
    %v1685 = vlaneseq
    %v1686 = vshrl.u32 %v1685, 7
    %v1687 = vsub.s32 %v1684, %v1686
    %v1688 = vrot.slane %v1674, %v1687
    %v1689 = vcombine.high %v1681, %v1681
    %v1690 = vcombine.high %v1688, %v1688
    %v1692 = vunpack.c.l.s4 1966171168
    %v1693 = vunpack.c.0.s8 %v1692
    %v1694 = vlaneseq
    %v1695 = vshrl.u32 %v1694, 7
    %v1696 = vsub.s32 %v1693, %v1695
    %v1697 = vrot.slane %v1681, %v1696
    %v1699 = vunpack.c.l.s4 1966171168
    %v1700 = vunpack.c.0.s8 %v1699
    %v1701 = vlaneseq
    %v1702 = vshrl.u32 %v1701, 7
    %v1703 = vsub.s32 %v1700, %v1702
    %v1704 = vrot.slane %v1688, %v1703
    %v1706 = vunpack.c.l.s4 1966171168
    %v1707 = vunpack.c.0.s8 %v1706
    %v1708 = vlaneseq
    %v1709 = vshrl.u32 %v1708, 7
    %v1710 = vsub.s32 %v1707, %v1709
    %v1711 = vrot.slane %v1689, %v1710
    %v1713 = vunpack.c.l.s4 1966171168
    %v1714 = vunpack.c.0.s8 %v1713
    %v1715 = vlaneseq
    %v1716 = vshrl.u32 %v1715, 7
    %v1717 = vsub.s32 %v1714, %v1716
    %v1718 = vrot.slane %v1690, %v1717
    %v1719 = vcombine.high %v1697, %v1697
    %v1720 = vcombine.high %v1704, %v1704
    %v1721 = vcombine.high %v1711, %v1711
    %v1722 = vcombine.high %v1718, %v1718
    %v1731 = vadd.f32 %v1561, %v1697
    %v1732 = vadd.f32 %v1563, %v1711
    %v1733 = vadd.f32 %v1565, %v1719
    %v1734 = vadd.f32 %v1567, %v1721
    %v1735 = vadd.f32 %v1569, %v1704
    %v1736 = vadd.f32 %v1571, %v1718
    %v1737 = vadd.f32 %v1573, %v1720
    %v1738 = vadd.f32 %v1575, %v1722
    %v1739 = vxor.u32 %v1731, 2147483648
    %v1740 = vxor.u32 %v1732, 2147483648
    %v1741 = vxor.u32 %v1733, 2147483648
    %v1742 = vxor.u32 %v1734, 2147483648
    %v1743 = vxor.u32 %v1735, 2147483648
    %v1744 = vxor.u32 %v1736, 2147483648
    %v1745 = vxor.u32 %v1737, 2147483648
    %v1746 = vxor.u32 %v1738, 2147483648
    %v1747 = vmul.f32 %v1739, 1.442695
    %v1748 = vpow.pop %v1747
    %v1749 = vmul.f32 %v1740, 1.442695
    %v1750 = vpow.pop %v1749
    %v1751 = vmul.f32 %v1741, 1.442695
    %v1752 = vpow.pop %v1751
    %v1753 = vmul.f32 %v1742, 1.442695
    %v1754 = vpow.pop %v1753
    %v1755 = vmul.f32 %v1743, 1.442695
    %v1756 = vpow.pop %v1755
    %v1757 = vmul.f32 %v1744, 1.442695
    %v1758 = vpow.pop %v1757
    %v1759 = vmul.f32 %v1745, 1.442695
    %v1760 = vpow.pop %v1759
    %v1761 = vmul.f32 %v1746, 1.442695
    %v1762 = vpow.pop %v1761
    %v1763 = vadd.f32 %v1748, 1.0
    %v1764 = vadd.f32 %v1750, 1.0
    %v1765 = vadd.f32 %v1752, 1.0
    %v1766 = vadd.f32 %v1754, 1.0
    %v1767 = vadd.f32 %v1756, 1.0
    %v1768 = vadd.f32 %v1758, 1.0
    %v1769 = vadd.f32 %v1760, 1.0
    %v1770 = vadd.f32 %v1762, 1.0
    %v1771 = vrcp.pop %v1763
    %v1772 = vmul.f32 1.0, %v1771
    %v1773 = vrcp.pop %v1764
    %v1774 = vmul.f32 1.0, %v1773
    %v1775 = vrcp.pop %v1765
    %v1776 = vmul.f32 1.0, %v1775
    %v1777 = vrcp.pop %v1766
    %v1778 = vmul.f32 1.0, %v1777
    %v1779 = vrcp.pop %v1767
    %v1780 = vmul.f32 1.0, %v1779
    %v1781 = vrcp.pop %v1768
    %v1782 = vmul.f32 1.0, %v1781
    %v1783 = vrcp.pop %v1769
    %v1784 = vmul.f32 1.0, %v1783
    %v1785 = vrcp.pop %v1770
    %v1786 = vmul.f32 1.0, %v1785
    %1795 = vrot.lane.b32.xlu0 %v1731, 64
    %v1796 = vpop.permute.xlu0 %1795
    %1797 = vrot.lane.b32.xlu0 %v1732, 64
    %v1798 = vpop.permute.xlu0 %1797
    %1799 = vrot.lane.b32.xlu0 %v1733, 64
    %v1800 = vpop.permute.xlu0 %1799
    %1801 = vrot.lane.b32.xlu0 %v1734, 64
    %v1802 = vpop.permute.xlu0 %1801
    %1803 = vrot.lane.b32.xlu0 %v1735, 64
    %v1804 = vpop.permute.xlu0 %1803
    %1805 = vrot.lane.b32.xlu0 %v1736, 64
    %v1806 = vpop.permute.xlu0 %1805
    %1807 = vrot.lane.b32.xlu0 %v1737, 64
    %v1808 = vpop.permute.xlu0 %1807
    %1809 = vrot.lane.b32.xlu0 %v1738, 64
    %v1810 = vpop.permute.xlu0 %1809
    %v1811 = vrot.slane %v1796, 1
    %v1812 = vrot.slane %v1798, 1
    %v1813 = vrot.slane %v1800, 1
    %v1814 = vrot.slane %v1802, 1
    %v1815 = vrot.slane %v1804, 1
    %v1816 = vrot.slane %v1806, 1
    %v1817 = vrot.slane %v1808, 1
    %v1818 = vrot.slane %v1810, 1
    %v1827 = vtanh.pop %v1811
    %v1828 = vtanh.pop %v1812
    %v1829 = vtanh.pop %v1813
    %v1830 = vtanh.pop %v1814
    %v1831 = vtanh.pop %v1815
    %v1832 = vtanh.pop %v1816
    %v1833 = vtanh.pop %v1817
    %v1834 = vtanh.pop %v1818
    %v1844 = vunpack.c.l.s4 1966171168
    %v1845 = vunpack.c.0.s8 %v1844
    %v1846 = vlaneseq
    %v1847 = vshrl.u32 %v1846, 7
    %v1848 = vsub.s32 %v1845, %v1847
    %v1849 = vrot.slane %v1536, %v1848
    %v1851 = vunpack.c.l.s4 1966171168
    %v1852 = vunpack.c.0.s8 %v1851
    %v1853 = vlaneseq
    %v1854 = vshrl.u32 %v1853, 7
    %v1855 = vsub.s32 %v1852, %v1854
    %v1856 = vrot.slane %v1849, %v1855
    %v1858 = vunpack.c.l.s4 1966171168
    %v1859 = vunpack.c.0.s8 %v1858
    %v1860 = vlaneseq
    %v1861 = vshrl.u32 %v1860, 7
    %v1862 = vsub.s32 %v1859, %v1861
    %v1863 = vrot.slane %v1537, %v1862
    %v1865 = vunpack.c.l.s4 1966171168
    %v1866 = vunpack.c.0.s8 %v1865
    %v1867 = vlaneseq
    %v1868 = vshrl.u32 %v1867, 7
    %v1869 = vsub.s32 %v1866, %v1868
    %v1870 = vrot.slane %v1863, %v1869
    %v1872 = vunpack.c.l.s4 1966171168
    %v1873 = vunpack.c.0.s8 %v1872
    %v1874 = vlaneseq
    %v1875 = vshrl.u32 %v1874, 7
    %v1876 = vsub.s32 %v1873, %v1875
    %v1877 = vrot.slane %v1538, %v1876
    %v1879 = vunpack.c.l.s4 1966171168
    %v1880 = vunpack.c.0.s8 %v1879
    %v1881 = vlaneseq
    %v1882 = vshrl.u32 %v1881, 7
    %v1883 = vsub.s32 %v1880, %v1882
    %v1884 = vrot.slane %v1877, %v1883
    %v1886 = vunpack.c.l.s4 1966171168
    %v1887 = vunpack.c.0.s8 %v1886
    %v1888 = vlaneseq
    %v1889 = vshrl.u32 %v1888, 7
    %v1890 = vsub.s32 %v1887, %v1889
    %v1891 = vrot.slane %v1539, %v1890
    %v1893 = vunpack.c.l.s4 1966171168
    %v1894 = vunpack.c.0.s8 %v1893
    %v1895 = vlaneseq
    %v1896 = vshrl.u32 %v1895, 7
    %v1897 = vsub.s32 %v1894, %v1896
    %v1898 = vrot.slane %v1891, %v1897
    %v1900 = vunpack.c.l.s4 1966171168
    %v1901 = vunpack.c.0.s8 %v1900
    %v1902 = vlaneseq
    %v1903 = vshrl.u32 %v1902, 7
    %v1904 = vsub.s32 %v1901, %v1903
    %v1905 = vrot.slane %v1540, %v1904
    %v1907 = vunpack.c.l.s4 1966171168
    %v1908 = vunpack.c.0.s8 %v1907
    %v1909 = vlaneseq
    %v1910 = vshrl.u32 %v1909, 7
    %v1911 = vsub.s32 %v1908, %v1910
    %v1912 = vrot.slane %v1905, %v1911
    %v1914 = vunpack.c.l.s4 1966171168
    %v1915 = vunpack.c.0.s8 %v1914
    %v1916 = vlaneseq
    %v1917 = vshrl.u32 %v1916, 7
    %v1918 = vsub.s32 %v1915, %v1917
    %v1919 = vrot.slane %v1541, %v1918
    %v1921 = vunpack.c.l.s4 1966171168
    %v1922 = vunpack.c.0.s8 %v1921
    %v1923 = vlaneseq
    %v1924 = vshrl.u32 %v1923, 7
    %v1925 = vsub.s32 %v1922, %v1924
    %v1926 = vrot.slane %v1919, %v1925
    %v1928 = vunpack.c.l.s4 1966171168
    %v1929 = vunpack.c.0.s8 %v1928
    %v1930 = vlaneseq
    %v1931 = vshrl.u32 %v1930, 7
    %v1932 = vsub.s32 %v1929, %v1931
    %v1933 = vrot.slane %v1542, %v1932
    %v1935 = vunpack.c.l.s4 1966171168
    %v1936 = vunpack.c.0.s8 %v1935
    %v1937 = vlaneseq
    %v1938 = vshrl.u32 %v1937, 7
    %v1939 = vsub.s32 %v1936, %v1938
    %v1940 = vrot.slane %v1933, %v1939
    %v1942 = vunpack.c.l.s4 1966171168
    %v1943 = vunpack.c.0.s8 %v1942
    %v1944 = vlaneseq
    %v1945 = vshrl.u32 %v1944, 7
    %v1946 = vsub.s32 %v1943, %v1945
    %v1947 = vrot.slane %v1543, %v1946
    %v1949 = vunpack.c.l.s4 1966171168
    %v1950 = vunpack.c.0.s8 %v1949
    %v1951 = vlaneseq
    %v1952 = vshrl.u32 %v1951, 7
    %v1953 = vsub.s32 %v1950, %v1952
    %v1954 = vrot.slane %v1947, %v1953
    %1955 = vrot.lane.b32.xlu0 %v1856, 64
    %v1956 = vpop.permute.xlu0 %1955
    %1957 = vrot.lane.b32.xlu0 %v1870, 64
    %v1958 = vpop.permute.xlu0 %1957
    %1959 = vrot.lane.b32.xlu0 %v1884, 64
    %v1960 = vpop.permute.xlu0 %1959
    %1961 = vrot.lane.b32.xlu0 %v1898, 64
    %v1962 = vpop.permute.xlu0 %1961
    %1963 = vrot.lane.b32.xlu0 %v1912, 64
    %v1964 = vpop.permute.xlu0 %1963
    %1965 = vrot.lane.b32.xlu0 %v1926, 64
    %v1966 = vpop.permute.xlu0 %1965
    %1967 = vrot.lane.b32.xlu0 %v1940, 64
    %v1968 = vpop.permute.xlu0 %1967
    %1969 = vrot.lane.b32.xlu0 %v1954, 64
    %v1970 = vpop.permute.xlu0 %1969
    %v1979 = vmul.f32 %v1772, %v1956
    %v1980 = vmul.f32 %v1774, %v1958
    %v1981 = vmul.f32 %v1776, %v1960
    %v1982 = vmul.f32 %v1778, %v1962
    %v1983 = vmul.f32 %v1780, %v1964
    %v1984 = vmul.f32 %v1782, %v1966
    %v1985 = vmul.f32 %v1784, %v1968
    %v1986 = vmul.f32 %v1786, %v1970
    %v1987 = vmul.f32 %v1772, %v1827
    %v1988 = vmul.f32 %v1774, %v1828
    %v1989 = vmul.f32 %v1776, %v1829
    %v1990 = vmul.f32 %v1778, %v1830
    %v1991 = vmul.f32 %v1780, %v1831
    %v1992 = vmul.f32 %v1782, %v1832
    %v1993 = vmul.f32 %v1784, %v1833
    %v1994 = vmul.f32 %v1786, %v1834
    %2003 = vrot.lane.b32.xlu0 %v1987, 64
    %v2004 = vpop.permute.xlu0 %2003
    %2005 = vrot.lane.b32.xlu0 %v1988, 64
    %v2006 = vpop.permute.xlu0 %2005
    %2007 = vrot.lane.b32.xlu0 %v1989, 64
    %v2008 = vpop.permute.xlu0 %2007
    %2009 = vrot.lane.b32.xlu0 %v1990, 64
    %v2010 = vpop.permute.xlu0 %2009
    %2011 = vrot.lane.b32.xlu0 %v1991, 64
    %v2012 = vpop.permute.xlu0 %2011
    %2013 = vrot.lane.b32.xlu0 %v1992, 64
    %v2014 = vpop.permute.xlu0 %2013
    %2015 = vrot.lane.b32.xlu0 %v1993, 64
    %v2016 = vpop.permute.xlu0 %2015
    %2017 = vrot.lane.b32.xlu0 %v1994, 64
    %v2018 = vpop.permute.xlu0 %2017
    %v2027 = vadd.f32 %v1979, %v2004
    %v2028 = vadd.f32 %v1980, %v2006
    %v2029 = vadd.f32 %v1981, %v2008
    %v2030 = vadd.f32 %v1982, %v2010
    %v2031 = vadd.f32 %v1983, %v2012
    %v2032 = vadd.f32 %v1984, %v2014
    %v2033 = vadd.f32 %v1985, %v2016
    %v2034 = vadd.f32 %v1986, %v2018
    %v2035 = vtanh.pop %v2027
    %v2036 = vtanh.pop %v2028
    %v2037 = vtanh.pop %v2029
    %v2038 = vtanh.pop %v2030
    %v2039 = vtanh.pop %v2031
    %v2040 = vtanh.pop %v2032
    %v2041 = vtanh.pop %v2033
    %v2042 = vtanh.pop %v2034
    %v2051 = vrot.slane %v1772, 1
    %v2052 = vrot.slane %v1774, 1
    %v2053 = vrot.slane %v1776, 1
    %v2054 = vrot.slane %v1778, 1
    %v2055 = vrot.slane %v1780, 1
    %v2056 = vrot.slane %v1782, 1
    %v2057 = vrot.slane %v1784, 1
    %v2058 = vrot.slane %v1786, 1
    %2075 = vrot.lane.b32.xlu0 %v2035, 64
    %v2076 = vpop.permute.xlu0 %2075
    %2077 = vrot.lane.b32.xlu0 %v2036, 64
    %v2078 = vpop.permute.xlu0 %2077
    %2079 = vrot.lane.b32.xlu0 %v2037, 64
    %v2080 = vpop.permute.xlu0 %2079
    %2081 = vrot.lane.b32.xlu0 %v2038, 64
    %v2082 = vpop.permute.xlu0 %2081
    %2083 = vrot.lane.b32.xlu0 %v2039, 64
    %v2084 = vpop.permute.xlu0 %2083
    %2085 = vrot.lane.b32.xlu0 %v2040, 64
    %v2086 = vpop.permute.xlu0 %2085
    %2087 = vrot.lane.b32.xlu0 %v2041, 64
    %v2088 = vpop.permute.xlu0 %2087
    %2089 = vrot.lane.b32.xlu0 %v2042, 64
    %v2090 = vpop.permute.xlu0 %2089
    %v2099 = vmul.f32 %v2051, %v2076
    %v2100 = vmul.f32 %v2052, %v2078
    %v2101 = vmul.f32 %v2053, %v2080
    %v2102 = vmul.f32 %v2054, %v2082
    %v2103 = vmul.f32 %v2055, %v2084
    %v2104 = vmul.f32 %v2056, %v2086
    %v2105 = vmul.f32 %v2057, %v2088
    %v2106 = vmul.f32 %v2058, %v2090
    %v2107 = vld [vmem:[#allocation3 + $0x2] sm:$0x1]
    %v2108 = vld [vmem:[#allocation3 + $0xa] sm:$0x1]
    %v2109 = vld [vmem:[#allocation3 + $0x12] sm:$0x1]
    %v2110 = vld [vmem:[#allocation3 + $0x1a] sm:$0x1]
    %v2111 = vld [vmem:[#allocation3 + $0x22] sm:$0x1]
    %v2112 = vld [vmem:[#allocation3 + $0x2a] sm:$0x1]
    %v2113 = vld [vmem:[#allocation3 + $0x32] sm:$0x1]
    %v2114 = vld [vmem:[#allocation3 + $0x3a] sm:$0x1]
    %vm2115 = vcmp.gt.f32.partialorder %v2107, 0.0
    %vm2116 = vcmp.gt.f32.partialorder %v2108, 0.0
    %vm2117 = vcmp.gt.f32.partialorder %v2109, 0.0
    %vm2118 = vcmp.gt.f32.partialorder %v2110, 0.0
    %vm2119 = vcmp.gt.f32.partialorder %v2111, 0.0
    %vm2120 = vcmp.gt.f32.partialorder %v2112, 0.0
    %vm2121 = vcmp.gt.f32.partialorder %v2113, 0.0
    %vm2122 = vcmp.gt.f32.partialorder %v2114, 0.0
    %v2123 = vsel %vm2115, %v2099, %v1464
    %v2124 = vsel %vm2116, %v2100, %v1465
    %v2125 = vsel %vm2117, %v2101, %v1466
    %v2126 = vsel %vm2118, %v2102, %v1467
    %v2127 = vsel %vm2119, %v2103, %v1468
    %v2128 = vsel %vm2120, %v2104, %v1469
    %v2129 = vsel %vm2121, %v2105, %v1470
    %v2130 = vsel %vm2122, %v2106, %v1471
    %v2139 = vlaneseq
    %v2140 = vshrl.u32 %v2139, 7
    %v2141 = vsub.s32 0, %v2140
    %v2142 = vrot.slane %v2027, %v2141
    %v2143 = vlaneseq
    %v2144 = vshrl.u32 %v2143, 7
    %v2145 = vsub.s32 0, %v2144
    %v2146 = vrot.slane %v2028, %v2145
    %v2147 = vlaneseq
    %v2148 = vshrl.u32 %v2147, 7
    %v2149 = vsub.s32 0, %v2148
    %v2150 = vrot.slane %v2029, %v2149
    %v2151 = vlaneseq
    %v2152 = vshrl.u32 %v2151, 7
    %v2153 = vsub.s32 0, %v2152
    %v2154 = vrot.slane %v2030, %v2153
    %v2155 = vlaneseq
    %v2156 = vshrl.u32 %v2155, 7
    %v2157 = vsub.s32 0, %v2156
    %v2158 = vrot.slane %v2031, %v2157
    %v2159 = vlaneseq
    %v2160 = vshrl.u32 %v2159, 7
    %v2161 = vsub.s32 0, %v2160
    %v2162 = vrot.slane %v2032, %v2161
    %v2163 = vlaneseq
    %v2164 = vshrl.u32 %v2163, 7
    %v2165 = vsub.s32 0, %v2164
    %v2166 = vrot.slane %v2033, %v2165
    %v2167 = vlaneseq
    %v2168 = vshrl.u32 %v2167, 7
    %v2169 = vsub.s32 0, %v2168
    %v2170 = vrot.slane %v2034, %v2169
    %2171 = vrot.lane.b32.xlu0 %v2142, 64
    %v2172 = vpop.permute.xlu0 %2171
    %2173 = vrot.lane.b32.xlu0 %v2146, 64
    %v2174 = vpop.permute.xlu0 %2173
    %2175 = vrot.lane.b32.xlu0 %v2150, 64
    %v2176 = vpop.permute.xlu0 %2175
    %2177 = vrot.lane.b32.xlu0 %v2154, 64
    %v2178 = vpop.permute.xlu0 %2177
    %2179 = vrot.lane.b32.xlu0 %v2158, 64
    %v2180 = vpop.permute.xlu0 %2179
    %2181 = vrot.lane.b32.xlu0 %v2162, 64
    %v2182 = vpop.permute.xlu0 %2181
    %2183 = vrot.lane.b32.xlu0 %v2166, 64
    %v2184 = vpop.permute.xlu0 %2183
    %2185 = vrot.lane.b32.xlu0 %v2170, 64
    %v2186 = vpop.permute.xlu0 %2185
    %v2195 = vsel %vm2115, %v2172, %v1536
    %v2196 = vsel %vm2116, %v2174, %v1537
    %v2197 = vsel %vm2117, %v2176, %v1538
    %v2198 = vsel %vm2118, %v2178, %v1539
    %v2199 = vsel %vm2119, %v2180, %v1540
    %v2200 = vsel %vm2120, %v2182, %v1541
    %v2201 = vsel %vm2121, %v2184, %v1542
    %v2202 = vsel %vm2122, %v2186, %v1543
    %2203 = vst.msk [vmem:[#allocation4 + $0x2] sm:$0x1] %vm876, %v2123
    %2204 = vst.msk [vmem:[#allocation4 + $0xa] sm:$0x1] %vm876, %v2124
    %2205 = vst.msk [vmem:[#allocation4 + $0x12] sm:$0x1] %vm876, %v2125
    %2206 = vst.msk [vmem:[#allocation4 + $0x1a] sm:$0x1] %vm876, %v2126
    %2207 = vst.msk [vmem:[#allocation4 + $0x22] sm:$0x1] %vm876, %v2127
    %2208 = vst.msk [vmem:[#allocation4 + $0x2a] sm:$0x1] %vm876, %v2128
    %2209 = vst.msk [vmem:[#allocation4 + $0x32] sm:$0x1] %vm876, %v2129
    %2210 = vst.msk [vmem:[#allocation4 + $0x3a] sm:$0x1] %vm876, %v2130
    %2211 = vst.msk [vmem:[#allocation4 + $0x5] sm:$0x1] %vm885, %v2123
    %2212 = vst.msk [vmem:[#allocation4 + $0xd] sm:$0x1] %vm885, %v2124
    %2213 = vst.msk [vmem:[#allocation4 + $0x15] sm:$0x1] %vm885, %v2125
    %2214 = vst.msk [vmem:[#allocation4 + $0x1d] sm:$0x1] %vm885, %v2126
    %2215 = vst.msk [vmem:[#allocation4 + $0x25] sm:$0x1] %vm885, %v2127
    %2216 = vst.msk [vmem:[#allocation4 + $0x2d] sm:$0x1] %vm885, %v2128
    %2217 = vst.msk [vmem:[#allocation4 + $0x35] sm:$0x1] %vm885, %v2129
    %2218 = vst.msk [vmem:[#allocation4 + $0x3d] sm:$0x1] %vm885, %v2130
    %s2219 = scalar_lea.vmem [#allocation2], 3
    %v2220 = vld [vmem:[%s2219] ss:$8 sm:$0x3]
    %s2221 = scalar_lea.vmem [#allocation2], 19
    %v2222 = vld [vmem:[%s2221] ss:$8 sm:$0x3]
    %s2223 = scalar_lea.vmem [#allocation2], 35
    %v2224 = vld [vmem:[%s2223] ss:$8 sm:$0x3]
    %s2225 = scalar_lea.vmem [#allocation2], 51
    %v2226 = vld [vmem:[%s2225] ss:$8 sm:$0x3]
    %s2227 = scalar_lea.vmem [#allocation2], 67
    %v2228 = vld [vmem:[%s2227] ss:$8 sm:$0x3]
    %s2229 = scalar_lea.vmem [#allocation2], 83
    %v2230 = vld [vmem:[%s2229] ss:$8 sm:$0x3]
    %s2231 = scalar_lea.vmem [#allocation2], 99
    %v2232 = vld [vmem:[%s2231] ss:$8 sm:$0x3]
    %s2233 = scalar_lea.vmem [#allocation2], 115
    %v2234 = vld [vmem:[%s2233] ss:$8 sm:$0x3]
    %v2243 = vrot.slane %v2124, 7
    %v2244 = vsel %vm919, %v2243, %v2123
    %v2245 = vrot.slane %v2125, 6
    %v2246 = vsel %vm922, %v2245, %v2244
    %v2247 = vrot.slane %v2126, 5
    %v2248 = vsel %vm925, %v2247, %v2246
    %v2249 = vrot.slane %v2127, 4
    %v2250 = vsel %vm928, %v2249, %v2248
    %v2251 = vrot.slane %v2128, 3
    %v2252 = vsel %vm931, %v2251, %v2250
    %v2253 = vrot.slane %v2129, 2
    %v2254 = vsel %vm934, %v2253, %v2252
    %v2255 = vrot.slane %v2130, 1
    %v2256 = vsel %vm937, %v2255, %v2254
    %v2257 = vsel %vm97, %v2256, 0
    %2259 = vmatprep.subr.mxu0 0.0
    %2260 = vmatpush1.msra.mxu0 0.0
    %2261 = vmatprep.subr.mxu0 0.0
    %2262 = vmatpush1.msra.mxu0 0.0
    %2263 = vmatprep.subr.mxu0 0.0
    %2264 = vmatpush1.msra.mxu0 0.0
    %2265 = vmatprep.subr.mxu0 0.0
    %2266 = vmatpush1.msra.mxu0 0.0
    %2267 = vmatprep.subr.mxu0 0.0
    %2268 = vmatpush1.msra.mxu0 0.0
    %2269 = vmatprep.subr.mxu0 0.0
    %2270 = vmatpush1.msra.mxu0 0.0
    %2271 = vmatprep.subr.mxu0 0.0
    %2272 = vmatpush1.msra.mxu0 0.0
    %2273 = vmatprep.subr.mxu0 0.0
    %2274 = vmatpush1.msra.mxu0 0.0
    %2275 = vmatprep.subr.mxu0 %v398
    %2276 = vmatpush1.msra.mxu0 %v397
    %2277 = vmatprep.subr.mxu0 %v396
    %2278 = vmatpush1.msra.mxu0 %v395
    %2279 = vmatprep.subr.mxu0 %v394
    %2280 = vmatpush1.msra.mxu0 %v393
    %2281 = vmatprep.subr.mxu0 %v392
    %2282 = vmatpush1.msra.mxu0 %v391
    %2283 = vmatprep.subr.mxu0 %v390
    %2284 = vmatpush1.msra.mxu0 %v389
    %2285 = vmatprep.subr.mxu0 %v388
    %2286 = vmatpush1.msra.mxu0 %v387
    %2287 = vmatprep.subr.mxu0 %v386
    %2288 = vmatpush1.msra.mxu0 %v385
    %2289 = vmatprep.subr.mxu0 %v384
    %2290 = vmatpush1.msra.mxu0 %v383
    %2291 = vmatprep.subr.mxu0 0.0
    %2292 = vmatpush2.msra.mxu0 0.0
    %2293 = vmatprep.subr.mxu0 0.0
    %2294 = vmatpush2.msra.mxu0 0.0
    %2295 = vmatprep.subr.mxu0 0.0
    %2296 = vmatpush2.msra.mxu0 0.0
    %2297 = vmatprep.subr.mxu0 0.0
    %2298 = vmatpush2.msra.mxu0 0.0
    %2299 = vmatprep.subr.mxu0 0.0
    %2300 = vmatpush2.msra.mxu0 0.0
    %2301 = vmatprep.subr.mxu0 0.0
    %2302 = vmatpush2.msra.mxu0 0.0
    %2303 = vmatprep.subr.mxu0 0.0
    %2304 = vmatpush2.msra.mxu0 0.0
    %2305 = vmatprep.subr.mxu0 0.0
    %2306 = vmatpush2.msra.mxu0 0.0
    %2307 = vmatprep.subr.mxu0 0.0
    %2308 = vmatpush2.msra.mxu0 0.0
    %2309 = vmatprep.subr.mxu0 0.0
    %2310 = vmatpush2.msra.mxu0 0.0
    %2311 = vmatprep.subr.mxu0 0.0
    %2312 = vmatpush2.msra.mxu0 0.0
    %2313 = vmatprep.subr.mxu0 0.0
    %2314 = vmatpush2.msra.mxu0 0.0
    %2315 = vmatprep.subr.mxu0 0.0
    %2316 = vmatpush2.msra.mxu0 0.0
    %2317 = vmatprep.subr.mxu0 0.0
    %2318 = vmatpush2.msra.mxu0 0.0
    %2319 = vmatprep.subr.mxu0 0.0
    %2320 = vmatpush2.msra.mxu0 0.0
    %2321 = vmatprep.subr.mxu0 0.0
    %2322 = vmatpush2.msra.mxu0 0.0
    %2323 = vmatprep.mubr.f32.mxu0 0.0
    %2324 = vmatmul.mubr.f32.gmra.mxu0 %v2257
    %v2325 = vpop.f32.mrf.mxu0
    %v2326 = vadd.f32 0.0, %v2325
    %v2327 = vpop.f32.mrf.mxu0
    %v2328 = vadd.f32 0.0, %v2327
    %2329 = vdwg.mxu0
    %v2332 = vcombine.low %v2326, %v2328
    %v2333 = vcombine.high %v2326, %v2328
    %v2335 = vunpack.c.l.s4 1966171168
    %v2336 = vunpack.c.0.s8 %v2335
    %v2337 = vlaneseq
    %v2338 = vshrl.u32 %v2337, 7
    %v2339 = vsub.s32 %v2336, %v2338
    %v2340 = vrot.slane %v2332, %v2339
    %v2342 = vunpack.c.l.s4 1966171168
    %v2343 = vunpack.c.0.s8 %v2342
    %v2344 = vlaneseq
    %v2345 = vshrl.u32 %v2344, 7
    %v2346 = vsub.s32 %v2343, %v2345
    %v2347 = vrot.slane %v2333, %v2346
    %v2348 = vcombine.high %v2340, %v2340
    %v2349 = vcombine.high %v2347, %v2347
    %v2351 = vunpack.c.l.s4 1966171168
    %v2352 = vunpack.c.0.s8 %v2351
    %v2353 = vlaneseq
    %v2354 = vshrl.u32 %v2353, 7
    %v2355 = vsub.s32 %v2352, %v2354
    %v2356 = vrot.slane %v2340, %v2355
    %v2358 = vunpack.c.l.s4 1966171168
    %v2359 = vunpack.c.0.s8 %v2358
    %v2360 = vlaneseq
    %v2361 = vshrl.u32 %v2360, 7
    %v2362 = vsub.s32 %v2359, %v2361
    %v2363 = vrot.slane %v2347, %v2362
    %v2365 = vunpack.c.l.s4 1966171168
    %v2366 = vunpack.c.0.s8 %v2365
    %v2367 = vlaneseq
    %v2368 = vshrl.u32 %v2367, 7
    %v2369 = vsub.s32 %v2366, %v2368
    %v2370 = vrot.slane %v2348, %v2369
    %v2372 = vunpack.c.l.s4 1966171168
    %v2373 = vunpack.c.0.s8 %v2372
    %v2374 = vlaneseq
    %v2375 = vshrl.u32 %v2374, 7
    %v2376 = vsub.s32 %v2373, %v2375
    %v2377 = vrot.slane %v2349, %v2376
    %v2378 = vcombine.high %v2356, %v2356
    %v2379 = vcombine.high %v2363, %v2363
    %v2380 = vcombine.high %v2370, %v2370
    %v2381 = vcombine.high %v2377, %v2377
    %v2390 = vadd.f32 %v2220, %v2356
    %v2391 = vadd.f32 %v2222, %v2370
    %v2392 = vadd.f32 %v2224, %v2378
    %v2393 = vadd.f32 %v2226, %v2380
    %v2394 = vadd.f32 %v2228, %v2363
    %v2395 = vadd.f32 %v2230, %v2377
    %v2396 = vadd.f32 %v2232, %v2379
    %v2397 = vadd.f32 %v2234, %v2381
    %v2398 = vxor.u32 %v2390, 2147483648
    %v2399 = vxor.u32 %v2391, 2147483648
    %v2400 = vxor.u32 %v2392, 2147483648
    %v2401 = vxor.u32 %v2393, 2147483648
    %v2402 = vxor.u32 %v2394, 2147483648
    %v2403 = vxor.u32 %v2395, 2147483648
    %v2404 = vxor.u32 %v2396, 2147483648
    %v2405 = vxor.u32 %v2397, 2147483648
    %v2406 = vmul.f32 %v2398, 1.442695
    %v2407 = vpow.pop %v2406
    %v2408 = vmul.f32 %v2399, 1.442695
    %v2409 = vpow.pop %v2408
    %v2410 = vmul.f32 %v2400, 1.442695
    %v2411 = vpow.pop %v2410
    %v2412 = vmul.f32 %v2401, 1.442695
    %v2413 = vpow.pop %v2412
    %v2414 = vmul.f32 %v2402, 1.442695
    %v2415 = vpow.pop %v2414
    %v2416 = vmul.f32 %v2403, 1.442695
    %v2417 = vpow.pop %v2416
    %v2418 = vmul.f32 %v2404, 1.442695
    %v2419 = vpow.pop %v2418
    %v2420 = vmul.f32 %v2405, 1.442695
    %v2421 = vpow.pop %v2420
    %v2422 = vadd.f32 %v2407, 1.0
    %v2423 = vadd.f32 %v2409, 1.0
    %v2424 = vadd.f32 %v2411, 1.0
    %v2425 = vadd.f32 %v2413, 1.0
    %v2426 = vadd.f32 %v2415, 1.0
    %v2427 = vadd.f32 %v2417, 1.0
    %v2428 = vadd.f32 %v2419, 1.0
    %v2429 = vadd.f32 %v2421, 1.0
    %v2430 = vrcp.pop %v2422
    %v2431 = vmul.f32 1.0, %v2430
    %v2432 = vrcp.pop %v2423
    %v2433 = vmul.f32 1.0, %v2432
    %v2434 = vrcp.pop %v2424
    %v2435 = vmul.f32 1.0, %v2434
    %v2436 = vrcp.pop %v2425
    %v2437 = vmul.f32 1.0, %v2436
    %v2438 = vrcp.pop %v2426
    %v2439 = vmul.f32 1.0, %v2438
    %v2440 = vrcp.pop %v2427
    %v2441 = vmul.f32 1.0, %v2440
    %v2442 = vrcp.pop %v2428
    %v2443 = vmul.f32 1.0, %v2442
    %v2444 = vrcp.pop %v2429
    %v2445 = vmul.f32 1.0, %v2444
    %2454 = vrot.lane.b32.xlu0 %v2390, 64
    %v2455 = vpop.permute.xlu0 %2454
    %2456 = vrot.lane.b32.xlu0 %v2391, 64
    %v2457 = vpop.permute.xlu0 %2456
    %2458 = vrot.lane.b32.xlu0 %v2392, 64
    %v2459 = vpop.permute.xlu0 %2458
    %2460 = vrot.lane.b32.xlu0 %v2393, 64
    %v2461 = vpop.permute.xlu0 %2460
    %2462 = vrot.lane.b32.xlu0 %v2394, 64
    %v2463 = vpop.permute.xlu0 %2462
    %2464 = vrot.lane.b32.xlu0 %v2395, 64
    %v2465 = vpop.permute.xlu0 %2464
    %2466 = vrot.lane.b32.xlu0 %v2396, 64
    %v2467 = vpop.permute.xlu0 %2466
    %2468 = vrot.lane.b32.xlu0 %v2397, 64
    %v2469 = vpop.permute.xlu0 %2468
    %v2470 = vrot.slane %v2455, 1
    %v2471 = vrot.slane %v2457, 1
    %v2472 = vrot.slane %v2459, 1
    %v2473 = vrot.slane %v2461, 1
    %v2474 = vrot.slane %v2463, 1
    %v2475 = vrot.slane %v2465, 1
    %v2476 = vrot.slane %v2467, 1
    %v2477 = vrot.slane %v2469, 1
    %v2486 = vtanh.pop %v2470
    %v2487 = vtanh.pop %v2471
    %v2488 = vtanh.pop %v2472
    %v2489 = vtanh.pop %v2473
    %v2490 = vtanh.pop %v2474
    %v2491 = vtanh.pop %v2475
    %v2492 = vtanh.pop %v2476
    %v2493 = vtanh.pop %v2477
    %v2503 = vunpack.c.l.s4 1966171168
    %v2504 = vunpack.c.0.s8 %v2503
    %v2505 = vlaneseq
    %v2506 = vshrl.u32 %v2505, 7
    %v2507 = vsub.s32 %v2504, %v2506
    %v2508 = vrot.slane %v2195, %v2507
    %v2510 = vunpack.c.l.s4 1966171168
    %v2511 = vunpack.c.0.s8 %v2510
    %v2512 = vlaneseq
    %v2513 = vshrl.u32 %v2512, 7
    %v2514 = vsub.s32 %v2511, %v2513
    %v2515 = vrot.slane %v2508, %v2514
    %v2517 = vunpack.c.l.s4 1966171168
    %v2518 = vunpack.c.0.s8 %v2517
    %v2519 = vlaneseq
    %v2520 = vshrl.u32 %v2519, 7
    %v2521 = vsub.s32 %v2518, %v2520
    %v2522 = vrot.slane %v2196, %v2521
    %v2524 = vunpack.c.l.s4 1966171168
    %v2525 = vunpack.c.0.s8 %v2524
    %v2526 = vlaneseq
    %v2527 = vshrl.u32 %v2526, 7
    %v2528 = vsub.s32 %v2525, %v2527
    %v2529 = vrot.slane %v2522, %v2528
    %v2531 = vunpack.c.l.s4 1966171168
    %v2532 = vunpack.c.0.s8 %v2531
    %v2533 = vlaneseq
    %v2534 = vshrl.u32 %v2533, 7
    %v2535 = vsub.s32 %v2532, %v2534
    %v2536 = vrot.slane %v2197, %v2535
    %v2538 = vunpack.c.l.s4 1966171168
    %v2539 = vunpack.c.0.s8 %v2538
    %v2540 = vlaneseq
    %v2541 = vshrl.u32 %v2540, 7
    %v2542 = vsub.s32 %v2539, %v2541
    %v2543 = vrot.slane %v2536, %v2542
    %v2545 = vunpack.c.l.s4 1966171168
    %v2546 = vunpack.c.0.s8 %v2545
    %v2547 = vlaneseq
    %v2548 = vshrl.u32 %v2547, 7
    %v2549 = vsub.s32 %v2546, %v2548
    %v2550 = vrot.slane %v2198, %v2549
    %v2552 = vunpack.c.l.s4 1966171168
    %v2553 = vunpack.c.0.s8 %v2552
    %v2554 = vlaneseq
    %v2555 = vshrl.u32 %v2554, 7
    %v2556 = vsub.s32 %v2553, %v2555
    %v2557 = vrot.slane %v2550, %v2556
    %v2559 = vunpack.c.l.s4 1966171168
    %v2560 = vunpack.c.0.s8 %v2559
    %v2561 = vlaneseq
    %v2562 = vshrl.u32 %v2561, 7
    %v2563 = vsub.s32 %v2560, %v2562
    %v2564 = vrot.slane %v2199, %v2563
    %v2566 = vunpack.c.l.s4 1966171168
    %v2567 = vunpack.c.0.s8 %v2566
    %v2568 = vlaneseq
    %v2569 = vshrl.u32 %v2568, 7
    %v2570 = vsub.s32 %v2567, %v2569
    %v2571 = vrot.slane %v2564, %v2570
    %v2573 = vunpack.c.l.s4 1966171168
    %v2574 = vunpack.c.0.s8 %v2573
    %v2575 = vlaneseq
    %v2576 = vshrl.u32 %v2575, 7
    %v2577 = vsub.s32 %v2574, %v2576
    %v2578 = vrot.slane %v2200, %v2577
    %v2580 = vunpack.c.l.s4 1966171168
    %v2581 = vunpack.c.0.s8 %v2580
    %v2582 = vlaneseq
    %v2583 = vshrl.u32 %v2582, 7
    %v2584 = vsub.s32 %v2581, %v2583
    %v2585 = vrot.slane %v2578, %v2584
    %v2587 = vunpack.c.l.s4 1966171168
    %v2588 = vunpack.c.0.s8 %v2587
    %v2589 = vlaneseq
    %v2590 = vshrl.u32 %v2589, 7
    %v2591 = vsub.s32 %v2588, %v2590
    %v2592 = vrot.slane %v2201, %v2591
    %v2594 = vunpack.c.l.s4 1966171168
    %v2595 = vunpack.c.0.s8 %v2594
    %v2596 = vlaneseq
    %v2597 = vshrl.u32 %v2596, 7
    %v2598 = vsub.s32 %v2595, %v2597
    %v2599 = vrot.slane %v2592, %v2598
    %v2601 = vunpack.c.l.s4 1966171168
    %v2602 = vunpack.c.0.s8 %v2601
    %v2603 = vlaneseq
    %v2604 = vshrl.u32 %v2603, 7
    %v2605 = vsub.s32 %v2602, %v2604
    %v2606 = vrot.slane %v2202, %v2605
    %v2608 = vunpack.c.l.s4 1966171168
    %v2609 = vunpack.c.0.s8 %v2608
    %v2610 = vlaneseq
    %v2611 = vshrl.u32 %v2610, 7
    %v2612 = vsub.s32 %v2609, %v2611
    %v2613 = vrot.slane %v2606, %v2612
    %2614 = vrot.lane.b32.xlu0 %v2515, 64
    %v2615 = vpop.permute.xlu0 %2614
    %2616 = vrot.lane.b32.xlu0 %v2529, 64
    %v2617 = vpop.permute.xlu0 %2616
    %2618 = vrot.lane.b32.xlu0 %v2543, 64
    %v2619 = vpop.permute.xlu0 %2618
    %2620 = vrot.lane.b32.xlu0 %v2557, 64
    %v2621 = vpop.permute.xlu0 %2620
    %2622 = vrot.lane.b32.xlu0 %v2571, 64
    %v2623 = vpop.permute.xlu0 %2622
    %2624 = vrot.lane.b32.xlu0 %v2585, 64
    %v2625 = vpop.permute.xlu0 %2624
    %2626 = vrot.lane.b32.xlu0 %v2599, 64
    %v2627 = vpop.permute.xlu0 %2626
    %2628 = vrot.lane.b32.xlu0 %v2613, 64
    %v2629 = vpop.permute.xlu0 %2628
    %v2638 = vmul.f32 %v2431, %v2615
    %v2639 = vmul.f32 %v2433, %v2617
    %v2640 = vmul.f32 %v2435, %v2619
    %v2641 = vmul.f32 %v2437, %v2621
    %v2642 = vmul.f32 %v2439, %v2623
    %v2643 = vmul.f32 %v2441, %v2625
    %v2644 = vmul.f32 %v2443, %v2627
    %v2645 = vmul.f32 %v2445, %v2629
    %v2646 = vmul.f32 %v2431, %v2486
    %v2647 = vmul.f32 %v2433, %v2487
    %v2648 = vmul.f32 %v2435, %v2488
    %v2649 = vmul.f32 %v2437, %v2489
    %v2650 = vmul.f32 %v2439, %v2490
    %v2651 = vmul.f32 %v2441, %v2491
    %v2652 = vmul.f32 %v2443, %v2492
    %v2653 = vmul.f32 %v2445, %v2493
    %2662 = vrot.lane.b32.xlu0 %v2646, 64
    %v2663 = vpop.permute.xlu0 %2662
    %2664 = vrot.lane.b32.xlu0 %v2647, 64
    %v2665 = vpop.permute.xlu0 %2664
    %2666 = vrot.lane.b32.xlu0 %v2648, 64
    %v2667 = vpop.permute.xlu0 %2666
    %2668 = vrot.lane.b32.xlu0 %v2649, 64
    %v2669 = vpop.permute.xlu0 %2668
    %2670 = vrot.lane.b32.xlu0 %v2650, 64
    %v2671 = vpop.permute.xlu0 %2670
    %2672 = vrot.lane.b32.xlu0 %v2651, 64
    %v2673 = vpop.permute.xlu0 %2672
    %2674 = vrot.lane.b32.xlu0 %v2652, 64
    %v2675 = vpop.permute.xlu0 %2674
    %2676 = vrot.lane.b32.xlu0 %v2653, 64
    %v2677 = vpop.permute.xlu0 %2676
    %v2686 = vadd.f32 %v2638, %v2663
    %v2687 = vadd.f32 %v2639, %v2665
    %v2688 = vadd.f32 %v2640, %v2667
    %v2689 = vadd.f32 %v2641, %v2669
    %v2690 = vadd.f32 %v2642, %v2671
    %v2691 = vadd.f32 %v2643, %v2673
    %v2692 = vadd.f32 %v2644, %v2675
    %v2693 = vadd.f32 %v2645, %v2677
    %v2694 = vtanh.pop %v2686
    %v2695 = vtanh.pop %v2687
    %v2696 = vtanh.pop %v2688
    %v2697 = vtanh.pop %v2689
    %v2698 = vtanh.pop %v2690
    %v2699 = vtanh.pop %v2691
    %v2700 = vtanh.pop %v2692
    %v2701 = vtanh.pop %v2693
    %v2710 = vrot.slane %v2431, 1
    %v2711 = vrot.slane %v2433, 1
    %v2712 = vrot.slane %v2435, 1
    %v2713 = vrot.slane %v2437, 1
    %v2714 = vrot.slane %v2439, 1
    %v2715 = vrot.slane %v2441, 1
    %v2716 = vrot.slane %v2443, 1
    %v2717 = vrot.slane %v2445, 1
    %2734 = vrot.lane.b32.xlu0 %v2694, 64
    %v2735 = vpop.permute.xlu0 %2734
    %2736 = vrot.lane.b32.xlu0 %v2695, 64
    %v2737 = vpop.permute.xlu0 %2736
    %2738 = vrot.lane.b32.xlu0 %v2696, 64
    %v2739 = vpop.permute.xlu0 %2738
    %2740 = vrot.lane.b32.xlu0 %v2697, 64
    %v2741 = vpop.permute.xlu0 %2740
    %2742 = vrot.lane.b32.xlu0 %v2698, 64
    %v2743 = vpop.permute.xlu0 %2742
    %2744 = vrot.lane.b32.xlu0 %v2699, 64
    %v2745 = vpop.permute.xlu0 %2744
    %2746 = vrot.lane.b32.xlu0 %v2700, 64
    %v2747 = vpop.permute.xlu0 %2746
    %2748 = vrot.lane.b32.xlu0 %v2701, 64
    %v2749 = vpop.permute.xlu0 %2748
    %v2758 = vmul.f32 %v2710, %v2735
    %v2759 = vmul.f32 %v2711, %v2737
    %v2760 = vmul.f32 %v2712, %v2739
    %v2761 = vmul.f32 %v2713, %v2741
    %v2762 = vmul.f32 %v2714, %v2743
    %v2763 = vmul.f32 %v2715, %v2745
    %v2764 = vmul.f32 %v2716, %v2747
    %v2765 = vmul.f32 %v2717, %v2749
    %v2766 = vld [vmem:[#allocation3 + $0x3] sm:$0x1]
    %v2767 = vld [vmem:[#allocation3 + $0xb] sm:$0x1]
    %v2768 = vld [vmem:[#allocation3 + $0x13] sm:$0x1]
    %v2769 = vld [vmem:[#allocation3 + $0x1b] sm:$0x1]
    %v2770 = vld [vmem:[#allocation3 + $0x23] sm:$0x1]
    %v2771 = vld [vmem:[#allocation3 + $0x2b] sm:$0x1]
    %v2772 = vld [vmem:[#allocation3 + $0x33] sm:$0x1]
    %v2773 = vld [vmem:[#allocation3 + $0x3b] sm:$0x1]
    %vm2774 = vcmp.gt.f32.partialorder %v2766, 0.0
    %vm2775 = vcmp.gt.f32.partialorder %v2767, 0.0
    %vm2776 = vcmp.gt.f32.partialorder %v2768, 0.0
    %vm2777 = vcmp.gt.f32.partialorder %v2769, 0.0
    %vm2778 = vcmp.gt.f32.partialorder %v2770, 0.0
    %vm2779 = vcmp.gt.f32.partialorder %v2771, 0.0
    %vm2780 = vcmp.gt.f32.partialorder %v2772, 0.0
    %vm2781 = vcmp.gt.f32.partialorder %v2773, 0.0
    %v2782 = vsel %vm2774, %v2758, %v2123
    %v2783 = vsel %vm2775, %v2759, %v2124
    %v2784 = vsel %vm2776, %v2760, %v2125
    %v2785 = vsel %vm2777, %v2761, %v2126
    %v2786 = vsel %vm2778, %v2762, %v2127
    %v2787 = vsel %vm2779, %v2763, %v2128
    %v2788 = vsel %vm2780, %v2764, %v2129
    %v2789 = vsel %vm2781, %v2765, %v2130
    %v2798 = vlaneseq
    %v2799 = vshrl.u32 %v2798, 7
    %v2800 = vsub.s32 0, %v2799
    %v2801 = vrot.slane %v2686, %v2800
    %v2802 = vlaneseq
    %v2803 = vshrl.u32 %v2802, 7
    %v2804 = vsub.s32 0, %v2803
    %v2805 = vrot.slane %v2687, %v2804
    %v2806 = vlaneseq
    %v2807 = vshrl.u32 %v2806, 7
    %v2808 = vsub.s32 0, %v2807
    %v2809 = vrot.slane %v2688, %v2808
    %v2810 = vlaneseq
    %v2811 = vshrl.u32 %v2810, 7
    %v2812 = vsub.s32 0, %v2811
    %v2813 = vrot.slane %v2689, %v2812
    %v2814 = vlaneseq
    %v2815 = vshrl.u32 %v2814, 7
    %v2816 = vsub.s32 0, %v2815
    %v2817 = vrot.slane %v2690, %v2816
    %v2818 = vlaneseq
    %v2819 = vshrl.u32 %v2818, 7
    %v2820 = vsub.s32 0, %v2819
    %v2821 = vrot.slane %v2691, %v2820
    %v2822 = vlaneseq
    %v2823 = vshrl.u32 %v2822, 7
    %v2824 = vsub.s32 0, %v2823
    %v2825 = vrot.slane %v2692, %v2824
    %v2826 = vlaneseq
    %v2827 = vshrl.u32 %v2826, 7
    %v2828 = vsub.s32 0, %v2827
    %v2829 = vrot.slane %v2693, %v2828
    %2830 = vrot.lane.b32.xlu0 %v2801, 64
    %v2831 = vpop.permute.xlu0 %2830
    %2832 = vrot.lane.b32.xlu0 %v2805, 64
    %v2833 = vpop.permute.xlu0 %2832
    %2834 = vrot.lane.b32.xlu0 %v2809, 64
    %v2835 = vpop.permute.xlu0 %2834
    %2836 = vrot.lane.b32.xlu0 %v2813, 64
    %v2837 = vpop.permute.xlu0 %2836
    %2838 = vrot.lane.b32.xlu0 %v2817, 64
    %v2839 = vpop.permute.xlu0 %2838
    %2840 = vrot.lane.b32.xlu0 %v2821, 64
    %v2841 = vpop.permute.xlu0 %2840
    %2842 = vrot.lane.b32.xlu0 %v2825, 64
    %v2843 = vpop.permute.xlu0 %2842
    %2844 = vrot.lane.b32.xlu0 %v2829, 64
    %v2845 = vpop.permute.xlu0 %2844
    %v2854 = vsel %vm2774, %v2831, %v2195
    %v2855 = vsel %vm2775, %v2833, %v2196
    %v2856 = vsel %vm2776, %v2835, %v2197
    %v2857 = vsel %vm2777, %v2837, %v2198
    %v2858 = vsel %vm2778, %v2839, %v2199
    %v2859 = vsel %vm2779, %v2841, %v2200
    %v2860 = vsel %vm2780, %v2843, %v2201
    %v2861 = vsel %vm2781, %v2845, %v2202
    %2862 = vst.msk [vmem:[#allocation4 + $0x3] sm:$0x1] %vm876, %v2782
    %2863 = vst.msk [vmem:[#allocation4 + $0xb] sm:$0x1] %vm876, %v2783
    %2864 = vst.msk [vmem:[#allocation4 + $0x13] sm:$0x1] %vm876, %v2784
    %2865 = vst.msk [vmem:[#allocation4 + $0x1b] sm:$0x1] %vm876, %v2785
    %2866 = vst.msk [vmem:[#allocation4 + $0x23] sm:$0x1] %vm876, %v2786
    %2867 = vst.msk [vmem:[#allocation4 + $0x2b] sm:$0x1] %vm876, %v2787
    %2868 = vst.msk [vmem:[#allocation4 + $0x33] sm:$0x1] %vm876, %v2788
    %2869 = vst.msk [vmem:[#allocation4 + $0x3b] sm:$0x1] %vm876, %v2789
    %2870 = vst.msk [vmem:[#allocation4 + $0x4] sm:$0x1] %vm885, %v2782
    %2871 = vst.msk [vmem:[#allocation4 + $0xc] sm:$0x1] %vm885, %v2783
    %2872 = vst.msk [vmem:[#allocation4 + $0x14] sm:$0x1] %vm885, %v2784
    %2873 = vst.msk [vmem:[#allocation4 + $0x1c] sm:$0x1] %vm885, %v2785
    %2874 = vst.msk [vmem:[#allocation4 + $0x24] sm:$0x1] %vm885, %v2786
    %2875 = vst.msk [vmem:[#allocation4 + $0x2c] sm:$0x1] %vm885, %v2787
    %2876 = vst.msk [vmem:[#allocation4 + $0x34] sm:$0x1] %vm885, %v2788
    %2877 = vst.msk [vmem:[#allocation4 + $0x3c] sm:$0x1] %vm885, %v2789
    %s2878 = scalar_lea.vmem [#allocation2], 4
    %v2879 = vld [vmem:[%s2878] ss:$8 sm:$0x3]
    %s2880 = scalar_lea.vmem [#allocation2], 20
    %v2881 = vld [vmem:[%s2880] ss:$8 sm:$0x3]
    %s2882 = scalar_lea.vmem [#allocation2], 36
    %v2883 = vld [vmem:[%s2882] ss:$8 sm:$0x3]
    %s2884 = scalar_lea.vmem [#allocation2], 52
    %v2885 = vld [vmem:[%s2884] ss:$8 sm:$0x3]
    %s2886 = scalar_lea.vmem [#allocation2], 68
    %v2887 = vld [vmem:[%s2886] ss:$8 sm:$0x3]
    %s2888 = scalar_lea.vmem [#allocation2], 84
    %v2889 = vld [vmem:[%s2888] ss:$8 sm:$0x3]
    %s2890 = scalar_lea.vmem [#allocation2], 100
    %v2891 = vld [vmem:[%s2890] ss:$8 sm:$0x3]
    %s2892 = scalar_lea.vmem [#allocation2], 116
    %v2893 = vld [vmem:[%s2892] ss:$8 sm:$0x3]
    %v2902 = vrot.slane %v2783, 7
    %v2903 = vsel %vm919, %v2902, %v2782
    %v2904 = vrot.slane %v2784, 6
    %v2905 = vsel %vm922, %v2904, %v2903
    %v2906 = vrot.slane %v2785, 5
    %v2907 = vsel %vm925, %v2906, %v2905
    %v2908 = vrot.slane %v2786, 4
    %v2909 = vsel %vm928, %v2908, %v2907
    %v2910 = vrot.slane %v2787, 3
    %v2911 = vsel %vm931, %v2910, %v2909
    %v2912 = vrot.slane %v2788, 2
    %v2913 = vsel %vm934, %v2912, %v2911
    %v2914 = vrot.slane %v2789, 1
    %v2915 = vsel %vm937, %v2914, %v2913
    %v2916 = vsel %vm97, %v2915, 0
    %2918 = vmatprep.subr.mxu0 0.0
    %2919 = vmatpush1.msra.mxu0 0.0
    %2920 = vmatprep.subr.mxu0 0.0
    %2921 = vmatpush1.msra.mxu0 0.0
    %2922 = vmatprep.subr.mxu0 0.0
    %2923 = vmatpush1.msra.mxu0 0.0
    %2924 = vmatprep.subr.mxu0 0.0
    %2925 = vmatpush1.msra.mxu0 0.0
    %2926 = vmatprep.subr.mxu0 0.0
    %2927 = vmatpush1.msra.mxu0 0.0
    %2928 = vmatprep.subr.mxu0 0.0
    %2929 = vmatpush1.msra.mxu0 0.0
    %2930 = vmatprep.subr.mxu0 0.0
    %2931 = vmatpush1.msra.mxu0 0.0
    %2932 = vmatprep.subr.mxu0 0.0
    %2933 = vmatpush1.msra.mxu0 0.0
    %2934 = vmatprep.subr.mxu0 %v398
    %2935 = vmatpush1.msra.mxu0 %v397
    %2936 = vmatprep.subr.mxu0 %v396
    %2937 = vmatpush1.msra.mxu0 %v395
    %2938 = vmatprep.subr.mxu0 %v394
    %2939 = vmatpush1.msra.mxu0 %v393
    %2940 = vmatprep.subr.mxu0 %v392
    %2941 = vmatpush1.msra.mxu0 %v391
    %2942 = vmatprep.subr.mxu0 %v390
    %2943 = vmatpush1.msra.mxu0 %v389
    %2944 = vmatprep.subr.mxu0 %v388
    %2945 = vmatpush1.msra.mxu0 %v387
    %2946 = vmatprep.subr.mxu0 %v386
    %2947 = vmatpush1.msra.mxu0 %v385
    %2948 = vmatprep.subr.mxu0 %v384
    %2949 = vmatpush1.msra.mxu0 %v383
    %2950 = vmatprep.subr.mxu0 0.0
    %2951 = vmatpush2.msra.mxu0 0.0
    %2952 = vmatprep.subr.mxu0 0.0
    %2953 = vmatpush2.msra.mxu0 0.0
    %2954 = vmatprep.subr.mxu0 0.0
    %2955 = vmatpush2.msra.mxu0 0.0
    %2956 = vmatprep.subr.mxu0 0.0
    %2957 = vmatpush2.msra.mxu0 0.0
    %2958 = vmatprep.subr.mxu0 0.0
    %2959 = vmatpush2.msra.mxu0 0.0
    %2960 = vmatprep.subr.mxu0 0.0
    %2961 = vmatpush2.msra.mxu0 0.0
    %2962 = vmatprep.subr.mxu0 0.0
    %2963 = vmatpush2.msra.mxu0 0.0
    %2964 = vmatprep.subr.mxu0 0.0
    %2965 = vmatpush2.msra.mxu0 0.0
    %2966 = vmatprep.subr.mxu0 0.0
    %2967 = vmatpush2.msra.mxu0 0.0
    %2968 = vmatprep.subr.mxu0 0.0
    %2969 = vmatpush2.msra.mxu0 0.0
    %2970 = vmatprep.subr.mxu0 0.0
    %2971 = vmatpush2.msra.mxu0 0.0
    %2972 = vmatprep.subr.mxu0 0.0
    %2973 = vmatpush2.msra.mxu0 0.0
    %2974 = vmatprep.subr.mxu0 0.0
    %2975 = vmatpush2.msra.mxu0 0.0
    %2976 = vmatprep.subr.mxu0 0.0
    %2977 = vmatpush2.msra.mxu0 0.0
    %2978 = vmatprep.subr.mxu0 0.0
    %2979 = vmatpush2.msra.mxu0 0.0
    %2980 = vmatprep.subr.mxu0 0.0
    %2981 = vmatpush2.msra.mxu0 0.0
    %2982 = vmatprep.mubr.f32.mxu0 0.0
    %2983 = vmatmul.mubr.f32.gmra.mxu0 %v2916
    %v2984 = vpop.f32.mrf.mxu0
    %v2985 = vadd.f32 0.0, %v2984
    %v2986 = vpop.f32.mrf.mxu0
    %v2987 = vadd.f32 0.0, %v2986
    %2988 = vdwg.mxu0
    %v2991 = vcombine.low %v2985, %v2987
    %v2992 = vcombine.high %v2985, %v2987
    %v2994 = vunpack.c.l.s4 1966171168
    %v2995 = vunpack.c.0.s8 %v2994
    %v2996 = vlaneseq
    %v2997 = vshrl.u32 %v2996, 7
    %v2998 = vsub.s32 %v2995, %v2997
    %v2999 = vrot.slane %v2991, %v2998
    %v3001 = vunpack.c.l.s4 1966171168
    %v3002 = vunpack.c.0.s8 %v3001
    %v3003 = vlaneseq
    %v3004 = vshrl.u32 %v3003, 7
    %v3005 = vsub.s32 %v3002, %v3004
    %v3006 = vrot.slane %v2992, %v3005
    %v3007 = vcombine.high %v2999, %v2999
    %v3008 = vcombine.high %v3006, %v3006
    %v3010 = vunpack.c.l.s4 1966171168
    %v3011 = vunpack.c.0.s8 %v3010
    %v3012 = vlaneseq
    %v3013 = vshrl.u32 %v3012, 7
    %v3014 = vsub.s32 %v3011, %v3013
    %v3015 = vrot.slane %v2999, %v3014
    %v3017 = vunpack.c.l.s4 1966171168
    %v3018 = vunpack.c.0.s8 %v3017
    %v3019 = vlaneseq
    %v3020 = vshrl.u32 %v3019, 7
    %v3021 = vsub.s32 %v3018, %v3020
    %v3022 = vrot.slane %v3006, %v3021
    %v3024 = vunpack.c.l.s4 1966171168
    %v3025 = vunpack.c.0.s8 %v3024
    %v3026 = vlaneseq
    %v3027 = vshrl.u32 %v3026, 7
    %v3028 = vsub.s32 %v3025, %v3027
    %v3029 = vrot.slane %v3007, %v3028
    %v3031 = vunpack.c.l.s4 1966171168
    %v3032 = vunpack.c.0.s8 %v3031
    %v3033 = vlaneseq
    %v3034 = vshrl.u32 %v3033, 7
    %v3035 = vsub.s32 %v3032, %v3034
    %v3036 = vrot.slane %v3008, %v3035
    %v3037 = vcombine.high %v3015, %v3015
    %v3038 = vcombine.high %v3022, %v3022
    %v3039 = vcombine.high %v3029, %v3029
    %v3040 = vcombine.high %v3036, %v3036
    %v3049 = vadd.f32 %v2879, %v3015
    %v3050 = vadd.f32 %v2881, %v3029
    %v3051 = vadd.f32 %v2883, %v3037
    %v3052 = vadd.f32 %v2885, %v3039
    %v3053 = vadd.f32 %v2887, %v3022
    %v3054 = vadd.f32 %v2889, %v3036
    %v3055 = vadd.f32 %v2891, %v3038
    %v3056 = vadd.f32 %v2893, %v3040
    %v3057 = vxor.u32 %v3049, 2147483648
    %v3058 = vxor.u32 %v3050, 2147483648
    %v3059 = vxor.u32 %v3051, 2147483648
    %v3060 = vxor.u32 %v3052, 2147483648
    %v3061 = vxor.u32 %v3053, 2147483648
    %v3062 = vxor.u32 %v3054, 2147483648
    %v3063 = vxor.u32 %v3055, 2147483648
    %v3064 = vxor.u32 %v3056, 2147483648
    %v3065 = vmul.f32 %v3057, 1.442695
    %v3066 = vpow.pop %v3065
    %v3067 = vmul.f32 %v3058, 1.442695
    %v3068 = vpow.pop %v3067
    %v3069 = vmul.f32 %v3059, 1.442695
    %v3070 = vpow.pop %v3069
    %v3071 = vmul.f32 %v3060, 1.442695
    %v3072 = vpow.pop %v3071
    %v3073 = vmul.f32 %v3061, 1.442695
    %v3074 = vpow.pop %v3073
    %v3075 = vmul.f32 %v3062, 1.442695
    %v3076 = vpow.pop %v3075
    %v3077 = vmul.f32 %v3063, 1.442695
    %v3078 = vpow.pop %v3077
    %v3079 = vmul.f32 %v3064, 1.442695
    %v3080 = vpow.pop %v3079
    %v3081 = vadd.f32 %v3066, 1.0
    %v3082 = vadd.f32 %v3068, 1.0
    %v3083 = vadd.f32 %v3070, 1.0
    %v3084 = vadd.f32 %v3072, 1.0
    %v3085 = vadd.f32 %v3074, 1.0
    %v3086 = vadd.f32 %v3076, 1.0
    %v3087 = vadd.f32 %v3078, 1.0
    %v3088 = vadd.f32 %v3080, 1.0
    %v3089 = vrcp.pop %v3081
    %v3090 = vmul.f32 1.0, %v3089
    %v3091 = vrcp.pop %v3082
    %v3092 = vmul.f32 1.0, %v3091
    %v3093 = vrcp.pop %v3083
    %v3094 = vmul.f32 1.0, %v3093
    %v3095 = vrcp.pop %v3084
    %v3096 = vmul.f32 1.0, %v3095
    %v3097 = vrcp.pop %v3085
    %v3098 = vmul.f32 1.0, %v3097
    %v3099 = vrcp.pop %v3086
    %v3100 = vmul.f32 1.0, %v3099
    %v3101 = vrcp.pop %v3087
    %v3102 = vmul.f32 1.0, %v3101
    %v3103 = vrcp.pop %v3088
    %v3104 = vmul.f32 1.0, %v3103
    %3113 = vrot.lane.b32.xlu0 %v3049, 64
    %v3114 = vpop.permute.xlu0 %3113
    %3115 = vrot.lane.b32.xlu0 %v3050, 64
    %v3116 = vpop.permute.xlu0 %3115
    %3117 = vrot.lane.b32.xlu0 %v3051, 64
    %v3118 = vpop.permute.xlu0 %3117
    %3119 = vrot.lane.b32.xlu0 %v3052, 64
    %v3120 = vpop.permute.xlu0 %3119
    %3121 = vrot.lane.b32.xlu0 %v3053, 64
    %v3122 = vpop.permute.xlu0 %3121
    %3123 = vrot.lane.b32.xlu0 %v3054, 64
    %v3124 = vpop.permute.xlu0 %3123
    %3125 = vrot.lane.b32.xlu0 %v3055, 64
    %v3126 = vpop.permute.xlu0 %3125
    %3127 = vrot.lane.b32.xlu0 %v3056, 64
    %v3128 = vpop.permute.xlu0 %3127
    %v3129 = vrot.slane %v3114, 1
    %v3130 = vrot.slane %v3116, 1
    %v3131 = vrot.slane %v3118, 1
    %v3132 = vrot.slane %v3120, 1
    %v3133 = vrot.slane %v3122, 1
    %v3134 = vrot.slane %v3124, 1
    %v3135 = vrot.slane %v3126, 1
    %v3136 = vrot.slane %v3128, 1
    %v3145 = vtanh.pop %v3129
    %v3146 = vtanh.pop %v3130
    %v3147 = vtanh.pop %v3131
    %v3148 = vtanh.pop %v3132
    %v3149 = vtanh.pop %v3133
    %v3150 = vtanh.pop %v3134
    %v3151 = vtanh.pop %v3135
    %v3152 = vtanh.pop %v3136
    %v3162 = vunpack.c.l.s4 1966171168
    %v3163 = vunpack.c.0.s8 %v3162
    %v3164 = vlaneseq
    %v3165 = vshrl.u32 %v3164, 7
    %v3166 = vsub.s32 %v3163, %v3165
    %v3167 = vrot.slane %v2854, %v3166
    %v3169 = vunpack.c.l.s4 1966171168
    %v3170 = vunpack.c.0.s8 %v3169
    %v3171 = vlaneseq
    %v3172 = vshrl.u32 %v3171, 7
    %v3173 = vsub.s32 %v3170, %v3172
    %v3174 = vrot.slane %v3167, %v3173
    %v3176 = vunpack.c.l.s4 1966171168
    %v3177 = vunpack.c.0.s8 %v3176
    %v3178 = vlaneseq
    %v3179 = vshrl.u32 %v3178, 7
    %v3180 = vsub.s32 %v3177, %v3179
    %v3181 = vrot.slane %v2855, %v3180
    %v3183 = vunpack.c.l.s4 1966171168
    %v3184 = vunpack.c.0.s8 %v3183
    %v3185 = vlaneseq
    %v3186 = vshrl.u32 %v3185, 7
    %v3187 = vsub.s32 %v3184, %v3186
    %v3188 = vrot.slane %v3181, %v3187
    %v3190 = vunpack.c.l.s4 1966171168
    %v3191 = vunpack.c.0.s8 %v3190
    %v3192 = vlaneseq
    %v3193 = vshrl.u32 %v3192, 7
    %v3194 = vsub.s32 %v3191, %v3193
    %v3195 = vrot.slane %v2856, %v3194
    %v3197 = vunpack.c.l.s4 1966171168
    %v3198 = vunpack.c.0.s8 %v3197
    %v3199 = vlaneseq
    %v3200 = vshrl.u32 %v3199, 7
    %v3201 = vsub.s32 %v3198, %v3200
    %v3202 = vrot.slane %v3195, %v3201
    %v3204 = vunpack.c.l.s4 1966171168
    %v3205 = vunpack.c.0.s8 %v3204
    %v3206 = vlaneseq
    %v3207 = vshrl.u32 %v3206, 7
    %v3208 = vsub.s32 %v3205, %v3207
    %v3209 = vrot.slane %v2857, %v3208
    %v3211 = vunpack.c.l.s4 1966171168
    %v3212 = vunpack.c.0.s8 %v3211
    %v3213 = vlaneseq
    %v3214 = vshrl.u32 %v3213, 7
    %v3215 = vsub.s32 %v3212, %v3214
    %v3216 = vrot.slane %v3209, %v3215
    %v3218 = vunpack.c.l.s4 1966171168
    %v3219 = vunpack.c.0.s8 %v3218
    %v3220 = vlaneseq
    %v3221 = vshrl.u32 %v3220, 7
    %v3222 = vsub.s32 %v3219, %v3221
    %v3223 = vrot.slane %v2858, %v3222
    %v3225 = vunpack.c.l.s4 1966171168
    %v3226 = vunpack.c.0.s8 %v3225
    %v3227 = vlaneseq
    %v3228 = vshrl.u32 %v3227, 7
    %v3229 = vsub.s32 %v3226, %v3228
    %v3230 = vrot.slane %v3223, %v3229
    %v3232 = vunpack.c.l.s4 1966171168
    %v3233 = vunpack.c.0.s8 %v3232
    %v3234 = vlaneseq
    %v3235 = vshrl.u32 %v3234, 7
    %v3236 = vsub.s32 %v3233, %v3235
    %v3237 = vrot.slane %v2859, %v3236
    %v3239 = vunpack.c.l.s4 1966171168
    %v3240 = vunpack.c.0.s8 %v3239
    %v3241 = vlaneseq
    %v3242 = vshrl.u32 %v3241, 7
    %v3243 = vsub.s32 %v3240, %v3242
    %v3244 = vrot.slane %v3237, %v3243
    %v3246 = vunpack.c.l.s4 1966171168
    %v3247 = vunpack.c.0.s8 %v3246
    %v3248 = vlaneseq
    %v3249 = vshrl.u32 %v3248, 7
    %v3250 = vsub.s32 %v3247, %v3249
    %v3251 = vrot.slane %v2860, %v3250
    %v3253 = vunpack.c.l.s4 1966171168
    %v3254 = vunpack.c.0.s8 %v3253
    %v3255 = vlaneseq
    %v3256 = vshrl.u32 %v3255, 7
    %v3257 = vsub.s32 %v3254, %v3256
    %v3258 = vrot.slane %v3251, %v3257
    %v3260 = vunpack.c.l.s4 1966171168
    %v3261 = vunpack.c.0.s8 %v3260
    %v3262 = vlaneseq
    %v3263 = vshrl.u32 %v3262, 7
    %v3264 = vsub.s32 %v3261, %v3263
    %v3265 = vrot.slane %v2861, %v3264
    %v3267 = vunpack.c.l.s4 1966171168
    %v3268 = vunpack.c.0.s8 %v3267
    %v3269 = vlaneseq
    %v3270 = vshrl.u32 %v3269, 7
    %v3271 = vsub.s32 %v3268, %v3270
    %v3272 = vrot.slane %v3265, %v3271
    %3273 = vrot.lane.b32.xlu0 %v3174, 64
    %v3274 = vpop.permute.xlu0 %3273
    %3275 = vrot.lane.b32.xlu0 %v3188, 64
    %v3276 = vpop.permute.xlu0 %3275
    %3277 = vrot.lane.b32.xlu0 %v3202, 64
    %v3278 = vpop.permute.xlu0 %3277
    %3279 = vrot.lane.b32.xlu0 %v3216, 64
    %v3280 = vpop.permute.xlu0 %3279
    %3281 = vrot.lane.b32.xlu0 %v3230, 64
    %v3282 = vpop.permute.xlu0 %3281
    %3283 = vrot.lane.b32.xlu0 %v3244, 64
    %v3284 = vpop.permute.xlu0 %3283
    %3285 = vrot.lane.b32.xlu0 %v3258, 64
    %v3286 = vpop.permute.xlu0 %3285
    %3287 = vrot.lane.b32.xlu0 %v3272, 64
    %v3288 = vpop.permute.xlu0 %3287
    %v3297 = vmul.f32 %v3090, %v3274
    %v3298 = vmul.f32 %v3092, %v3276
    %v3299 = vmul.f32 %v3094, %v3278
    %v3300 = vmul.f32 %v3096, %v3280
    %v3301 = vmul.f32 %v3098, %v3282
    %v3302 = vmul.f32 %v3100, %v3284
    %v3303 = vmul.f32 %v3102, %v3286
    %v3304 = vmul.f32 %v3104, %v3288
    %v3305 = vmul.f32 %v3090, %v3145
    %v3306 = vmul.f32 %v3092, %v3146
    %v3307 = vmul.f32 %v3094, %v3147
    %v3308 = vmul.f32 %v3096, %v3148
    %v3309 = vmul.f32 %v3098, %v3149
    %v3310 = vmul.f32 %v3100, %v3150
    %v3311 = vmul.f32 %v3102, %v3151
    %v3312 = vmul.f32 %v3104, %v3152
    %3321 = vrot.lane.b32.xlu0 %v3305, 64
    %v3322 = vpop.permute.xlu0 %3321
    %3323 = vrot.lane.b32.xlu0 %v3306, 64
    %v3324 = vpop.permute.xlu0 %3323
    %3325 = vrot.lane.b32.xlu0 %v3307, 64
    %v3326 = vpop.permute.xlu0 %3325
    %3327 = vrot.lane.b32.xlu0 %v3308, 64
    %v3328 = vpop.permute.xlu0 %3327
    %3329 = vrot.lane.b32.xlu0 %v3309, 64
    %v3330 = vpop.permute.xlu0 %3329
    %3331 = vrot.lane.b32.xlu0 %v3310, 64
    %v3332 = vpop.permute.xlu0 %3331
    %3333 = vrot.lane.b32.xlu0 %v3311, 64
    %v3334 = vpop.permute.xlu0 %3333
    %3335 = vrot.lane.b32.xlu0 %v3312, 64
    %v3336 = vpop.permute.xlu0 %3335
    %v3345 = vadd.f32 %v3297, %v3322
    %v3346 = vadd.f32 %v3298, %v3324
    %v3347 = vadd.f32 %v3299, %v3326
    %v3348 = vadd.f32 %v3300, %v3328
    %v3349 = vadd.f32 %v3301, %v3330
    %v3350 = vadd.f32 %v3302, %v3332
    %v3351 = vadd.f32 %v3303, %v3334
    %v3352 = vadd.f32 %v3304, %v3336
    %v3353 = vtanh.pop %v3345
    %v3354 = vtanh.pop %v3346
    %v3355 = vtanh.pop %v3347
    %v3356 = vtanh.pop %v3348
    %v3357 = vtanh.pop %v3349
    %v3358 = vtanh.pop %v3350
    %v3359 = vtanh.pop %v3351
    %v3360 = vtanh.pop %v3352
    %v3369 = vrot.slane %v3090, 1
    %v3370 = vrot.slane %v3092, 1
    %v3371 = vrot.slane %v3094, 1
    %v3372 = vrot.slane %v3096, 1
    %v3373 = vrot.slane %v3098, 1
    %v3374 = vrot.slane %v3100, 1
    %v3375 = vrot.slane %v3102, 1
    %v3376 = vrot.slane %v3104, 1
    %3393 = vrot.lane.b32.xlu0 %v3353, 64
    %v3394 = vpop.permute.xlu0 %3393
    %3395 = vrot.lane.b32.xlu0 %v3354, 64
    %v3396 = vpop.permute.xlu0 %3395
    %3397 = vrot.lane.b32.xlu0 %v3355, 64
    %v3398 = vpop.permute.xlu0 %3397
    %3399 = vrot.lane.b32.xlu0 %v3356, 64
    %v3400 = vpop.permute.xlu0 %3399
    %3401 = vrot.lane.b32.xlu0 %v3357, 64
    %v3402 = vpop.permute.xlu0 %3401
    %3403 = vrot.lane.b32.xlu0 %v3358, 64
    %v3404 = vpop.permute.xlu0 %3403
    %3405 = vrot.lane.b32.xlu0 %v3359, 64
    %v3406 = vpop.permute.xlu0 %3405
    %3407 = vrot.lane.b32.xlu0 %v3360, 64
    %v3408 = vpop.permute.xlu0 %3407
    %v3417 = vmul.f32 %v3369, %v3394
    %v3418 = vmul.f32 %v3370, %v3396
    %v3419 = vmul.f32 %v3371, %v3398
    %v3420 = vmul.f32 %v3372, %v3400
    %v3421 = vmul.f32 %v3373, %v3402
    %v3422 = vmul.f32 %v3374, %v3404
    %v3423 = vmul.f32 %v3375, %v3406
    %v3424 = vmul.f32 %v3376, %v3408
    %v3425 = vld [vmem:[#allocation3 + $0x4] sm:$0x1]
    %v3426 = vld [vmem:[#allocation3 + $0xc] sm:$0x1]
    %v3427 = vld [vmem:[#allocation3 + $0x14] sm:$0x1]
    %v3428 = vld [vmem:[#allocation3 + $0x1c] sm:$0x1]
    %v3429 = vld [vmem:[#allocation3 + $0x24] sm:$0x1]
    %v3430 = vld [vmem:[#allocation3 + $0x2c] sm:$0x1]
    %v3431 = vld [vmem:[#allocation3 + $0x34] sm:$0x1]
    %v3432 = vld [vmem:[#allocation3 + $0x3c] sm:$0x1]
    %vm3433 = vcmp.gt.f32.partialorder %v3425, 0.0
    %vm3434 = vcmp.gt.f32.partialorder %v3426, 0.0
    %vm3435 = vcmp.gt.f32.partialorder %v3427, 0.0
    %vm3436 = vcmp.gt.f32.partialorder %v3428, 0.0
    %vm3437 = vcmp.gt.f32.partialorder %v3429, 0.0
    %vm3438 = vcmp.gt.f32.partialorder %v3430, 0.0
    %vm3439 = vcmp.gt.f32.partialorder %v3431, 0.0
    %vm3440 = vcmp.gt.f32.partialorder %v3432, 0.0
    %v3441 = vsel %vm3433, %v3417, %v2782
    %v3442 = vsel %vm3434, %v3418, %v2783
    %v3443 = vsel %vm3435, %v3419, %v2784
    %v3444 = vsel %vm3436, %v3420, %v2785
    %v3445 = vsel %vm3437, %v3421, %v2786
    %v3446 = vsel %vm3438, %v3422, %v2787
    %v3447 = vsel %vm3439, %v3423, %v2788
    %v3448 = vsel %vm3440, %v3424, %v2789
    %v3457 = vlaneseq
    %v3458 = vshrl.u32 %v3457, 7
    %v3459 = vsub.s32 0, %v3458
    %v3460 = vrot.slane %v3345, %v3459
    %v3461 = vlaneseq
    %v3462 = vshrl.u32 %v3461, 7
    %v3463 = vsub.s32 0, %v3462
    %v3464 = vrot.slane %v3346, %v3463
    %v3465 = vlaneseq
    %v3466 = vshrl.u32 %v3465, 7
    %v3467 = vsub.s32 0, %v3466
    %v3468 = vrot.slane %v3347, %v3467
    %v3469 = vlaneseq
    %v3470 = vshrl.u32 %v3469, 7
    %v3471 = vsub.s32 0, %v3470
    %v3472 = vrot.slane %v3348, %v3471
    %v3473 = vlaneseq
    %v3474 = vshrl.u32 %v3473, 7
    %v3475 = vsub.s32 0, %v3474
    %v3476 = vrot.slane %v3349, %v3475
    %v3477 = vlaneseq
    %v3478 = vshrl.u32 %v3477, 7
    %v3479 = vsub.s32 0, %v3478
    %v3480 = vrot.slane %v3350, %v3479
    %v3481 = vlaneseq
    %v3482 = vshrl.u32 %v3481, 7
    %v3483 = vsub.s32 0, %v3482
    %v3484 = vrot.slane %v3351, %v3483
    %v3485 = vlaneseq
    %v3486 = vshrl.u32 %v3485, 7
    %v3487 = vsub.s32 0, %v3486
    %v3488 = vrot.slane %v3352, %v3487
    %3489 = vrot.lane.b32.xlu0 %v3460, 64
    %v3490 = vpop.permute.xlu0 %3489
    %3491 = vrot.lane.b32.xlu0 %v3464, 64
    %v3492 = vpop.permute.xlu0 %3491
    %3493 = vrot.lane.b32.xlu0 %v3468, 64
    %v3494 = vpop.permute.xlu0 %3493
    %3495 = vrot.lane.b32.xlu0 %v3472, 64
    %v3496 = vpop.permute.xlu0 %3495
    %3497 = vrot.lane.b32.xlu0 %v3476, 64
    %v3498 = vpop.permute.xlu0 %3497
    %3499 = vrot.lane.b32.xlu0 %v3480, 64
    %v3500 = vpop.permute.xlu0 %3499
    %3501 = vrot.lane.b32.xlu0 %v3484, 64
    %v3502 = vpop.permute.xlu0 %3501
    %3503 = vrot.lane.b32.xlu0 %v3488, 64
    %v3504 = vpop.permute.xlu0 %3503
    %v3513 = vsel %vm3433, %v3490, %v2854
    %v3514 = vsel %vm3434, %v3492, %v2855
    %v3515 = vsel %vm3435, %v3494, %v2856
    %v3516 = vsel %vm3436, %v3496, %v2857
    %v3517 = vsel %vm3437, %v3498, %v2858
    %v3518 = vsel %vm3438, %v3500, %v2859
    %v3519 = vsel %vm3439, %v3502, %v2860
    %v3520 = vsel %vm3440, %v3504, %v2861
    %3521 = vst.msk [vmem:[#allocation4 + $0x4] sm:$0x1] %vm876, %v3441
    %3522 = vst.msk [vmem:[#allocation4 + $0xc] sm:$0x1] %vm876, %v3442
    %3523 = vst.msk [vmem:[#allocation4 + $0x14] sm:$0x1] %vm876, %v3443
    %3524 = vst.msk [vmem:[#allocation4 + $0x1c] sm:$0x1] %vm876, %v3444
    %3525 = vst.msk [vmem:[#allocation4 + $0x24] sm:$0x1] %vm876, %v3445
    %3526 = vst.msk [vmem:[#allocation4 + $0x2c] sm:$0x1] %vm876, %v3446
    %3527 = vst.msk [vmem:[#allocation4 + $0x34] sm:$0x1] %vm876, %v3447
    %3528 = vst.msk [vmem:[#allocation4 + $0x3c] sm:$0x1] %vm876, %v3448
    %3529 = vst.msk [vmem:[#allocation4 + $0x3] sm:$0x1] %vm885, %v3441
    %3530 = vst.msk [vmem:[#allocation4 + $0xb] sm:$0x1] %vm885, %v3442
    %3531 = vst.msk [vmem:[#allocation4 + $0x13] sm:$0x1] %vm885, %v3443
    %3532 = vst.msk [vmem:[#allocation4 + $0x1b] sm:$0x1] %vm885, %v3444
    %3533 = vst.msk [vmem:[#allocation4 + $0x23] sm:$0x1] %vm885, %v3445
    %3534 = vst.msk [vmem:[#allocation4 + $0x2b] sm:$0x1] %vm885, %v3446
    %3535 = vst.msk [vmem:[#allocation4 + $0x33] sm:$0x1] %vm885, %v3447
    %3536 = vst.msk [vmem:[#allocation4 + $0x3b] sm:$0x1] %vm885, %v3448
    %s3537 = scalar_lea.vmem [#allocation2], 5
    %v3538 = vld [vmem:[%s3537] ss:$8 sm:$0x3]
    %s3539 = scalar_lea.vmem [#allocation2], 21
    %v3540 = vld [vmem:[%s3539] ss:$8 sm:$0x3]
    %s3541 = scalar_lea.vmem [#allocation2], 37
    %v3542 = vld [vmem:[%s3541] ss:$8 sm:$0x3]
    %s3543 = scalar_lea.vmem [#allocation2], 53
    %v3544 = vld [vmem:[%s3543] ss:$8 sm:$0x3]
    %s3545 = scalar_lea.vmem [#allocation2], 69
    %v3546 = vld [vmem:[%s3545] ss:$8 sm:$0x3]
    %s3547 = scalar_lea.vmem [#allocation2], 85
    %v3548 = vld [vmem:[%s3547] ss:$8 sm:$0x3]
    %s3549 = scalar_lea.vmem [#allocation2], 101
    %v3550 = vld [vmem:[%s3549] ss:$8 sm:$0x3]
    %s3551 = scalar_lea.vmem [#allocation2], 117
    %v3552 = vld [vmem:[%s3551] ss:$8 sm:$0x3]
    %v3561 = vrot.slane %v3442, 7
    %v3562 = vsel %vm919, %v3561, %v3441
    %v3563 = vrot.slane %v3443, 6
    %v3564 = vsel %vm922, %v3563, %v3562
    %v3565 = vrot.slane %v3444, 5
    %v3566 = vsel %vm925, %v3565, %v3564
    %v3567 = vrot.slane %v3445, 4
    %v3568 = vsel %vm928, %v3567, %v3566
    %v3569 = vrot.slane %v3446, 3
    %v3570 = vsel %vm931, %v3569, %v3568
    %v3571 = vrot.slane %v3447, 2
    %v3572 = vsel %vm934, %v3571, %v3570
    %v3573 = vrot.slane %v3448, 1
    %v3574 = vsel %vm937, %v3573, %v3572
    %v3575 = vsel %vm97, %v3574, 0
    %3577 = vmatprep.subr.mxu0 0.0
    %3578 = vmatpush1.msra.mxu0 0.0
    %3579 = vmatprep.subr.mxu0 0.0
    %3580 = vmatpush1.msra.mxu0 0.0
    %3581 = vmatprep.subr.mxu0 0.0
    %3582 = vmatpush1.msra.mxu0 0.0
    %3583 = vmatprep.subr.mxu0 0.0
    %3584 = vmatpush1.msra.mxu0 0.0
    %3585 = vmatprep.subr.mxu0 0.0
    %3586 = vmatpush1.msra.mxu0 0.0
    %3587 = vmatprep.subr.mxu0 0.0
    %3588 = vmatpush1.msra.mxu0 0.0
    %3589 = vmatprep.subr.mxu0 0.0
    %3590 = vmatpush1.msra.mxu0 0.0
    %3591 = vmatprep.subr.mxu0 0.0
    %3592 = vmatpush1.msra.mxu0 0.0
    %3593 = vmatprep.subr.mxu0 %v398
    %3594 = vmatpush1.msra.mxu0 %v397
    %3595 = vmatprep.subr.mxu0 %v396
    %3596 = vmatpush1.msra.mxu0 %v395
    %3597 = vmatprep.subr.mxu0 %v394
    %3598 = vmatpush1.msra.mxu0 %v393
    %3599 = vmatprep.subr.mxu0 %v392
    %3600 = vmatpush1.msra.mxu0 %v391
    %3601 = vmatprep.subr.mxu0 %v390
    %3602 = vmatpush1.msra.mxu0 %v389
    %3603 = vmatprep.subr.mxu0 %v388
    %3604 = vmatpush1.msra.mxu0 %v387
    %3605 = vmatprep.subr.mxu0 %v386
    %3606 = vmatpush1.msra.mxu0 %v385
    %3607 = vmatprep.subr.mxu0 %v384
    %3608 = vmatpush1.msra.mxu0 %v383
    %3609 = vmatprep.subr.mxu0 0.0
    %3610 = vmatpush2.msra.mxu0 0.0
    %3611 = vmatprep.subr.mxu0 0.0
    %3612 = vmatpush2.msra.mxu0 0.0
    %3613 = vmatprep.subr.mxu0 0.0
    %3614 = vmatpush2.msra.mxu0 0.0
    %3615 = vmatprep.subr.mxu0 0.0
    %3616 = vmatpush2.msra.mxu0 0.0
    %3617 = vmatprep.subr.mxu0 0.0
    %3618 = vmatpush2.msra.mxu0 0.0
    %3619 = vmatprep.subr.mxu0 0.0
    %3620 = vmatpush2.msra.mxu0 0.0
    %3621 = vmatprep.subr.mxu0 0.0
    %3622 = vmatpush2.msra.mxu0 0.0
    %3623 = vmatprep.subr.mxu0 0.0
    %3624 = vmatpush2.msra.mxu0 0.0
    %3625 = vmatprep.subr.mxu0 0.0
    %3626 = vmatpush2.msra.mxu0 0.0
    %3627 = vmatprep.subr.mxu0 0.0
    %3628 = vmatpush2.msra.mxu0 0.0
    %3629 = vmatprep.subr.mxu0 0.0
    %3630 = vmatpush2.msra.mxu0 0.0
    %3631 = vmatprep.subr.mxu0 0.0
    %3632 = vmatpush2.msra.mxu0 0.0
    %3633 = vmatprep.subr.mxu0 0.0
    %3634 = vmatpush2.msra.mxu0 0.0
    %3635 = vmatprep.subr.mxu0 0.0
    %3636 = vmatpush2.msra.mxu0 0.0
    %3637 = vmatprep.subr.mxu0 0.0
    %3638 = vmatpush2.msra.mxu0 0.0
    %3639 = vmatprep.subr.mxu0 0.0
    %3640 = vmatpush2.msra.mxu0 0.0
    %3641 = vmatprep.mubr.f32.mxu0 0.0
    %3642 = vmatmul.mubr.f32.gmra.mxu0 %v3575
    %v3643 = vpop.f32.mrf.mxu0
    %v3644 = vadd.f32 0.0, %v3643
    %v3645 = vpop.f32.mrf.mxu0
    %v3646 = vadd.f32 0.0, %v3645
    %3647 = vdwg.mxu0
    %v3650 = vcombine.low %v3644, %v3646
    %v3651 = vcombine.high %v3644, %v3646
    %v3653 = vunpack.c.l.s4 1966171168
    %v3654 = vunpack.c.0.s8 %v3653
    %v3655 = vlaneseq
    %v3656 = vshrl.u32 %v3655, 7
    %v3657 = vsub.s32 %v3654, %v3656
    %v3658 = vrot.slane %v3650, %v3657
    %v3660 = vunpack.c.l.s4 1966171168
    %v3661 = vunpack.c.0.s8 %v3660
    %v3662 = vlaneseq
    %v3663 = vshrl.u32 %v3662, 7
    %v3664 = vsub.s32 %v3661, %v3663
    %v3665 = vrot.slane %v3651, %v3664
    %v3666 = vcombine.high %v3658, %v3658
    %v3667 = vcombine.high %v3665, %v3665
    %v3669 = vunpack.c.l.s4 1966171168
    %v3670 = vunpack.c.0.s8 %v3669
    %v3671 = vlaneseq
    %v3672 = vshrl.u32 %v3671, 7
    %v3673 = vsub.s32 %v3670, %v3672
    %v3674 = vrot.slane %v3658, %v3673
    %v3676 = vunpack.c.l.s4 1966171168
    %v3677 = vunpack.c.0.s8 %v3676
    %v3678 = vlaneseq
    %v3679 = vshrl.u32 %v3678, 7
    %v3680 = vsub.s32 %v3677, %v3679
    %v3681 = vrot.slane %v3665, %v3680
    %v3683 = vunpack.c.l.s4 1966171168
    %v3684 = vunpack.c.0.s8 %v3683
    %v3685 = vlaneseq
    %v3686 = vshrl.u32 %v3685, 7
    %v3687 = vsub.s32 %v3684, %v3686
    %v3688 = vrot.slane %v3666, %v3687
    %v3690 = vunpack.c.l.s4 1966171168
    %v3691 = vunpack.c.0.s8 %v3690
    %v3692 = vlaneseq
    %v3693 = vshrl.u32 %v3692, 7
    %v3694 = vsub.s32 %v3691, %v3693
    %v3695 = vrot.slane %v3667, %v3694
    %v3696 = vcombine.high %v3674, %v3674
    %v3697 = vcombine.high %v3681, %v3681
    %v3698 = vcombine.high %v3688, %v3688
    %v3699 = vcombine.high %v3695, %v3695
    %v3708 = vadd.f32 %v3538, %v3674
    %v3709 = vadd.f32 %v3540, %v3688
    %v3710 = vadd.f32 %v3542, %v3696
    %v3711 = vadd.f32 %v3544, %v3698
    %v3712 = vadd.f32 %v3546, %v3681
    %v3713 = vadd.f32 %v3548, %v3695
    %v3714 = vadd.f32 %v3550, %v3697
    %v3715 = vadd.f32 %v3552, %v3699
    %v3716 = vxor.u32 %v3708, 2147483648
    %v3717 = vxor.u32 %v3709, 2147483648
    %v3718 = vxor.u32 %v3710, 2147483648
    %v3719 = vxor.u32 %v3711, 2147483648
    %v3720 = vxor.u32 %v3712, 2147483648
    %v3721 = vxor.u32 %v3713, 2147483648
    %v3722 = vxor.u32 %v3714, 2147483648
    %v3723 = vxor.u32 %v3715, 2147483648
    %v3724 = vmul.f32 %v3716, 1.442695
    %v3725 = vpow.pop %v3724
    %v3726 = vmul.f32 %v3717, 1.442695
    %v3727 = vpow.pop %v3726
    %v3728 = vmul.f32 %v3718, 1.442695
    %v3729 = vpow.pop %v3728
    %v3730 = vmul.f32 %v3719, 1.442695
    %v3731 = vpow.pop %v3730
    %v3732 = vmul.f32 %v3720, 1.442695
    %v3733 = vpow.pop %v3732
    %v3734 = vmul.f32 %v3721, 1.442695
    %v3735 = vpow.pop %v3734
    %v3736 = vmul.f32 %v3722, 1.442695
    %v3737 = vpow.pop %v3736
    %v3738 = vmul.f32 %v3723, 1.442695
    %v3739 = vpow.pop %v3738
    %v3740 = vadd.f32 %v3725, 1.0
    %v3741 = vadd.f32 %v3727, 1.0
    %v3742 = vadd.f32 %v3729, 1.0
    %v3743 = vadd.f32 %v3731, 1.0
    %v3744 = vadd.f32 %v3733, 1.0
    %v3745 = vadd.f32 %v3735, 1.0
    %v3746 = vadd.f32 %v3737, 1.0
    %v3747 = vadd.f32 %v3739, 1.0
    %v3748 = vrcp.pop %v3740
    %v3749 = vmul.f32 1.0, %v3748
    %v3750 = vrcp.pop %v3741
    %v3751 = vmul.f32 1.0, %v3750
    %v3752 = vrcp.pop %v3742
    %v3753 = vmul.f32 1.0, %v3752
    %v3754 = vrcp.pop %v3743
    %v3755 = vmul.f32 1.0, %v3754
    %v3756 = vrcp.pop %v3744
    %v3757 = vmul.f32 1.0, %v3756
    %v3758 = vrcp.pop %v3745
    %v3759 = vmul.f32 1.0, %v3758
    %v3760 = vrcp.pop %v3746
    %v3761 = vmul.f32 1.0, %v3760
    %v3762 = vrcp.pop %v3747
    %v3763 = vmul.f32 1.0, %v3762
    %3772 = vrot.lane.b32.xlu0 %v3708, 64
    %v3773 = vpop.permute.xlu0 %3772
    %3774 = vrot.lane.b32.xlu0 %v3709, 64
    %v3775 = vpop.permute.xlu0 %3774
    %3776 = vrot.lane.b32.xlu0 %v3710, 64
    %v3777 = vpop.permute.xlu0 %3776
    %3778 = vrot.lane.b32.xlu0 %v3711, 64
    %v3779 = vpop.permute.xlu0 %3778
    %3780 = vrot.lane.b32.xlu0 %v3712, 64
    %v3781 = vpop.permute.xlu0 %3780
    %3782 = vrot.lane.b32.xlu0 %v3713, 64
    %v3783 = vpop.permute.xlu0 %3782
    %3784 = vrot.lane.b32.xlu0 %v3714, 64
    %v3785 = vpop.permute.xlu0 %3784
    %3786 = vrot.lane.b32.xlu0 %v3715, 64
    %v3787 = vpop.permute.xlu0 %3786
    %v3788 = vrot.slane %v3773, 1
    %v3789 = vrot.slane %v3775, 1
    %v3790 = vrot.slane %v3777, 1
    %v3791 = vrot.slane %v3779, 1
    %v3792 = vrot.slane %v3781, 1
    %v3793 = vrot.slane %v3783, 1
    %v3794 = vrot.slane %v3785, 1
    %v3795 = vrot.slane %v3787, 1
    %v3804 = vtanh.pop %v3788
    %v3805 = vtanh.pop %v3789
    %v3806 = vtanh.pop %v3790
    %v3807 = vtanh.pop %v3791
    %v3808 = vtanh.pop %v3792
    %v3809 = vtanh.pop %v3793
    %v3810 = vtanh.pop %v3794
    %v3811 = vtanh.pop %v3795
    %v3821 = vunpack.c.l.s4 1966171168
    %v3822 = vunpack.c.0.s8 %v3821
    %v3823 = vlaneseq
    %v3824 = vshrl.u32 %v3823, 7
    %v3825 = vsub.s32 %v3822, %v3824
    %v3826 = vrot.slane %v3513, %v3825
    %v3828 = vunpack.c.l.s4 1966171168
    %v3829 = vunpack.c.0.s8 %v3828
    %v3830 = vlaneseq
    %v3831 = vshrl.u32 %v3830, 7
    %v3832 = vsub.s32 %v3829, %v3831
    %v3833 = vrot.slane %v3826, %v3832
    %v3835 = vunpack.c.l.s4 1966171168
    %v3836 = vunpack.c.0.s8 %v3835
    %v3837 = vlaneseq
    %v3838 = vshrl.u32 %v3837, 7
    %v3839 = vsub.s32 %v3836, %v3838
    %v3840 = vrot.slane %v3514, %v3839
    %v3842 = vunpack.c.l.s4 1966171168
    %v3843 = vunpack.c.0.s8 %v3842
    %v3844 = vlaneseq
    %v3845 = vshrl.u32 %v3844, 7
    %v3846 = vsub.s32 %v3843, %v3845
    %v3847 = vrot.slane %v3840, %v3846
    %v3849 = vunpack.c.l.s4 1966171168
    %v3850 = vunpack.c.0.s8 %v3849
    %v3851 = vlaneseq
    %v3852 = vshrl.u32 %v3851, 7
    %v3853 = vsub.s32 %v3850, %v3852
    %v3854 = vrot.slane %v3515, %v3853
    %v3856 = vunpack.c.l.s4 1966171168
    %v3857 = vunpack.c.0.s8 %v3856
    %v3858 = vlaneseq
    %v3859 = vshrl.u32 %v3858, 7
    %v3860 = vsub.s32 %v3857, %v3859
    %v3861 = vrot.slane %v3854, %v3860
    %v3863 = vunpack.c.l.s4 1966171168
    %v3864 = vunpack.c.0.s8 %v3863
    %v3865 = vlaneseq
    %v3866 = vshrl.u32 %v3865, 7
    %v3867 = vsub.s32 %v3864, %v3866
    %v3868 = vrot.slane %v3516, %v3867
    %v3870 = vunpack.c.l.s4 1966171168
    %v3871 = vunpack.c.0.s8 %v3870
    %v3872 = vlaneseq
    %v3873 = vshrl.u32 %v3872, 7
    %v3874 = vsub.s32 %v3871, %v3873
    %v3875 = vrot.slane %v3868, %v3874
    %v3877 = vunpack.c.l.s4 1966171168
    %v3878 = vunpack.c.0.s8 %v3877
    %v3879 = vlaneseq
    %v3880 = vshrl.u32 %v3879, 7
    %v3881 = vsub.s32 %v3878, %v3880
    %v3882 = vrot.slane %v3517, %v3881
    %v3884 = vunpack.c.l.s4 1966171168
    %v3885 = vunpack.c.0.s8 %v3884
    %v3886 = vlaneseq
    %v3887 = vshrl.u32 %v3886, 7
    %v3888 = vsub.s32 %v3885, %v3887
    %v3889 = vrot.slane %v3882, %v3888
    %v3891 = vunpack.c.l.s4 1966171168
    %v3892 = vunpack.c.0.s8 %v3891
    %v3893 = vlaneseq
    %v3894 = vshrl.u32 %v3893, 7
    %v3895 = vsub.s32 %v3892, %v3894
    %v3896 = vrot.slane %v3518, %v3895
    %v3898 = vunpack.c.l.s4 1966171168
    %v3899 = vunpack.c.0.s8 %v3898
    %v3900 = vlaneseq
    %v3901 = vshrl.u32 %v3900, 7
    %v3902 = vsub.s32 %v3899, %v3901
    %v3903 = vrot.slane %v3896, %v3902
    %v3905 = vunpack.c.l.s4 1966171168
    %v3906 = vunpack.c.0.s8 %v3905
    %v3907 = vlaneseq
    %v3908 = vshrl.u32 %v3907, 7
    %v3909 = vsub.s32 %v3906, %v3908
    %v3910 = vrot.slane %v3519, %v3909
    %v3912 = vunpack.c.l.s4 1966171168
    %v3913 = vunpack.c.0.s8 %v3912
    %v3914 = vlaneseq
    %v3915 = vshrl.u32 %v3914, 7
    %v3916 = vsub.s32 %v3913, %v3915
    %v3917 = vrot.slane %v3910, %v3916
    %v3919 = vunpack.c.l.s4 1966171168
    %v3920 = vunpack.c.0.s8 %v3919
    %v3921 = vlaneseq
    %v3922 = vshrl.u32 %v3921, 7
    %v3923 = vsub.s32 %v3920, %v3922
    %v3924 = vrot.slane %v3520, %v3923
    %v3926 = vunpack.c.l.s4 1966171168
    %v3927 = vunpack.c.0.s8 %v3926
    %v3928 = vlaneseq
    %v3929 = vshrl.u32 %v3928, 7
    %v3930 = vsub.s32 %v3927, %v3929
    %v3931 = vrot.slane %v3924, %v3930
    %3932 = vrot.lane.b32.xlu0 %v3833, 64
    %v3933 = vpop.permute.xlu0 %3932
    %3934 = vrot.lane.b32.xlu0 %v3847, 64
    %v3935 = vpop.permute.xlu0 %3934
    %3936 = vrot.lane.b32.xlu0 %v3861, 64
    %v3937 = vpop.permute.xlu0 %3936
    %3938 = vrot.lane.b32.xlu0 %v3875, 64
    %v3939 = vpop.permute.xlu0 %3938
    %3940 = vrot.lane.b32.xlu0 %v3889, 64
    %v3941 = vpop.permute.xlu0 %3940
    %3942 = vrot.lane.b32.xlu0 %v3903, 64
    %v3943 = vpop.permute.xlu0 %3942
    %3944 = vrot.lane.b32.xlu0 %v3917, 64
    %v3945 = vpop.permute.xlu0 %3944
    %3946 = vrot.lane.b32.xlu0 %v3931, 64
    %v3947 = vpop.permute.xlu0 %3946
    %v3956 = vmul.f32 %v3749, %v3933
    %v3957 = vmul.f32 %v3751, %v3935
    %v3958 = vmul.f32 %v3753, %v3937
    %v3959 = vmul.f32 %v3755, %v3939
    %v3960 = vmul.f32 %v3757, %v3941
    %v3961 = vmul.f32 %v3759, %v3943
    %v3962 = vmul.f32 %v3761, %v3945
    %v3963 = vmul.f32 %v3763, %v3947
    %v3964 = vmul.f32 %v3749, %v3804
    %v3965 = vmul.f32 %v3751, %v3805
    %v3966 = vmul.f32 %v3753, %v3806
    %v3967 = vmul.f32 %v3755, %v3807
    %v3968 = vmul.f32 %v3757, %v3808
    %v3969 = vmul.f32 %v3759, %v3809
    %v3970 = vmul.f32 %v3761, %v3810
    %v3971 = vmul.f32 %v3763, %v3811
    %3980 = vrot.lane.b32.xlu0 %v3964, 64
    %v3981 = vpop.permute.xlu0 %3980
    %3982 = vrot.lane.b32.xlu0 %v3965, 64
    %v3983 = vpop.permute.xlu0 %3982
    %3984 = vrot.lane.b32.xlu0 %v3966, 64
    %v3985 = vpop.permute.xlu0 %3984
    %3986 = vrot.lane.b32.xlu0 %v3967, 64
    %v3987 = vpop.permute.xlu0 %3986
    %3988 = vrot.lane.b32.xlu0 %v3968, 64
    %v3989 = vpop.permute.xlu0 %3988
    %3990 = vrot.lane.b32.xlu0 %v3969, 64
    %v3991 = vpop.permute.xlu0 %3990
    %3992 = vrot.lane.b32.xlu0 %v3970, 64
    %v3993 = vpop.permute.xlu0 %3992
    %3994 = vrot.lane.b32.xlu0 %v3971, 64
    %v3995 = vpop.permute.xlu0 %3994
    %v4004 = vadd.f32 %v3956, %v3981
    %v4005 = vadd.f32 %v3957, %v3983
    %v4006 = vadd.f32 %v3958, %v3985
    %v4007 = vadd.f32 %v3959, %v3987
    %v4008 = vadd.f32 %v3960, %v3989
    %v4009 = vadd.f32 %v3961, %v3991
    %v4010 = vadd.f32 %v3962, %v3993
    %v4011 = vadd.f32 %v3963, %v3995
    %v4012 = vtanh.pop %v4004
    %v4013 = vtanh.pop %v4005
    %v4014 = vtanh.pop %v4006
    %v4015 = vtanh.pop %v4007
    %v4016 = vtanh.pop %v4008
    %v4017 = vtanh.pop %v4009
    %v4018 = vtanh.pop %v4010
    %v4019 = vtanh.pop %v4011
    %v4028 = vrot.slane %v3749, 1
    %v4029 = vrot.slane %v3751, 1
    %v4030 = vrot.slane %v3753, 1
    %v4031 = vrot.slane %v3755, 1
    %v4032 = vrot.slane %v3757, 1
    %v4033 = vrot.slane %v3759, 1
    %v4034 = vrot.slane %v3761, 1
    %v4035 = vrot.slane %v3763, 1
    %4052 = vrot.lane.b32.xlu0 %v4012, 64
    %v4053 = vpop.permute.xlu0 %4052
    %4054 = vrot.lane.b32.xlu0 %v4013, 64
    %v4055 = vpop.permute.xlu0 %4054
    %4056 = vrot.lane.b32.xlu0 %v4014, 64
    %v4057 = vpop.permute.xlu0 %4056
    %4058 = vrot.lane.b32.xlu0 %v4015, 64
    %v4059 = vpop.permute.xlu0 %4058
    %4060 = vrot.lane.b32.xlu0 %v4016, 64
    %v4061 = vpop.permute.xlu0 %4060
    %4062 = vrot.lane.b32.xlu0 %v4017, 64
    %v4063 = vpop.permute.xlu0 %4062
    %4064 = vrot.lane.b32.xlu0 %v4018, 64
    %v4065 = vpop.permute.xlu0 %4064
    %4066 = vrot.lane.b32.xlu0 %v4019, 64
    %v4067 = vpop.permute.xlu0 %4066
    %v4076 = vmul.f32 %v4028, %v4053
    %v4077 = vmul.f32 %v4029, %v4055
    %v4078 = vmul.f32 %v4030, %v4057
    %v4079 = vmul.f32 %v4031, %v4059
    %v4080 = vmul.f32 %v4032, %v4061
    %v4081 = vmul.f32 %v4033, %v4063
    %v4082 = vmul.f32 %v4034, %v4065
    %v4083 = vmul.f32 %v4035, %v4067
    %v4084 = vld [vmem:[#allocation3 + $0x5] sm:$0x1]
    %v4085 = vld [vmem:[#allocation3 + $0xd] sm:$0x1]
    %v4086 = vld [vmem:[#allocation3 + $0x15] sm:$0x1]
    %v4087 = vld [vmem:[#allocation3 + $0x1d] sm:$0x1]
    %v4088 = vld [vmem:[#allocation3 + $0x25] sm:$0x1]
    %v4089 = vld [vmem:[#allocation3 + $0x2d] sm:$0x1]
    %v4090 = vld [vmem:[#allocation3 + $0x35] sm:$0x1]
    %v4091 = vld [vmem:[#allocation3 + $0x3d] sm:$0x1]
    %vm4092 = vcmp.gt.f32.partialorder %v4084, 0.0
    %vm4093 = vcmp.gt.f32.partialorder %v4085, 0.0
    %vm4094 = vcmp.gt.f32.partialorder %v4086, 0.0
    %vm4095 = vcmp.gt.f32.partialorder %v4087, 0.0
    %vm4096 = vcmp.gt.f32.partialorder %v4088, 0.0
    %vm4097 = vcmp.gt.f32.partialorder %v4089, 0.0
    %vm4098 = vcmp.gt.f32.partialorder %v4090, 0.0
    %vm4099 = vcmp.gt.f32.partialorder %v4091, 0.0
    %v4100 = vsel %vm4092, %v4076, %v3441
    %v4101 = vsel %vm4093, %v4077, %v3442
    %v4102 = vsel %vm4094, %v4078, %v3443
    %v4103 = vsel %vm4095, %v4079, %v3444
    %v4104 = vsel %vm4096, %v4080, %v3445
    %v4105 = vsel %vm4097, %v4081, %v3446
    %v4106 = vsel %vm4098, %v4082, %v3447
    %v4107 = vsel %vm4099, %v4083, %v3448
    %v4116 = vlaneseq
    %v4117 = vshrl.u32 %v4116, 7
    %v4118 = vsub.s32 0, %v4117
    %v4119 = vrot.slane %v4004, %v4118
    %v4120 = vlaneseq
    %v4121 = vshrl.u32 %v4120, 7
    %v4122 = vsub.s32 0, %v4121
    %v4123 = vrot.slane %v4005, %v4122
    %v4124 = vlaneseq
    %v4125 = vshrl.u32 %v4124, 7
    %v4126 = vsub.s32 0, %v4125
    %v4127 = vrot.slane %v4006, %v4126
    %v4128 = vlaneseq
    %v4129 = vshrl.u32 %v4128, 7
    %v4130 = vsub.s32 0, %v4129
    %v4131 = vrot.slane %v4007, %v4130
    %v4132 = vlaneseq
    %v4133 = vshrl.u32 %v4132, 7
    %v4134 = vsub.s32 0, %v4133
    %v4135 = vrot.slane %v4008, %v4134
    %v4136 = vlaneseq
    %v4137 = vshrl.u32 %v4136, 7
    %v4138 = vsub.s32 0, %v4137
    %v4139 = vrot.slane %v4009, %v4138
    %v4140 = vlaneseq
    %v4141 = vshrl.u32 %v4140, 7
    %v4142 = vsub.s32 0, %v4141
    %v4143 = vrot.slane %v4010, %v4142
    %v4144 = vlaneseq
    %v4145 = vshrl.u32 %v4144, 7
    %v4146 = vsub.s32 0, %v4145
    %v4147 = vrot.slane %v4011, %v4146
    %4148 = vrot.lane.b32.xlu0 %v4119, 64
    %v4149 = vpop.permute.xlu0 %4148
    %4150 = vrot.lane.b32.xlu0 %v4123, 64
    %v4151 = vpop.permute.xlu0 %4150
    %4152 = vrot.lane.b32.xlu0 %v4127, 64
    %v4153 = vpop.permute.xlu0 %4152
    %4154 = vrot.lane.b32.xlu0 %v4131, 64
    %v4155 = vpop.permute.xlu0 %4154
    %4156 = vrot.lane.b32.xlu0 %v4135, 64
    %v4157 = vpop.permute.xlu0 %4156
    %4158 = vrot.lane.b32.xlu0 %v4139, 64
    %v4159 = vpop.permute.xlu0 %4158
    %4160 = vrot.lane.b32.xlu0 %v4143, 64
    %v4161 = vpop.permute.xlu0 %4160
    %4162 = vrot.lane.b32.xlu0 %v4147, 64
    %v4163 = vpop.permute.xlu0 %4162
    %v4172 = vsel %vm4092, %v4149, %v3513
    %v4173 = vsel %vm4093, %v4151, %v3514
    %v4174 = vsel %vm4094, %v4153, %v3515
    %v4175 = vsel %vm4095, %v4155, %v3516
    %v4176 = vsel %vm4096, %v4157, %v3517
    %v4177 = vsel %vm4097, %v4159, %v3518
    %v4178 = vsel %vm4098, %v4161, %v3519
    %v4179 = vsel %vm4099, %v4163, %v3520
    %4180 = vst.msk [vmem:[#allocation4 + $0x5] sm:$0x1] %vm876, %v4100
    %4181 = vst.msk [vmem:[#allocation4 + $0xd] sm:$0x1] %vm876, %v4101
    %4182 = vst.msk [vmem:[#allocation4 + $0x15] sm:$0x1] %vm876, %v4102
    %4183 = vst.msk [vmem:[#allocation4 + $0x1d] sm:$0x1] %vm876, %v4103
    %4184 = vst.msk [vmem:[#allocation4 + $0x25] sm:$0x1] %vm876, %v4104
    %4185 = vst.msk [vmem:[#allocation4 + $0x2d] sm:$0x1] %vm876, %v4105
    %4186 = vst.msk [vmem:[#allocation4 + $0x35] sm:$0x1] %vm876, %v4106
    %4187 = vst.msk [vmem:[#allocation4 + $0x3d] sm:$0x1] %vm876, %v4107
    %4188 = vst.msk [vmem:[#allocation4 + $0x2] sm:$0x1] %vm885, %v4100
    %4189 = vst.msk [vmem:[#allocation4 + $0xa] sm:$0x1] %vm885, %v4101
    %4190 = vst.msk [vmem:[#allocation4 + $0x12] sm:$0x1] %vm885, %v4102
    %4191 = vst.msk [vmem:[#allocation4 + $0x1a] sm:$0x1] %vm885, %v4103
    %4192 = vst.msk [vmem:[#allocation4 + $0x22] sm:$0x1] %vm885, %v4104
    %4193 = vst.msk [vmem:[#allocation4 + $0x2a] sm:$0x1] %vm885, %v4105
    %4194 = vst.msk [vmem:[#allocation4 + $0x32] sm:$0x1] %vm885, %v4106
    %4195 = vst.msk [vmem:[#allocation4 + $0x3a] sm:$0x1] %vm885, %v4107
    %s4196 = scalar_lea.vmem [#allocation2], 6
    %v4197 = vld [vmem:[%s4196] ss:$8 sm:$0x3]
    %s4198 = scalar_lea.vmem [#allocation2], 22
    %v4199 = vld [vmem:[%s4198] ss:$8 sm:$0x3]
    %s4200 = scalar_lea.vmem [#allocation2], 38
    %v4201 = vld [vmem:[%s4200] ss:$8 sm:$0x3]
    %s4202 = scalar_lea.vmem [#allocation2], 54
    %v4203 = vld [vmem:[%s4202] ss:$8 sm:$0x3]
    %s4204 = scalar_lea.vmem [#allocation2], 70
    %v4205 = vld [vmem:[%s4204] ss:$8 sm:$0x3]
    %s4206 = scalar_lea.vmem [#allocation2], 86
    %v4207 = vld [vmem:[%s4206] ss:$8 sm:$0x3]
    %s4208 = scalar_lea.vmem [#allocation2], 102
    %v4209 = vld [vmem:[%s4208] ss:$8 sm:$0x3]
    %s4210 = scalar_lea.vmem [#allocation2], 118
    %v4211 = vld [vmem:[%s4210] ss:$8 sm:$0x3]
    %v4220 = vrot.slane %v4101, 7
    %v4221 = vsel %vm919, %v4220, %v4100
    %v4222 = vrot.slane %v4102, 6
    %v4223 = vsel %vm922, %v4222, %v4221
    %v4224 = vrot.slane %v4103, 5
    %v4225 = vsel %vm925, %v4224, %v4223
    %v4226 = vrot.slane %v4104, 4
    %v4227 = vsel %vm928, %v4226, %v4225
    %v4228 = vrot.slane %v4105, 3
    %v4229 = vsel %vm931, %v4228, %v4227
    %v4230 = vrot.slane %v4106, 2
    %v4231 = vsel %vm934, %v4230, %v4229
    %v4232 = vrot.slane %v4107, 1
    %v4233 = vsel %vm937, %v4232, %v4231
    %v4234 = vsel %vm97, %v4233, 0
    %4236 = vmatprep.subr.mxu0 0.0
    %4237 = vmatpush1.msra.mxu0 0.0
    %4238 = vmatprep.subr.mxu0 0.0
    %4239 = vmatpush1.msra.mxu0 0.0
    %4240 = vmatprep.subr.mxu0 0.0
    %4241 = vmatpush1.msra.mxu0 0.0
    %4242 = vmatprep.subr.mxu0 0.0
    %4243 = vmatpush1.msra.mxu0 0.0
    %4244 = vmatprep.subr.mxu0 0.0
    %4245 = vmatpush1.msra.mxu0 0.0
    %4246 = vmatprep.subr.mxu0 0.0
    %4247 = vmatpush1.msra.mxu0 0.0
    %4248 = vmatprep.subr.mxu0 0.0
    %4249 = vmatpush1.msra.mxu0 0.0
    %4250 = vmatprep.subr.mxu0 0.0
    %4251 = vmatpush1.msra.mxu0 0.0
    %4252 = vmatprep.subr.mxu0 %v398
    %4253 = vmatpush1.msra.mxu0 %v397
    %4254 = vmatprep.subr.mxu0 %v396
    %4255 = vmatpush1.msra.mxu0 %v395
    %4256 = vmatprep.subr.mxu0 %v394
    %4257 = vmatpush1.msra.mxu0 %v393
    %4258 = vmatprep.subr.mxu0 %v392
    %4259 = vmatpush1.msra.mxu0 %v391
    %4260 = vmatprep.subr.mxu0 %v390
    %4261 = vmatpush1.msra.mxu0 %v389
    %4262 = vmatprep.subr.mxu0 %v388
    %4263 = vmatpush1.msra.mxu0 %v387
    %4264 = vmatprep.subr.mxu0 %v386
    %4265 = vmatpush1.msra.mxu0 %v385
    %4266 = vmatprep.subr.mxu0 %v384
    %4267 = vmatpush1.msra.mxu0 %v383
    %4268 = vmatprep.subr.mxu0 0.0
    %4269 = vmatpush2.msra.mxu0 0.0
    %4270 = vmatprep.subr.mxu0 0.0
    %4271 = vmatpush2.msra.mxu0 0.0
    %4272 = vmatprep.subr.mxu0 0.0
    %4273 = vmatpush2.msra.mxu0 0.0
    %4274 = vmatprep.subr.mxu0 0.0
    %4275 = vmatpush2.msra.mxu0 0.0
    %4276 = vmatprep.subr.mxu0 0.0
    %4277 = vmatpush2.msra.mxu0 0.0
    %4278 = vmatprep.subr.mxu0 0.0
    %4279 = vmatpush2.msra.mxu0 0.0
    %4280 = vmatprep.subr.mxu0 0.0
    %4281 = vmatpush2.msra.mxu0 0.0
    %4282 = vmatprep.subr.mxu0 0.0
    %4283 = vmatpush2.msra.mxu0 0.0
    %4284 = vmatprep.subr.mxu0 0.0
    %4285 = vmatpush2.msra.mxu0 0.0
    %4286 = vmatprep.subr.mxu0 0.0
    %4287 = vmatpush2.msra.mxu0 0.0
    %4288 = vmatprep.subr.mxu0 0.0
    %4289 = vmatpush2.msra.mxu0 0.0
    %4290 = vmatprep.subr.mxu0 0.0
    %4291 = vmatpush2.msra.mxu0 0.0
    %4292 = vmatprep.subr.mxu0 0.0
    %4293 = vmatpush2.msra.mxu0 0.0
    %4294 = vmatprep.subr.mxu0 0.0
    %4295 = vmatpush2.msra.mxu0 0.0
    %4296 = vmatprep.subr.mxu0 0.0
    %4297 = vmatpush2.msra.mxu0 0.0
    %4298 = vmatprep.subr.mxu0 0.0
    %4299 = vmatpush2.msra.mxu0 0.0
    %4300 = vmatprep.mubr.f32.mxu0 0.0
    %4301 = vmatmul.mubr.f32.gmra.mxu0 %v4234
    %v4302 = vpop.f32.mrf.mxu0
    %v4303 = vadd.f32 0.0, %v4302
    %v4304 = vpop.f32.mrf.mxu0
    %v4305 = vadd.f32 0.0, %v4304
    %4306 = vdwg.mxu0
    %v4309 = vcombine.low %v4303, %v4305
    %v4310 = vcombine.high %v4303, %v4305
    %v4312 = vunpack.c.l.s4 1966171168
    %v4313 = vunpack.c.0.s8 %v4312
    %v4314 = vlaneseq
    %v4315 = vshrl.u32 %v4314, 7
    %v4316 = vsub.s32 %v4313, %v4315
    %v4317 = vrot.slane %v4309, %v4316
    %v4319 = vunpack.c.l.s4 1966171168
    %v4320 = vunpack.c.0.s8 %v4319
    %v4321 = vlaneseq
    %v4322 = vshrl.u32 %v4321, 7
    %v4323 = vsub.s32 %v4320, %v4322
    %v4324 = vrot.slane %v4310, %v4323
    %v4325 = vcombine.high %v4317, %v4317
    %v4326 = vcombine.high %v4324, %v4324
    %v4328 = vunpack.c.l.s4 1966171168
    %v4329 = vunpack.c.0.s8 %v4328
    %v4330 = vlaneseq
    %v4331 = vshrl.u32 %v4330, 7
    %v4332 = vsub.s32 %v4329, %v4331
    %v4333 = vrot.slane %v4317, %v4332
    %v4335 = vunpack.c.l.s4 1966171168
    %v4336 = vunpack.c.0.s8 %v4335
    %v4337 = vlaneseq
    %v4338 = vshrl.u32 %v4337, 7
    %v4339 = vsub.s32 %v4336, %v4338
    %v4340 = vrot.slane %v4324, %v4339
    %v4342 = vunpack.c.l.s4 1966171168
    %v4343 = vunpack.c.0.s8 %v4342
    %v4344 = vlaneseq
    %v4345 = vshrl.u32 %v4344, 7
    %v4346 = vsub.s32 %v4343, %v4345
    %v4347 = vrot.slane %v4325, %v4346
    %v4349 = vunpack.c.l.s4 1966171168
    %v4350 = vunpack.c.0.s8 %v4349
    %v4351 = vlaneseq
    %v4352 = vshrl.u32 %v4351, 7
    %v4353 = vsub.s32 %v4350, %v4352
    %v4354 = vrot.slane %v4326, %v4353
    %v4355 = vcombine.high %v4333, %v4333
    %v4356 = vcombine.high %v4340, %v4340
    %v4357 = vcombine.high %v4347, %v4347
    %v4358 = vcombine.high %v4354, %v4354
    %v4367 = vadd.f32 %v4197, %v4333
    %v4368 = vadd.f32 %v4199, %v4347
    %v4369 = vadd.f32 %v4201, %v4355
    %v4370 = vadd.f32 %v4203, %v4357
    %v4371 = vadd.f32 %v4205, %v4340
    %v4372 = vadd.f32 %v4207, %v4354
    %v4373 = vadd.f32 %v4209, %v4356
    %v4374 = vadd.f32 %v4211, %v4358
    %v4375 = vxor.u32 %v4367, 2147483648
    %v4376 = vxor.u32 %v4368, 2147483648
    %v4377 = vxor.u32 %v4369, 2147483648
    %v4378 = vxor.u32 %v4370, 2147483648
    %v4379 = vxor.u32 %v4371, 2147483648
    %v4380 = vxor.u32 %v4372, 2147483648
    %v4381 = vxor.u32 %v4373, 2147483648
    %v4382 = vxor.u32 %v4374, 2147483648
    %v4383 = vmul.f32 %v4375, 1.442695
    %v4384 = vpow.pop %v4383
    %v4385 = vmul.f32 %v4376, 1.442695
    %v4386 = vpow.pop %v4385
    %v4387 = vmul.f32 %v4377, 1.442695
    %v4388 = vpow.pop %v4387
    %v4389 = vmul.f32 %v4378, 1.442695
    %v4390 = vpow.pop %v4389
    %v4391 = vmul.f32 %v4379, 1.442695
    %v4392 = vpow.pop %v4391
    %v4393 = vmul.f32 %v4380, 1.442695
    %v4394 = vpow.pop %v4393
    %v4395 = vmul.f32 %v4381, 1.442695
    %v4396 = vpow.pop %v4395
    %v4397 = vmul.f32 %v4382, 1.442695
    %v4398 = vpow.pop %v4397
    %v4399 = vadd.f32 %v4384, 1.0
    %v4400 = vadd.f32 %v4386, 1.0
    %v4401 = vadd.f32 %v4388, 1.0
    %v4402 = vadd.f32 %v4390, 1.0
    %v4403 = vadd.f32 %v4392, 1.0
    %v4404 = vadd.f32 %v4394, 1.0
    %v4405 = vadd.f32 %v4396, 1.0
    %v4406 = vadd.f32 %v4398, 1.0
    %v4407 = vrcp.pop %v4399
    %v4408 = vmul.f32 1.0, %v4407
    %v4409 = vrcp.pop %v4400
    %v4410 = vmul.f32 1.0, %v4409
    %v4411 = vrcp.pop %v4401
    %v4412 = vmul.f32 1.0, %v4411
    %v4413 = vrcp.pop %v4402
    %v4414 = vmul.f32 1.0, %v4413
    %v4415 = vrcp.pop %v4403
    %v4416 = vmul.f32 1.0, %v4415
    %v4417 = vrcp.pop %v4404
    %v4418 = vmul.f32 1.0, %v4417
    %v4419 = vrcp.pop %v4405
    %v4420 = vmul.f32 1.0, %v4419
    %v4421 = vrcp.pop %v4406
    %v4422 = vmul.f32 1.0, %v4421
    %4431 = vrot.lane.b32.xlu0 %v4367, 64
    %v4432 = vpop.permute.xlu0 %4431
    %4433 = vrot.lane.b32.xlu0 %v4368, 64
    %v4434 = vpop.permute.xlu0 %4433
    %4435 = vrot.lane.b32.xlu0 %v4369, 64
    %v4436 = vpop.permute.xlu0 %4435
    %4437 = vrot.lane.b32.xlu0 %v4370, 64
    %v4438 = vpop.permute.xlu0 %4437
    %4439 = vrot.lane.b32.xlu0 %v4371, 64
    %v4440 = vpop.permute.xlu0 %4439
    %4441 = vrot.lane.b32.xlu0 %v4372, 64
    %v4442 = vpop.permute.xlu0 %4441
    %4443 = vrot.lane.b32.xlu0 %v4373, 64
    %v4444 = vpop.permute.xlu0 %4443
    %4445 = vrot.lane.b32.xlu0 %v4374, 64
    %v4446 = vpop.permute.xlu0 %4445
    %v4447 = vrot.slane %v4432, 1
    %v4448 = vrot.slane %v4434, 1
    %v4449 = vrot.slane %v4436, 1
    %v4450 = vrot.slane %v4438, 1
    %v4451 = vrot.slane %v4440, 1
    %v4452 = vrot.slane %v4442, 1
    %v4453 = vrot.slane %v4444, 1
    %v4454 = vrot.slane %v4446, 1
    %v4463 = vtanh.pop %v4447
    %v4464 = vtanh.pop %v4448
    %v4465 = vtanh.pop %v4449
    %v4466 = vtanh.pop %v4450
    %v4467 = vtanh.pop %v4451
    %v4468 = vtanh.pop %v4452
    %v4469 = vtanh.pop %v4453
    %v4470 = vtanh.pop %v4454
    %v4480 = vunpack.c.l.s4 1966171168
    %v4481 = vunpack.c.0.s8 %v4480
    %v4482 = vlaneseq
    %v4483 = vshrl.u32 %v4482, 7
    %v4484 = vsub.s32 %v4481, %v4483
    %v4485 = vrot.slane %v4172, %v4484
    %v4487 = vunpack.c.l.s4 1966171168
    %v4488 = vunpack.c.0.s8 %v4487
    %v4489 = vlaneseq
    %v4490 = vshrl.u32 %v4489, 7
    %v4491 = vsub.s32 %v4488, %v4490
    %v4492 = vrot.slane %v4485, %v4491
    %v4494 = vunpack.c.l.s4 1966171168
    %v4495 = vunpack.c.0.s8 %v4494
    %v4496 = vlaneseq
    %v4497 = vshrl.u32 %v4496, 7
    %v4498 = vsub.s32 %v4495, %v4497
    %v4499 = vrot.slane %v4173, %v4498
    %v4501 = vunpack.c.l.s4 1966171168
    %v4502 = vunpack.c.0.s8 %v4501
    %v4503 = vlaneseq
    %v4504 = vshrl.u32 %v4503, 7
    %v4505 = vsub.s32 %v4502, %v4504
    %v4506 = vrot.slane %v4499, %v4505
    %v4508 = vunpack.c.l.s4 1966171168
    %v4509 = vunpack.c.0.s8 %v4508
    %v4510 = vlaneseq
    %v4511 = vshrl.u32 %v4510, 7
    %v4512 = vsub.s32 %v4509, %v4511
    %v4513 = vrot.slane %v4174, %v4512
    %v4515 = vunpack.c.l.s4 1966171168
    %v4516 = vunpack.c.0.s8 %v4515
    %v4517 = vlaneseq
    %v4518 = vshrl.u32 %v4517, 7
    %v4519 = vsub.s32 %v4516, %v4518
    %v4520 = vrot.slane %v4513, %v4519
    %v4522 = vunpack.c.l.s4 1966171168
    %v4523 = vunpack.c.0.s8 %v4522
    %v4524 = vlaneseq
    %v4525 = vshrl.u32 %v4524, 7
    %v4526 = vsub.s32 %v4523, %v4525
    %v4527 = vrot.slane %v4175, %v4526
    %v4529 = vunpack.c.l.s4 1966171168
    %v4530 = vunpack.c.0.s8 %v4529
    %v4531 = vlaneseq
    %v4532 = vshrl.u32 %v4531, 7
    %v4533 = vsub.s32 %v4530, %v4532
    %v4534 = vrot.slane %v4527, %v4533
    %v4536 = vunpack.c.l.s4 1966171168
    %v4537 = vunpack.c.0.s8 %v4536
    %v4538 = vlaneseq
    %v4539 = vshrl.u32 %v4538, 7
    %v4540 = vsub.s32 %v4537, %v4539
    %v4541 = vrot.slane %v4176, %v4540
    %v4543 = vunpack.c.l.s4 1966171168
    %v4544 = vunpack.c.0.s8 %v4543
    %v4545 = vlaneseq
    %v4546 = vshrl.u32 %v4545, 7
    %v4547 = vsub.s32 %v4544, %v4546
    %v4548 = vrot.slane %v4541, %v4547
    %v4550 = vunpack.c.l.s4 1966171168
    %v4551 = vunpack.c.0.s8 %v4550
    %v4552 = vlaneseq
    %v4553 = vshrl.u32 %v4552, 7
    %v4554 = vsub.s32 %v4551, %v4553
    %v4555 = vrot.slane %v4177, %v4554
    %v4557 = vunpack.c.l.s4 1966171168
    %v4558 = vunpack.c.0.s8 %v4557
    %v4559 = vlaneseq
    %v4560 = vshrl.u32 %v4559, 7
    %v4561 = vsub.s32 %v4558, %v4560
    %v4562 = vrot.slane %v4555, %v4561
    %v4564 = vunpack.c.l.s4 1966171168
    %v4565 = vunpack.c.0.s8 %v4564
    %v4566 = vlaneseq
    %v4567 = vshrl.u32 %v4566, 7
    %v4568 = vsub.s32 %v4565, %v4567
    %v4569 = vrot.slane %v4178, %v4568
    %v4571 = vunpack.c.l.s4 1966171168
    %v4572 = vunpack.c.0.s8 %v4571
    %v4573 = vlaneseq
    %v4574 = vshrl.u32 %v4573, 7
    %v4575 = vsub.s32 %v4572, %v4574
    %v4576 = vrot.slane %v4569, %v4575
    %v4578 = vunpack.c.l.s4 1966171168
    %v4579 = vunpack.c.0.s8 %v4578
    %v4580 = vlaneseq
    %v4581 = vshrl.u32 %v4580, 7
    %v4582 = vsub.s32 %v4579, %v4581
    %v4583 = vrot.slane %v4179, %v4582
    %v4585 = vunpack.c.l.s4 1966171168
    %v4586 = vunpack.c.0.s8 %v4585
    %v4587 = vlaneseq
    %v4588 = vshrl.u32 %v4587, 7
    %v4589 = vsub.s32 %v4586, %v4588
    %v4590 = vrot.slane %v4583, %v4589
    %4591 = vrot.lane.b32.xlu0 %v4492, 64
    %v4592 = vpop.permute.xlu0 %4591
    %4593 = vrot.lane.b32.xlu0 %v4506, 64
    %v4594 = vpop.permute.xlu0 %4593
    %4595 = vrot.lane.b32.xlu0 %v4520, 64
    %v4596 = vpop.permute.xlu0 %4595
    %4597 = vrot.lane.b32.xlu0 %v4534, 64
    %v4598 = vpop.permute.xlu0 %4597
    %4599 = vrot.lane.b32.xlu0 %v4548, 64
    %v4600 = vpop.permute.xlu0 %4599
    %4601 = vrot.lane.b32.xlu0 %v4562, 64
    %v4602 = vpop.permute.xlu0 %4601
    %4603 = vrot.lane.b32.xlu0 %v4576, 64
    %v4604 = vpop.permute.xlu0 %4603
    %4605 = vrot.lane.b32.xlu0 %v4590, 64
    %v4606 = vpop.permute.xlu0 %4605
    %v4615 = vmul.f32 %v4408, %v4592
    %v4616 = vmul.f32 %v4410, %v4594
    %v4617 = vmul.f32 %v4412, %v4596
    %v4618 = vmul.f32 %v4414, %v4598
    %v4619 = vmul.f32 %v4416, %v4600
    %v4620 = vmul.f32 %v4418, %v4602
    %v4621 = vmul.f32 %v4420, %v4604
    %v4622 = vmul.f32 %v4422, %v4606
    %v4623 = vmul.f32 %v4408, %v4463
    %v4624 = vmul.f32 %v4410, %v4464
    %v4625 = vmul.f32 %v4412, %v4465
    %v4626 = vmul.f32 %v4414, %v4466
    %v4627 = vmul.f32 %v4416, %v4467
    %v4628 = vmul.f32 %v4418, %v4468
    %v4629 = vmul.f32 %v4420, %v4469
    %v4630 = vmul.f32 %v4422, %v4470
    %4639 = vrot.lane.b32.xlu0 %v4623, 64
    %v4640 = vpop.permute.xlu0 %4639
    %4641 = vrot.lane.b32.xlu0 %v4624, 64
    %v4642 = vpop.permute.xlu0 %4641
    %4643 = vrot.lane.b32.xlu0 %v4625, 64
    %v4644 = vpop.permute.xlu0 %4643
    %4645 = vrot.lane.b32.xlu0 %v4626, 64
    %v4646 = vpop.permute.xlu0 %4645
    %4647 = vrot.lane.b32.xlu0 %v4627, 64
    %v4648 = vpop.permute.xlu0 %4647
    %4649 = vrot.lane.b32.xlu0 %v4628, 64
    %v4650 = vpop.permute.xlu0 %4649
    %4651 = vrot.lane.b32.xlu0 %v4629, 64
    %v4652 = vpop.permute.xlu0 %4651
    %4653 = vrot.lane.b32.xlu0 %v4630, 64
    %v4654 = vpop.permute.xlu0 %4653
    %v4663 = vadd.f32 %v4615, %v4640
    %v4664 = vadd.f32 %v4616, %v4642
    %v4665 = vadd.f32 %v4617, %v4644
    %v4666 = vadd.f32 %v4618, %v4646
    %v4667 = vadd.f32 %v4619, %v4648
    %v4668 = vadd.f32 %v4620, %v4650
    %v4669 = vadd.f32 %v4621, %v4652
    %v4670 = vadd.f32 %v4622, %v4654
    %v4671 = vtanh.pop %v4663
    %v4672 = vtanh.pop %v4664
    %v4673 = vtanh.pop %v4665
    %v4674 = vtanh.pop %v4666
    %v4675 = vtanh.pop %v4667
    %v4676 = vtanh.pop %v4668
    %v4677 = vtanh.pop %v4669
    %v4678 = vtanh.pop %v4670
    %v4687 = vrot.slane %v4408, 1
    %v4688 = vrot.slane %v4410, 1
    %v4689 = vrot.slane %v4412, 1
    %v4690 = vrot.slane %v4414, 1
    %v4691 = vrot.slane %v4416, 1
    %v4692 = vrot.slane %v4418, 1
    %v4693 = vrot.slane %v4420, 1
    %v4694 = vrot.slane %v4422, 1
    %4711 = vrot.lane.b32.xlu0 %v4671, 64
    %v4712 = vpop.permute.xlu0 %4711
    %4713 = vrot.lane.b32.xlu0 %v4672, 64
    %v4714 = vpop.permute.xlu0 %4713
    %4715 = vrot.lane.b32.xlu0 %v4673, 64
    %v4716 = vpop.permute.xlu0 %4715
    %4717 = vrot.lane.b32.xlu0 %v4674, 64
    %v4718 = vpop.permute.xlu0 %4717
    %4719 = vrot.lane.b32.xlu0 %v4675, 64
    %v4720 = vpop.permute.xlu0 %4719
    %4721 = vrot.lane.b32.xlu0 %v4676, 64
    %v4722 = vpop.permute.xlu0 %4721
    %4723 = vrot.lane.b32.xlu0 %v4677, 64
    %v4724 = vpop.permute.xlu0 %4723
    %4725 = vrot.lane.b32.xlu0 %v4678, 64
    %v4726 = vpop.permute.xlu0 %4725
    %v4735 = vmul.f32 %v4687, %v4712
    %v4736 = vmul.f32 %v4688, %v4714
    %v4737 = vmul.f32 %v4689, %v4716
    %v4738 = vmul.f32 %v4690, %v4718
    %v4739 = vmul.f32 %v4691, %v4720
    %v4740 = vmul.f32 %v4692, %v4722
    %v4741 = vmul.f32 %v4693, %v4724
    %v4742 = vmul.f32 %v4694, %v4726
    %v4743 = vld [vmem:[#allocation3 + $0x6] sm:$0x1]
    %v4744 = vld [vmem:[#allocation3 + $0xe] sm:$0x1]
    %v4745 = vld [vmem:[#allocation3 + $0x16] sm:$0x1]
    %v4746 = vld [vmem:[#allocation3 + $0x1e] sm:$0x1]
    %v4747 = vld [vmem:[#allocation3 + $0x26] sm:$0x1]
    %v4748 = vld [vmem:[#allocation3 + $0x2e] sm:$0x1]
    %v4749 = vld [vmem:[#allocation3 + $0x36] sm:$0x1]
    %v4750 = vld [vmem:[#allocation3 + $0x3e] sm:$0x1]
    %vm4751 = vcmp.gt.f32.partialorder %v4743, 0.0
    %vm4752 = vcmp.gt.f32.partialorder %v4744, 0.0
    %vm4753 = vcmp.gt.f32.partialorder %v4745, 0.0
    %vm4754 = vcmp.gt.f32.partialorder %v4746, 0.0
    %vm4755 = vcmp.gt.f32.partialorder %v4747, 0.0
    %vm4756 = vcmp.gt.f32.partialorder %v4748, 0.0
    %vm4757 = vcmp.gt.f32.partialorder %v4749, 0.0
    %vm4758 = vcmp.gt.f32.partialorder %v4750, 0.0
    %v4759 = vsel %vm4751, %v4735, %v4100
    %v4760 = vsel %vm4752, %v4736, %v4101
    %v4761 = vsel %vm4753, %v4737, %v4102
    %v4762 = vsel %vm4754, %v4738, %v4103
    %v4763 = vsel %vm4755, %v4739, %v4104
    %v4764 = vsel %vm4756, %v4740, %v4105
    %v4765 = vsel %vm4757, %v4741, %v4106
    %v4766 = vsel %vm4758, %v4742, %v4107
    %v4775 = vlaneseq
    %v4776 = vshrl.u32 %v4775, 7
    %v4777 = vsub.s32 0, %v4776
    %v4778 = vrot.slane %v4663, %v4777
    %v4779 = vlaneseq
    %v4780 = vshrl.u32 %v4779, 7
    %v4781 = vsub.s32 0, %v4780
    %v4782 = vrot.slane %v4664, %v4781
    %v4783 = vlaneseq
    %v4784 = vshrl.u32 %v4783, 7
    %v4785 = vsub.s32 0, %v4784
    %v4786 = vrot.slane %v4665, %v4785
    %v4787 = vlaneseq
    %v4788 = vshrl.u32 %v4787, 7
    %v4789 = vsub.s32 0, %v4788
    %v4790 = vrot.slane %v4666, %v4789
    %v4791 = vlaneseq
    %v4792 = vshrl.u32 %v4791, 7
    %v4793 = vsub.s32 0, %v4792
    %v4794 = vrot.slane %v4667, %v4793
    %v4795 = vlaneseq
    %v4796 = vshrl.u32 %v4795, 7
    %v4797 = vsub.s32 0, %v4796
    %v4798 = vrot.slane %v4668, %v4797
    %v4799 = vlaneseq
    %v4800 = vshrl.u32 %v4799, 7
    %v4801 = vsub.s32 0, %v4800
    %v4802 = vrot.slane %v4669, %v4801
    %v4803 = vlaneseq
    %v4804 = vshrl.u32 %v4803, 7
    %v4805 = vsub.s32 0, %v4804
    %v4806 = vrot.slane %v4670, %v4805
    %4807 = vrot.lane.b32.xlu0 %v4778, 64
    %v4808 = vpop.permute.xlu0 %4807
    %4809 = vrot.lane.b32.xlu0 %v4782, 64
    %v4810 = vpop.permute.xlu0 %4809
    %4811 = vrot.lane.b32.xlu0 %v4786, 64
    %v4812 = vpop.permute.xlu0 %4811
    %4813 = vrot.lane.b32.xlu0 %v4790, 64
    %v4814 = vpop.permute.xlu0 %4813
    %4815 = vrot.lane.b32.xlu0 %v4794, 64
    %v4816 = vpop.permute.xlu0 %4815
    %4817 = vrot.lane.b32.xlu0 %v4798, 64
    %v4818 = vpop.permute.xlu0 %4817
    %4819 = vrot.lane.b32.xlu0 %v4802, 64
    %v4820 = vpop.permute.xlu0 %4819
    %4821 = vrot.lane.b32.xlu0 %v4806, 64
    %v4822 = vpop.permute.xlu0 %4821
    %v4831 = vsel %vm4751, %v4808, %v4172
    %v4832 = vsel %vm4752, %v4810, %v4173
    %v4833 = vsel %vm4753, %v4812, %v4174
    %v4834 = vsel %vm4754, %v4814, %v4175
    %v4835 = vsel %vm4755, %v4816, %v4176
    %v4836 = vsel %vm4756, %v4818, %v4177
    %v4837 = vsel %vm4757, %v4820, %v4178
    %v4838 = vsel %vm4758, %v4822, %v4179
    %4839 = vst.msk [vmem:[#allocation4 + $0x6] sm:$0x1] %vm876, %v4759
    %4840 = vst.msk [vmem:[#allocation4 + $0xe] sm:$0x1] %vm876, %v4760
    %4841 = vst.msk [vmem:[#allocation4 + $0x16] sm:$0x1] %vm876, %v4761
    %4842 = vst.msk [vmem:[#allocation4 + $0x1e] sm:$0x1] %vm876, %v4762
    %4843 = vst.msk [vmem:[#allocation4 + $0x26] sm:$0x1] %vm876, %v4763
    %4844 = vst.msk [vmem:[#allocation4 + $0x2e] sm:$0x1] %vm876, %v4764
    %4845 = vst.msk [vmem:[#allocation4 + $0x36] sm:$0x1] %vm876, %v4765
    %4846 = vst.msk [vmem:[#allocation4 + $0x3e] sm:$0x1] %vm876, %v4766
    %4847 = vst.msk [vmem:[#allocation4 + $0x1] sm:$0x1] %vm885, %v4759
    %4848 = vst.msk [vmem:[#allocation4 + $0x9] sm:$0x1] %vm885, %v4760
    %4849 = vst.msk [vmem:[#allocation4 + $0x11] sm:$0x1] %vm885, %v4761
    %4850 = vst.msk [vmem:[#allocation4 + $0x19] sm:$0x1] %vm885, %v4762
    %4851 = vst.msk [vmem:[#allocation4 + $0x21] sm:$0x1] %vm885, %v4763
    %4852 = vst.msk [vmem:[#allocation4 + $0x29] sm:$0x1] %vm885, %v4764
    %4853 = vst.msk [vmem:[#allocation4 + $0x31] sm:$0x1] %vm885, %v4765
    %4854 = vst.msk [vmem:[#allocation4 + $0x39] sm:$0x1] %vm885, %v4766
    %s4855 = scalar_lea.vmem [#allocation2], 7
    %v4856 = vld [vmem:[%s4855] ss:$8 sm:$0x3]
    %s4857 = scalar_lea.vmem [#allocation2], 23
    %v4858 = vld [vmem:[%s4857] ss:$8 sm:$0x3]
    %s4859 = scalar_lea.vmem [#allocation2], 39
    %v4860 = vld [vmem:[%s4859] ss:$8 sm:$0x3]
    %s4861 = scalar_lea.vmem [#allocation2], 55
    %v4862 = vld [vmem:[%s4861] ss:$8 sm:$0x3]
    %s4863 = scalar_lea.vmem [#allocation2], 71
    %v4864 = vld [vmem:[%s4863] ss:$8 sm:$0x3]
    %s4865 = scalar_lea.vmem [#allocation2], 87
    %v4866 = vld [vmem:[%s4865] ss:$8 sm:$0x3]
    %s4867 = scalar_lea.vmem [#allocation2], 103
    %v4868 = vld [vmem:[%s4867] ss:$8 sm:$0x3]
    %s4869 = scalar_lea.vmem [#allocation2], 119
    %v4870 = vld [vmem:[%s4869] ss:$8 sm:$0x3]
    %v4879 = vrot.slane %v4760, 7
    %v4880 = vsel %vm919, %v4879, %v4759
    %v4881 = vrot.slane %v4761, 6
    %v4882 = vsel %vm922, %v4881, %v4880
    %v4883 = vrot.slane %v4762, 5
    %v4884 = vsel %vm925, %v4883, %v4882
    %v4885 = vrot.slane %v4763, 4
    %v4886 = vsel %vm928, %v4885, %v4884
    %v4887 = vrot.slane %v4764, 3
    %v4888 = vsel %vm931, %v4887, %v4886
    %v4889 = vrot.slane %v4765, 2
    %v4890 = vsel %vm934, %v4889, %v4888
    %v4891 = vrot.slane %v4766, 1
    %v4892 = vsel %vm937, %v4891, %v4890
    %v4893 = vsel %vm97, %v4892, 0
    %4895 = vmatprep.subr.mxu0 0.0
    %4896 = vmatpush1.msra.mxu0 0.0
    %4897 = vmatprep.subr.mxu0 0.0
    %4898 = vmatpush1.msra.mxu0 0.0
    %4899 = vmatprep.subr.mxu0 0.0
    %4900 = vmatpush1.msra.mxu0 0.0
    %4901 = vmatprep.subr.mxu0 0.0
    %4902 = vmatpush1.msra.mxu0 0.0
    %4903 = vmatprep.subr.mxu0 0.0
    %4904 = vmatpush1.msra.mxu0 0.0
    %4905 = vmatprep.subr.mxu0 0.0
    %4906 = vmatpush1.msra.mxu0 0.0
    %4907 = vmatprep.subr.mxu0 0.0
    %4908 = vmatpush1.msra.mxu0 0.0
    %4909 = vmatprep.subr.mxu0 0.0
    %4910 = vmatpush1.msra.mxu0 0.0
    %4911 = vmatprep.subr.mxu0 %v398
    %4912 = vmatpush1.msra.mxu0 %v397
    %4913 = vmatprep.subr.mxu0 %v396
    %4914 = vmatpush1.msra.mxu0 %v395
    %4915 = vmatprep.subr.mxu0 %v394
    %4916 = vmatpush1.msra.mxu0 %v393
    %4917 = vmatprep.subr.mxu0 %v392
    %4918 = vmatpush1.msra.mxu0 %v391
    %4919 = vmatprep.subr.mxu0 %v390
    %4920 = vmatpush1.msra.mxu0 %v389
    %4921 = vmatprep.subr.mxu0 %v388
    %4922 = vmatpush1.msra.mxu0 %v387
    %4923 = vmatprep.subr.mxu0 %v386
    %4924 = vmatpush1.msra.mxu0 %v385
    %4925 = vmatprep.subr.mxu0 %v384
    %4926 = vmatpush1.msra.mxu0 %v383
    %4927 = vmatprep.subr.mxu0 0.0
    %4928 = vmatpush2.msra.mxu0 0.0
    %4929 = vmatprep.subr.mxu0 0.0
    %4930 = vmatpush2.msra.mxu0 0.0
    %4931 = vmatprep.subr.mxu0 0.0
    %4932 = vmatpush2.msra.mxu0 0.0
    %4933 = vmatprep.subr.mxu0 0.0
    %4934 = vmatpush2.msra.mxu0 0.0
    %4935 = vmatprep.subr.mxu0 0.0
    %4936 = vmatpush2.msra.mxu0 0.0
    %4937 = vmatprep.subr.mxu0 0.0
    %4938 = vmatpush2.msra.mxu0 0.0
    %4939 = vmatprep.subr.mxu0 0.0
    %4940 = vmatpush2.msra.mxu0 0.0
    %4941 = vmatprep.subr.mxu0 0.0
    %4942 = vmatpush2.msra.mxu0 0.0
    %4943 = vmatprep.subr.mxu0 0.0
    %4944 = vmatpush2.msra.mxu0 0.0
    %4945 = vmatprep.subr.mxu0 0.0
    %4946 = vmatpush2.msra.mxu0 0.0
    %4947 = vmatprep.subr.mxu0 0.0
    %4948 = vmatpush2.msra.mxu0 0.0
    %4949 = vmatprep.subr.mxu0 0.0
    %4950 = vmatpush2.msra.mxu0 0.0
    %4951 = vmatprep.subr.mxu0 0.0
    %4952 = vmatpush2.msra.mxu0 0.0
    %4953 = vmatprep.subr.mxu0 0.0
    %4954 = vmatpush2.msra.mxu0 0.0
    %4955 = vmatprep.subr.mxu0 0.0
    %4956 = vmatpush2.msra.mxu0 0.0
    %4957 = vmatprep.subr.mxu0 0.0
    %4958 = vmatpush2.msra.mxu0 0.0
    %4959 = vmatprep.mubr.f32.mxu0 0.0
    %4960 = vmatmul.mubr.f32.gmra.mxu0 %v4893
    %v4961 = vpop.f32.mrf.mxu0
    %v4962 = vadd.f32 0.0, %v4961
    %v4963 = vpop.f32.mrf.mxu0
    %v4964 = vadd.f32 0.0, %v4963
    %4965 = vdwg.mxu0
    %v4968 = vcombine.low %v4962, %v4964
    %v4969 = vcombine.high %v4962, %v4964
    %v4971 = vunpack.c.l.s4 1966171168
    %v4972 = vunpack.c.0.s8 %v4971
    %v4973 = vlaneseq
    %v4974 = vshrl.u32 %v4973, 7
    %v4975 = vsub.s32 %v4972, %v4974
    %v4976 = vrot.slane %v4968, %v4975
    %v4978 = vunpack.c.l.s4 1966171168
    %v4979 = vunpack.c.0.s8 %v4978
    %v4980 = vlaneseq
    %v4981 = vshrl.u32 %v4980, 7
    %v4982 = vsub.s32 %v4979, %v4981
    %v4983 = vrot.slane %v4969, %v4982
    %v4984 = vcombine.high %v4976, %v4976
    %v4985 = vcombine.high %v4983, %v4983
    %v4987 = vunpack.c.l.s4 1966171168
    %v4988 = vunpack.c.0.s8 %v4987
    %v4989 = vlaneseq
    %v4990 = vshrl.u32 %v4989, 7
    %v4991 = vsub.s32 %v4988, %v4990
    %v4992 = vrot.slane %v4976, %v4991
    %v4994 = vunpack.c.l.s4 1966171168
    %v4995 = vunpack.c.0.s8 %v4994
    %v4996 = vlaneseq
    %v4997 = vshrl.u32 %v4996, 7
    %v4998 = vsub.s32 %v4995, %v4997
    %v4999 = vrot.slane %v4983, %v4998
    %v5001 = vunpack.c.l.s4 1966171168
    %v5002 = vunpack.c.0.s8 %v5001
    %v5003 = vlaneseq
    %v5004 = vshrl.u32 %v5003, 7
    %v5005 = vsub.s32 %v5002, %v5004
    %v5006 = vrot.slane %v4984, %v5005
    %v5008 = vunpack.c.l.s4 1966171168
    %v5009 = vunpack.c.0.s8 %v5008
    %v5010 = vlaneseq
    %v5011 = vshrl.u32 %v5010, 7
    %v5012 = vsub.s32 %v5009, %v5011
    %v5013 = vrot.slane %v4985, %v5012
    %v5014 = vcombine.high %v4992, %v4992
    %v5015 = vcombine.high %v4999, %v4999
    %v5016 = vcombine.high %v5006, %v5006
    %v5017 = vcombine.high %v5013, %v5013
    %v5026 = vadd.f32 %v4856, %v4992
    %v5027 = vadd.f32 %v4858, %v5006
    %v5028 = vadd.f32 %v4860, %v5014
    %v5029 = vadd.f32 %v4862, %v5016
    %v5030 = vadd.f32 %v4864, %v4999
    %v5031 = vadd.f32 %v4866, %v5013
    %v5032 = vadd.f32 %v4868, %v5015
    %v5033 = vadd.f32 %v4870, %v5017
    %v5034 = vxor.u32 %v5026, 2147483648
    %v5035 = vxor.u32 %v5027, 2147483648
    %v5036 = vxor.u32 %v5028, 2147483648
    %v5037 = vxor.u32 %v5029, 2147483648
    %v5038 = vxor.u32 %v5030, 2147483648
    %v5039 = vxor.u32 %v5031, 2147483648
    %v5040 = vxor.u32 %v5032, 2147483648
    %v5041 = vxor.u32 %v5033, 2147483648
    %v5042 = vmul.f32 %v5034, 1.442695
    %v5043 = vpow.pop %v5042
    %v5044 = vmul.f32 %v5035, 1.442695
    %v5045 = vpow.pop %v5044
    %v5046 = vmul.f32 %v5036, 1.442695
    %v5047 = vpow.pop %v5046
    %v5048 = vmul.f32 %v5037, 1.442695
    %v5049 = vpow.pop %v5048
    %v5050 = vmul.f32 %v5038, 1.442695
    %v5051 = vpow.pop %v5050
    %v5052 = vmul.f32 %v5039, 1.442695
    %v5053 = vpow.pop %v5052
    %v5054 = vmul.f32 %v5040, 1.442695
    %v5055 = vpow.pop %v5054
    %v5056 = vmul.f32 %v5041, 1.442695
    %v5057 = vpow.pop %v5056
    %v5058 = vadd.f32 %v5043, 1.0
    %v5059 = vadd.f32 %v5045, 1.0
    %v5060 = vadd.f32 %v5047, 1.0
    %v5061 = vadd.f32 %v5049, 1.0
    %v5062 = vadd.f32 %v5051, 1.0
    %v5063 = vadd.f32 %v5053, 1.0
    %v5064 = vadd.f32 %v5055, 1.0
    %v5065 = vadd.f32 %v5057, 1.0
    %v5066 = vrcp.pop %v5058
    %v5067 = vmul.f32 1.0, %v5066
    %v5068 = vrcp.pop %v5059
    %v5069 = vmul.f32 1.0, %v5068
    %v5070 = vrcp.pop %v5060
    %v5071 = vmul.f32 1.0, %v5070
    %v5072 = vrcp.pop %v5061
    %v5073 = vmul.f32 1.0, %v5072
    %v5074 = vrcp.pop %v5062
    %v5075 = vmul.f32 1.0, %v5074
    %v5076 = vrcp.pop %v5063
    %v5077 = vmul.f32 1.0, %v5076
    %v5078 = vrcp.pop %v5064
    %v5079 = vmul.f32 1.0, %v5078
    %v5080 = vrcp.pop %v5065
    %v5081 = vmul.f32 1.0, %v5080
    %5090 = vrot.lane.b32.xlu0 %v5026, 64
    %v5091 = vpop.permute.xlu0 %5090
    %5092 = vrot.lane.b32.xlu0 %v5027, 64
    %v5093 = vpop.permute.xlu0 %5092
    %5094 = vrot.lane.b32.xlu0 %v5028, 64
    %v5095 = vpop.permute.xlu0 %5094
    %5096 = vrot.lane.b32.xlu0 %v5029, 64
    %v5097 = vpop.permute.xlu0 %5096
    %5098 = vrot.lane.b32.xlu0 %v5030, 64
    %v5099 = vpop.permute.xlu0 %5098
    %5100 = vrot.lane.b32.xlu0 %v5031, 64
    %v5101 = vpop.permute.xlu0 %5100
    %5102 = vrot.lane.b32.xlu0 %v5032, 64
    %v5103 = vpop.permute.xlu0 %5102
    %5104 = vrot.lane.b32.xlu0 %v5033, 64
    %v5105 = vpop.permute.xlu0 %5104
    %v5106 = vrot.slane %v5091, 1
    %v5107 = vrot.slane %v5093, 1
    %v5108 = vrot.slane %v5095, 1
    %v5109 = vrot.slane %v5097, 1
    %v5110 = vrot.slane %v5099, 1
    %v5111 = vrot.slane %v5101, 1
    %v5112 = vrot.slane %v5103, 1
    %v5113 = vrot.slane %v5105, 1
    %v5122 = vtanh.pop %v5106
    %v5123 = vtanh.pop %v5107
    %v5124 = vtanh.pop %v5108
    %v5125 = vtanh.pop %v5109
    %v5126 = vtanh.pop %v5110
    %v5127 = vtanh.pop %v5111
    %v5128 = vtanh.pop %v5112
    %v5129 = vtanh.pop %v5113
    %v5139 = vunpack.c.l.s4 1966171168
    %v5140 = vunpack.c.0.s8 %v5139
    %v5141 = vlaneseq
    %v5142 = vshrl.u32 %v5141, 7
    %v5143 = vsub.s32 %v5140, %v5142
    %v5144 = vrot.slane %v4831, %v5143
    %v5146 = vunpack.c.l.s4 1966171168
    %v5147 = vunpack.c.0.s8 %v5146
    %v5148 = vlaneseq
    %v5149 = vshrl.u32 %v5148, 7
    %v5150 = vsub.s32 %v5147, %v5149
    %v5151 = vrot.slane %v5144, %v5150
    %v5153 = vunpack.c.l.s4 1966171168
    %v5154 = vunpack.c.0.s8 %v5153
    %v5155 = vlaneseq
    %v5156 = vshrl.u32 %v5155, 7
    %v5157 = vsub.s32 %v5154, %v5156
    %v5158 = vrot.slane %v4832, %v5157
    %v5160 = vunpack.c.l.s4 1966171168
    %v5161 = vunpack.c.0.s8 %v5160
    %v5162 = vlaneseq
    %v5163 = vshrl.u32 %v5162, 7
    %v5164 = vsub.s32 %v5161, %v5163
    %v5165 = vrot.slane %v5158, %v5164
    %v5167 = vunpack.c.l.s4 1966171168
    %v5168 = vunpack.c.0.s8 %v5167
    %v5169 = vlaneseq
    %v5170 = vshrl.u32 %v5169, 7
    %v5171 = vsub.s32 %v5168, %v5170
    %v5172 = vrot.slane %v4833, %v5171
    %v5174 = vunpack.c.l.s4 1966171168
    %v5175 = vunpack.c.0.s8 %v5174
    %v5176 = vlaneseq
    %v5177 = vshrl.u32 %v5176, 7
    %v5178 = vsub.s32 %v5175, %v5177
    %v5179 = vrot.slane %v5172, %v5178
    %v5181 = vunpack.c.l.s4 1966171168
    %v5182 = vunpack.c.0.s8 %v5181
    %v5183 = vlaneseq
    %v5184 = vshrl.u32 %v5183, 7
    %v5185 = vsub.s32 %v5182, %v5184
    %v5186 = vrot.slane %v4834, %v5185
    %v5188 = vunpack.c.l.s4 1966171168
    %v5189 = vunpack.c.0.s8 %v5188
    %v5190 = vlaneseq
    %v5191 = vshrl.u32 %v5190, 7
    %v5192 = vsub.s32 %v5189, %v5191
    %v5193 = vrot.slane %v5186, %v5192
    %v5195 = vunpack.c.l.s4 1966171168
    %v5196 = vunpack.c.0.s8 %v5195
    %v5197 = vlaneseq
    %v5198 = vshrl.u32 %v5197, 7
    %v5199 = vsub.s32 %v5196, %v5198
    %v5200 = vrot.slane %v4835, %v5199
    %v5202 = vunpack.c.l.s4 1966171168
    %v5203 = vunpack.c.0.s8 %v5202
    %v5204 = vlaneseq
    %v5205 = vshrl.u32 %v5204, 7
    %v5206 = vsub.s32 %v5203, %v5205
    %v5207 = vrot.slane %v5200, %v5206
    %v5209 = vunpack.c.l.s4 1966171168
    %v5210 = vunpack.c.0.s8 %v5209
    %v5211 = vlaneseq
    %v5212 = vshrl.u32 %v5211, 7
    %v5213 = vsub.s32 %v5210, %v5212
    %v5214 = vrot.slane %v4836, %v5213
    %v5216 = vunpack.c.l.s4 1966171168
    %v5217 = vunpack.c.0.s8 %v5216
    %v5218 = vlaneseq
    %v5219 = vshrl.u32 %v5218, 7
    %v5220 = vsub.s32 %v5217, %v5219
    %v5221 = vrot.slane %v5214, %v5220
    %v5223 = vunpack.c.l.s4 1966171168
    %v5224 = vunpack.c.0.s8 %v5223
    %v5225 = vlaneseq
    %v5226 = vshrl.u32 %v5225, 7
    %v5227 = vsub.s32 %v5224, %v5226
    %v5228 = vrot.slane %v4837, %v5227
    %v5230 = vunpack.c.l.s4 1966171168
    %v5231 = vunpack.c.0.s8 %v5230
    %v5232 = vlaneseq
    %v5233 = vshrl.u32 %v5232, 7
    %v5234 = vsub.s32 %v5231, %v5233
    %v5235 = vrot.slane %v5228, %v5234
    %v5237 = vunpack.c.l.s4 1966171168
    %v5238 = vunpack.c.0.s8 %v5237
    %v5239 = vlaneseq
    %v5240 = vshrl.u32 %v5239, 7
    %v5241 = vsub.s32 %v5238, %v5240
    %v5242 = vrot.slane %v4838, %v5241
    %v5244 = vunpack.c.l.s4 1966171168
    %v5245 = vunpack.c.0.s8 %v5244
    %v5246 = vlaneseq
    %v5247 = vshrl.u32 %v5246, 7
    %v5248 = vsub.s32 %v5245, %v5247
    %v5249 = vrot.slane %v5242, %v5248
    %5250 = vrot.lane.b32.xlu0 %v5151, 64
    %v5251 = vpop.permute.xlu0 %5250
    %5252 = vrot.lane.b32.xlu0 %v5165, 64
    %v5253 = vpop.permute.xlu0 %5252
    %5254 = vrot.lane.b32.xlu0 %v5179, 64
    %v5255 = vpop.permute.xlu0 %5254
    %5256 = vrot.lane.b32.xlu0 %v5193, 64
    %v5257 = vpop.permute.xlu0 %5256
    %5258 = vrot.lane.b32.xlu0 %v5207, 64
    %v5259 = vpop.permute.xlu0 %5258
    %5260 = vrot.lane.b32.xlu0 %v5221, 64
    %v5261 = vpop.permute.xlu0 %5260
    %5262 = vrot.lane.b32.xlu0 %v5235, 64
    %v5263 = vpop.permute.xlu0 %5262
    %5264 = vrot.lane.b32.xlu0 %v5249, 64
    %v5265 = vpop.permute.xlu0 %5264
    %v5274 = vmul.f32 %v5067, %v5251
    %v5275 = vmul.f32 %v5069, %v5253
    %v5276 = vmul.f32 %v5071, %v5255
    %v5277 = vmul.f32 %v5073, %v5257
    %v5278 = vmul.f32 %v5075, %v5259
    %v5279 = vmul.f32 %v5077, %v5261
    %v5280 = vmul.f32 %v5079, %v5263
    %v5281 = vmul.f32 %v5081, %v5265
    %v5282 = vmul.f32 %v5067, %v5122
    %v5283 = vmul.f32 %v5069, %v5123
    %v5284 = vmul.f32 %v5071, %v5124
    %v5285 = vmul.f32 %v5073, %v5125
    %v5286 = vmul.f32 %v5075, %v5126
    %v5287 = vmul.f32 %v5077, %v5127
    %v5288 = vmul.f32 %v5079, %v5128
    %v5289 = vmul.f32 %v5081, %v5129
    %5298 = vrot.lane.b32.xlu0 %v5282, 64
    %v5299 = vpop.permute.xlu0 %5298
    %5300 = vrot.lane.b32.xlu0 %v5283, 64
    %v5301 = vpop.permute.xlu0 %5300
    %5302 = vrot.lane.b32.xlu0 %v5284, 64
    %v5303 = vpop.permute.xlu0 %5302
    %5304 = vrot.lane.b32.xlu0 %v5285, 64
    %v5305 = vpop.permute.xlu0 %5304
    %5306 = vrot.lane.b32.xlu0 %v5286, 64
    %v5307 = vpop.permute.xlu0 %5306
    %5308 = vrot.lane.b32.xlu0 %v5287, 64
    %v5309 = vpop.permute.xlu0 %5308
    %5310 = vrot.lane.b32.xlu0 %v5288, 64
    %v5311 = vpop.permute.xlu0 %5310
    %5312 = vrot.lane.b32.xlu0 %v5289, 64
    %v5313 = vpop.permute.xlu0 %5312
    %v5322 = vadd.f32 %v5274, %v5299
    %v5323 = vadd.f32 %v5275, %v5301
    %v5324 = vadd.f32 %v5276, %v5303
    %v5325 = vadd.f32 %v5277, %v5305
    %v5326 = vadd.f32 %v5278, %v5307
    %v5327 = vadd.f32 %v5279, %v5309
    %v5328 = vadd.f32 %v5280, %v5311
    %v5329 = vadd.f32 %v5281, %v5313
    %v5330 = vtanh.pop %v5322
    %v5331 = vtanh.pop %v5323
    %v5332 = vtanh.pop %v5324
    %v5333 = vtanh.pop %v5325
    %v5334 = vtanh.pop %v5326
    %v5335 = vtanh.pop %v5327
    %v5336 = vtanh.pop %v5328
    %v5337 = vtanh.pop %v5329
    %v5346 = vrot.slane %v5067, 1
    %v5347 = vrot.slane %v5069, 1
    %v5348 = vrot.slane %v5071, 1
    %v5349 = vrot.slane %v5073, 1
    %v5350 = vrot.slane %v5075, 1
    %v5351 = vrot.slane %v5077, 1
    %v5352 = vrot.slane %v5079, 1
    %v5353 = vrot.slane %v5081, 1
    %5370 = vrot.lane.b32.xlu0 %v5330, 64
    %v5371 = vpop.permute.xlu0 %5370
    %5372 = vrot.lane.b32.xlu0 %v5331, 64
    %v5373 = vpop.permute.xlu0 %5372
    %5374 = vrot.lane.b32.xlu0 %v5332, 64
    %v5375 = vpop.permute.xlu0 %5374
    %5376 = vrot.lane.b32.xlu0 %v5333, 64
    %v5377 = vpop.permute.xlu0 %5376
    %5378 = vrot.lane.b32.xlu0 %v5334, 64
    %v5379 = vpop.permute.xlu0 %5378
    %5380 = vrot.lane.b32.xlu0 %v5335, 64
    %v5381 = vpop.permute.xlu0 %5380
    %5382 = vrot.lane.b32.xlu0 %v5336, 64
    %v5383 = vpop.permute.xlu0 %5382
    %5384 = vrot.lane.b32.xlu0 %v5337, 64
    %v5385 = vpop.permute.xlu0 %5384
    %v5394 = vmul.f32 %v5346, %v5371
    %v5395 = vmul.f32 %v5347, %v5373
    %v5396 = vmul.f32 %v5348, %v5375
    %v5397 = vmul.f32 %v5349, %v5377
    %v5398 = vmul.f32 %v5350, %v5379
    %v5399 = vmul.f32 %v5351, %v5381
    %v5400 = vmul.f32 %v5352, %v5383
    %v5401 = vmul.f32 %v5353, %v5385
    %v5402 = vld [vmem:[#allocation3 + $0x7] sm:$0x1]
    %v5403 = vld [vmem:[#allocation3 + $0xf] sm:$0x1]
    %v5404 = vld [vmem:[#allocation3 + $0x17] sm:$0x1]
    %v5405 = vld [vmem:[#allocation3 + $0x1f] sm:$0x1]
    %v5406 = vld [vmem:[#allocation3 + $0x27] sm:$0x1]
    %v5407 = vld [vmem:[#allocation3 + $0x2f] sm:$0x1]
    %v5408 = vld [vmem:[#allocation3 + $0x37] sm:$0x1]
    %v5409 = vld [vmem:[#allocation3 + $0x3f] sm:$0x1]
    %vm5410 = vcmp.gt.f32.partialorder %v5402, 0.0
    %vm5411 = vcmp.gt.f32.partialorder %v5403, 0.0
    %vm5412 = vcmp.gt.f32.partialorder %v5404, 0.0
    %vm5413 = vcmp.gt.f32.partialorder %v5405, 0.0
    %vm5414 = vcmp.gt.f32.partialorder %v5406, 0.0
    %vm5415 = vcmp.gt.f32.partialorder %v5407, 0.0
    %vm5416 = vcmp.gt.f32.partialorder %v5408, 0.0
    %vm5417 = vcmp.gt.f32.partialorder %v5409, 0.0
    %v5418 = vsel %vm5410, %v5394, %v4759
    %v5419 = vsel %vm5411, %v5395, %v4760
    %v5420 = vsel %vm5412, %v5396, %v4761
    %v5421 = vsel %vm5413, %v5397, %v4762
    %v5422 = vsel %vm5414, %v5398, %v4763
    %v5423 = vsel %vm5415, %v5399, %v4764
    %v5424 = vsel %vm5416, %v5400, %v4765
    %v5425 = vsel %vm5417, %v5401, %v4766
    %5426 = vst.msk [vmem:[#allocation4 + $0x7] sm:$0x1] %vm876, %v5418
    %5427 = vst.msk [vmem:[#allocation4 + $0xf] sm:$0x1] %vm876, %v5419
    %5428 = vst.msk [vmem:[#allocation4 + $0x17] sm:$0x1] %vm876, %v5420
    %5429 = vst.msk [vmem:[#allocation4 + $0x1f] sm:$0x1] %vm876, %v5421
    %5430 = vst.msk [vmem:[#allocation4 + $0x27] sm:$0x1] %vm876, %v5422
    %5431 = vst.msk [vmem:[#allocation4 + $0x2f] sm:$0x1] %vm876, %v5423
    %5432 = vst.msk [vmem:[#allocation4 + $0x37] sm:$0x1] %vm876, %v5424
    %5433 = vst.msk [vmem:[#allocation4 + $0x3f] sm:$0x1] %vm876, %v5425
    %5434 = vst.msk [vmem:[#allocation4] sm:$0x1] %vm885, %v5418
    %5435 = vst.msk [vmem:[#allocation4 + $0x8] sm:$0x1] %vm885, %v5419
    %5436 = vst.msk [vmem:[#allocation4 + $0x10] sm:$0x1] %vm885, %v5420
    %5437 = vst.msk [vmem:[#allocation4 + $0x18] sm:$0x1] %vm885, %v5421
    %5438 = vst.msk [vmem:[#allocation4 + $0x20] sm:$0x1] %vm885, %v5422
    %5439 = vst.msk [vmem:[#allocation4 + $0x28] sm:$0x1] %vm885, %v5423
    %5440 = vst.msk [vmem:[#allocation4 + $0x30] sm:$0x1] %vm885, %v5424
    %5441 = vst.msk [vmem:[#allocation4 + $0x38] sm:$0x1] %vm885, %v5425
    %v5442 = vld [vmem:[#allocation4] sm:$0xff]
    %v5443 = vld [vmem:[#allocation4 + $0x8] sm:$0xff]
    %v5444 = vld [vmem:[#allocation4 + $0x10] sm:$0xff]
    %v5445 = vld [vmem:[#allocation4 + $0x18] sm:$0xff]
    %v5446 = vld [vmem:[#allocation4 + $0x20] sm:$0xff]
    %v5447 = vld [vmem:[#allocation4 + $0x28] sm:$0xff]
    %v5448 = vld [vmem:[#allocation4 + $0x30] sm:$0xff]
    %v5449 = vld [vmem:[#allocation4 + $0x38] sm:$0xff]
    %v5450 = vld [vmem:[%s6] sm:$0xff]
    %v5451 = vld [vmem:[%s6 + $0x8] sm:$0xff]
    %v5452 = vld [vmem:[%s6 + $0x10] sm:$0xff]
    %v5453 = vld [vmem:[%s6 + $0x18] sm:$0xff]
    %v5454 = vld [vmem:[%s6 + $0x20] sm:$0xff]
    %v5455 = vld [vmem:[%s6 + $0x28] sm:$0xff]
    %v5456 = vld [vmem:[%s6 + $0x30] sm:$0xff]
    %v5457 = vld [vmem:[%s6 + $0x38] sm:$0xff]
    %v5458 = vld [vmem:[%s7] sm:$0x1]
    %v5460 = vlaneseq
    %v5461 = vshrl.u32 %v5460, 7
    %v5462 = vsub.s32 0, %v5461
    %v5463 = vrot.slane %v5458, %v5462
    %v5466 = vsel %vm97, %v5442, 0
    %v5469 = vsel %vm97, %v5443, 0
    %v5472 = vsel %vm97, %v5444, 0
    %v5475 = vsel %vm97, %v5445, 0
    %v5478 = vsel %vm97, %v5446, 0
    %v5481 = vsel %vm97, %v5447, 0
    %v5484 = vsel %vm97, %v5448, 0
    %v5487 = vsel %vm97, %v5449, 0
    %5489 = vmatprep.subr.mxu0 0.0
    %5490 = vmatpush1.msra.mxu0 0.0
    %5491 = vmatprep.subr.mxu0 0.0
    %5492 = vmatpush1.msra.mxu0 0.0
    %5493 = vmatprep.subr.mxu0 0.0
    %5494 = vmatpush1.msra.mxu0 0.0
    %5495 = vmatprep.subr.mxu0 0.0
    %5496 = vmatpush1.msra.mxu0 0.0
    %5497 = vmatprep.subr.mxu0 0.0
    %5498 = vmatpush1.msra.mxu0 0.0
    %5499 = vmatprep.subr.mxu0 0.0
    %5500 = vmatpush1.msra.mxu0 0.0
    %5501 = vmatprep.subr.mxu0 0.0
    %5502 = vmatpush1.msra.mxu0 0.0
    %5503 = vmatprep.subr.mxu0 0.0
    %5504 = vmatpush1.msra.mxu0 0.0
    %5505 = vmatprep.subr.mxu0 0.0
    %5506 = vmatpush1.msra.mxu0 %v5457
    %5507 = vmatprep.subr.mxu0 0.0
    %5508 = vmatpush1.msra.mxu0 %v5456
    %5509 = vmatprep.subr.mxu0 0.0
    %5510 = vmatpush1.msra.mxu0 %v5455
    %5511 = vmatprep.subr.mxu0 0.0
    %5512 = vmatpush1.msra.mxu0 %v5454
    %5513 = vmatprep.subr.mxu0 0.0
    %5514 = vmatpush1.msra.mxu0 %v5453
    %5515 = vmatprep.subr.mxu0 0.0
    %5516 = vmatpush1.msra.mxu0 %v5452
    %5517 = vmatprep.subr.mxu0 0.0
    %5518 = vmatpush1.msra.mxu0 %v5451
    %5519 = vmatprep.subr.mxu0 0.0
    %5520 = vmatpush1.msra.mxu0 %v5450
    %5521 = vmatprep.subr.mxu0 0.0
    %5522 = vmatpush2.msra.mxu0 0.0
    %5523 = vmatprep.subr.mxu0 0.0
    %5524 = vmatpush2.msra.mxu0 0.0
    %5525 = vmatprep.subr.mxu0 0.0
    %5526 = vmatpush2.msra.mxu0 0.0
    %5527 = vmatprep.subr.mxu0 0.0
    %5528 = vmatpush2.msra.mxu0 0.0
    %5529 = vmatprep.subr.mxu0 0.0
    %5530 = vmatpush2.msra.mxu0 0.0
    %5531 = vmatprep.subr.mxu0 0.0
    %5532 = vmatpush2.msra.mxu0 0.0
    %5533 = vmatprep.subr.mxu0 0.0
    %5534 = vmatpush2.msra.mxu0 0.0
    %5535 = vmatprep.subr.mxu0 0.0
    %5536 = vmatpush2.msra.mxu0 0.0
    %5537 = vmatprep.subr.mxu0 0.0
    %5538 = vmatpush2.msra.mxu0 0.0
    %5539 = vmatprep.subr.mxu0 0.0
    %5540 = vmatpush2.msra.mxu0 0.0
    %5541 = vmatprep.subr.mxu0 0.0
    %5542 = vmatpush2.msra.mxu0 0.0
    %5543 = vmatprep.subr.mxu0 0.0
    %5544 = vmatpush2.msra.mxu0 0.0
    %5545 = vmatprep.subr.mxu0 0.0
    %5546 = vmatpush2.msra.mxu0 0.0
    %5547 = vmatprep.subr.mxu0 0.0
    %5548 = vmatpush2.msra.mxu0 0.0
    %5549 = vmatprep.subr.mxu0 0.0
    %5550 = vmatpush2.msra.mxu0 0.0
    %5551 = vmatprep.subr.mxu0 0.0
    %5552 = vmatpush2.msra.mxu0 0.0
    %5553 = vmatprep.mubr.f32.mxu0 0.0
    %5554 = vmatmul.mubr.f32.gmra.mxu0 %v5466
    %v5555 = vpop.f32.mrf.mxu0
    %v5556 = vadd.f32 %v5463, %v5555
    %v5557 = vpop.f32.mrf.mxu0
    %5558 = vmatprep.mubr.f32.mxu0 0.0
    %5559 = vmatmul.mubr.f32.gmra.mxu0 %v5469
    %v5560 = vpop.f32.mrf.mxu0
    %v5561 = vadd.f32 %v5463, %v5560
    %v5562 = vpop.f32.mrf.mxu0
    %5563 = vmatprep.mubr.f32.mxu0 0.0
    %5564 = vmatmul.mubr.f32.gmra.mxu0 %v5472
    %v5565 = vpop.f32.mrf.mxu0
    %v5566 = vadd.f32 %v5463, %v5565
    %v5567 = vpop.f32.mrf.mxu0
    %5568 = vmatprep.mubr.f32.mxu0 0.0
    %5569 = vmatmul.mubr.f32.gmra.mxu0 %v5475
    %v5570 = vpop.f32.mrf.mxu0
    %v5571 = vadd.f32 %v5463, %v5570
    %v5572 = vpop.f32.mrf.mxu0
    %5573 = vmatprep.mubr.f32.mxu0 0.0
    %5574 = vmatmul.mubr.f32.gmra.mxu0 %v5478
    %v5575 = vpop.f32.mrf.mxu0
    %v5576 = vadd.f32 %v5463, %v5575
    %v5577 = vpop.f32.mrf.mxu0
    %5578 = vmatprep.mubr.f32.mxu0 0.0
    %5579 = vmatmul.mubr.f32.gmra.mxu0 %v5481
    %v5580 = vpop.f32.mrf.mxu0
    %v5581 = vadd.f32 %v5463, %v5580
    %v5582 = vpop.f32.mrf.mxu0
    %5583 = vmatprep.mubr.f32.mxu0 0.0
    %5584 = vmatmul.mubr.f32.gmra.mxu0 %v5484
    %v5585 = vpop.f32.mrf.mxu0
    %v5586 = vadd.f32 %v5463, %v5585
    %v5587 = vpop.f32.mrf.mxu0
    %5588 = vmatprep.mubr.f32.mxu0 0.0
    %5589 = vmatmul.mubr.f32.gmra.mxu0 %v5487
    %v5590 = vpop.f32.mrf.mxu0
    %v5591 = vadd.f32 %v5463, %v5590
    %v5592 = vpop.f32.mrf.mxu0
    %5593 = vdwg.mxu0
    %v5594 = vtanh.pop %v5556
    %v5595 = vtanh.pop %v5561
    %v5596 = vtanh.pop %v5566
    %v5597 = vtanh.pop %v5571
    %v5598 = vtanh.pop %v5576
    %v5599 = vtanh.pop %v5581
    %v5600 = vtanh.pop %v5586
    %v5601 = vtanh.pop %v5591
    %v5602 = vld [vmem:[%s8] sm:$0x1]
    %v5604 = vlaneseq
    %v5605 = vshrl.u32 %v5604, 7
    %v5606 = vsub.s32 0, %v5605
    %v5607 = vrot.slane %v5602, %v5606
    %v5609 = vmul.f32 %v5594, %v5607
    %v5610 = vmul.f32 %v5595, %v5607
    %v5611 = vmul.f32 %v5596, %v5607
    %v5612 = vmul.f32 %v5597, %v5607
    %v5613 = vmul.f32 %v5598, %v5607
    %v5614 = vmul.f32 %v5599, %v5607
    %v5615 = vmul.f32 %v5600, %v5607
    %v5616 = vmul.f32 %v5601, %v5607
    %v5617 = vsel %vm309, %v5609, 0.0
    %5618 = vadd.xlane.f32.xlu0 %v5617
    %v5619 = vpop.xlane.xlu0 %5618
    %v5620 = vsel %vm309, %v5610, 0.0
    %5621 = vadd.xlane.f32.xlu0 %v5620
    %v5622 = vpop.xlane.xlu0 %5621
    %v5623 = vsel %vm309, %v5611, 0.0
    %5624 = vadd.xlane.f32.xlu0 %v5623
    %v5625 = vpop.xlane.xlu0 %5624
    %v5626 = vsel %vm309, %v5612, 0.0
    %5627 = vadd.xlane.f32.xlu0 %v5626
    %v5628 = vpop.xlane.xlu0 %5627
    %v5629 = vsel %vm309, %v5613, 0.0
    %5630 = vadd.xlane.f32.xlu0 %v5629
    %v5631 = vpop.xlane.xlu0 %5630
    %v5632 = vsel %vm309, %v5614, 0.0
    %5633 = vadd.xlane.f32.xlu0 %v5632
    %v5634 = vpop.xlane.xlu0 %5633
    %v5635 = vsel %vm309, %v5615, 0.0
    %5636 = vadd.xlane.f32.xlu0 %v5635
    %v5637 = vpop.xlane.xlu0 %5636
    %v5638 = vsel %vm309, %v5616, 0.0
    %5639 = vadd.xlane.f32.xlu0 %v5638
    %v5640 = vpop.xlane.xlu0 %5639
    %vm5641 = vcmp.gt.f32.partialorder %v251, 0.0
    %v5650 = vlaneseq
    %v5651 = vand.u32 %v5650, 127
    %v5652 = vlaneseq
    %v5653 = vshrl.u32 %v5652, 7
    %v5654 = vsub.s32 %v5651, %v5653
    %v5655 = vrot.slane %v5619, %v5654
    %v5656 = vlaneseq
    %v5657 = vshrl.u32 %v5656, 7
    %v5658 = vsub.s32 %v5651, %v5657
    %v5659 = vrot.slane %v5622, %v5658
    %v5660 = vlaneseq
    %v5661 = vshrl.u32 %v5660, 7
    %v5662 = vsub.s32 %v5651, %v5661
    %v5663 = vrot.slane %v5625, %v5662
    %v5664 = vlaneseq
    %v5665 = vshrl.u32 %v5664, 7
    %v5666 = vsub.s32 %v5651, %v5665
    %v5667 = vrot.slane %v5628, %v5666
    %v5668 = vlaneseq
    %v5669 = vshrl.u32 %v5668, 7
    %v5670 = vsub.s32 %v5651, %v5669
    %v5671 = vrot.slane %v5631, %v5670
    %v5672 = vlaneseq
    %v5673 = vshrl.u32 %v5672, 7
    %v5674 = vsub.s32 %v5651, %v5673
    %v5675 = vrot.slane %v5634, %v5674
    %v5676 = vlaneseq
    %v5677 = vshrl.u32 %v5676, 7
    %v5678 = vsub.s32 %v5651, %v5677
    %v5679 = vrot.slane %v5637, %v5678
    %v5680 = vlaneseq
    %v5681 = vshrl.u32 %v5680, 7
    %v5682 = vsub.s32 %v5651, %v5681
    %v5683 = vrot.slane %v5640, %v5682
    %v5684 = vsel %vm919, %v5659, %v5655
    %v5685 = vsel %vm922, %v5663, %v5684
    %v5686 = vsel %vm925, %v5667, %v5685
    %v5687 = vsel %vm928, %v5671, %v5686
    %v5688 = vsel %vm931, %v5675, %v5687
    %v5689 = vsel %vm934, %v5679, %v5688
    %v5690 = vsel %vm937, %v5683, %v5689
    %v5692 = vsel %vm5641, %v5690, -1e+09
    %vm5693 = vcmask 64512
    %v5694 = vsel %vm5693, %v5692, -inf
    %5695 = vmax.xlane.f32.xlu0 %v5694
    %v5696 = vpop.xlane.xlu0 %5695
    %v5697 = vsub.f32 %v5692, %v5696
    %v5698 = vmul.f32 %v5697, 1.442695
    %v5699 = vpow.pop %v5698
    %v5700 = vsel %vm5693, %v5699, 0.0
    %5701 = vadd.xlane.f32.xlu0 %v5700
    %v5702 = vpop.xlane.xlu0 %5701
    %v5703 = vrcp.pop %v5702
    %v5704 = vmul.f32 %v5699, %v5703
    %v5705 = vlaneseq
    %v5706 = vshrl.u32 %v5705, 7
    %v5707 = vsub.s32 0, %v5706
    %v5708 = vrot.slane %v5704, %v5707
    %5710 = vbcast.lane.b32.xlu0 %v5708, 256
    %v5711 = vpop.permute.xlu0 %5710
    %v5712 = vlaneseq
    %v5713 = vshrl.u32 %v5712, 7
    %v5714 = vsub.s32 1, %v5713
    %v5715 = vrot.slane %v5704, %v5714
    %5717 = vbcast.lane.b32.xlu0 %v5715, 256
    %v5718 = vpop.permute.xlu0 %5717
    %v5719 = vlaneseq
    %v5720 = vshrl.u32 %v5719, 7
    %v5721 = vsub.s32 2, %v5720
    %v5722 = vrot.slane %v5704, %v5721
    %5724 = vbcast.lane.b32.xlu0 %v5722, 256
    %v5725 = vpop.permute.xlu0 %5724
    %v5726 = vlaneseq
    %v5727 = vshrl.u32 %v5726, 7
    %v5728 = vsub.s32 3, %v5727
    %v5729 = vrot.slane %v5704, %v5728
    %5731 = vbcast.lane.b32.xlu0 %v5729, 256
    %v5732 = vpop.permute.xlu0 %5731
    %v5733 = vlaneseq
    %v5734 = vshrl.u32 %v5733, 7
    %v5735 = vsub.s32 4, %v5734
    %v5736 = vrot.slane %v5704, %v5735
    %5738 = vbcast.lane.b32.xlu0 %v5736, 256
    %v5739 = vpop.permute.xlu0 %5738
    %v5740 = vlaneseq
    %v5741 = vshrl.u32 %v5740, 7
    %v5742 = vsub.s32 5, %v5741
    %v5743 = vrot.slane %v5704, %v5742
    %5745 = vbcast.lane.b32.xlu0 %v5743, 256
    %v5746 = vpop.permute.xlu0 %5745
    %v5747 = vlaneseq
    %v5748 = vshrl.u32 %v5747, 7
    %v5749 = vsub.s32 6, %v5748
    %v5750 = vrot.slane %v5704, %v5749
    %5752 = vbcast.lane.b32.xlu0 %v5750, 256
    %v5753 = vpop.permute.xlu0 %5752
    %v5754 = vlaneseq
    %v5755 = vshrl.u32 %v5754, 7
    %v5756 = vsub.s32 7, %v5755
    %v5757 = vrot.slane %v5704, %v5756
    %5759 = vbcast.lane.b32.xlu0 %v5757, 256
    %v5760 = vpop.permute.xlu0 %5759
    %v5761 = vmul.f32 %v5442, %v5711
    %v5762 = vmul.f32 %v5443, %v5718
    %v5763 = vmul.f32 %v5444, %v5725
    %v5764 = vmul.f32 %v5445, %v5732
    %v5765 = vmul.f32 %v5446, %v5739
    %v5766 = vmul.f32 %v5447, %v5746
    %v5767 = vmul.f32 %v5448, %v5753
    %v5768 = vmul.f32 %v5449, %v5760
    %v5769 = vsel %vm97, %v5761, 0.0
    %v5770 = vrot.slane %v5769, 4
    %v5771 = vadd.f32 %v5769, %v5770
    %v5772 = vrot.slane %v5771, 2
    %v5773 = vadd.f32 %v5771, %v5772
    %v5774 = vrot.slane %v5773, 1
    %v5775 = vadd.f32 %v5773, %v5774
    %v5776 = vsel %vm97, %v5762, 0.0
    %v5777 = vrot.slane %v5776, 4
    %v5778 = vadd.f32 %v5776, %v5777
    %v5779 = vrot.slane %v5778, 2
    %v5780 = vadd.f32 %v5778, %v5779
    %v5781 = vrot.slane %v5780, 1
    %v5782 = vadd.f32 %v5780, %v5781
    %v5783 = vsel %vm97, %v5763, 0.0
    %v5784 = vrot.slane %v5783, 4
    %v5785 = vadd.f32 %v5783, %v5784
    %v5786 = vrot.slane %v5785, 2
    %v5787 = vadd.f32 %v5785, %v5786
    %v5788 = vrot.slane %v5787, 1
    %v5789 = vadd.f32 %v5787, %v5788
    %v5790 = vsel %vm97, %v5764, 0.0
    %v5791 = vrot.slane %v5790, 4
    %v5792 = vadd.f32 %v5790, %v5791
    %v5793 = vrot.slane %v5792, 2
    %v5794 = vadd.f32 %v5792, %v5793
    %v5795 = vrot.slane %v5794, 1
    %v5796 = vadd.f32 %v5794, %v5795
    %v5797 = vsel %vm97, %v5765, 0.0
    %v5798 = vrot.slane %v5797, 4
    %v5799 = vadd.f32 %v5797, %v5798
    %v5800 = vrot.slane %v5799, 2
    %v5801 = vadd.f32 %v5799, %v5800
    %v5802 = vrot.slane %v5801, 1
    %v5803 = vadd.f32 %v5801, %v5802
    %v5804 = vsel %vm97, %v5766, 0.0
    %v5805 = vrot.slane %v5804, 4
    %v5806 = vadd.f32 %v5804, %v5805
    %v5807 = vrot.slane %v5806, 2
    %v5808 = vadd.f32 %v5806, %v5807
    %v5809 = vrot.slane %v5808, 1
    %v5810 = vadd.f32 %v5808, %v5809
    %v5811 = vsel %vm97, %v5767, 0.0
    %v5812 = vrot.slane %v5811, 4
    %v5813 = vadd.f32 %v5811, %v5812
    %v5814 = vrot.slane %v5813, 2
    %v5815 = vadd.f32 %v5813, %v5814
    %v5816 = vrot.slane %v5815, 1
    %v5817 = vadd.f32 %v5815, %v5816
    %v5818 = vsel %vm97, %v5768, 0.0
    %v5819 = vrot.slane %v5818, 4
    %v5820 = vadd.f32 %v5818, %v5819
    %v5821 = vrot.slane %v5820, 2
    %v5822 = vadd.f32 %v5820, %v5821
    %v5823 = vrot.slane %v5822, 1
    %v5824 = vadd.f32 %v5822, %v5823
    %v5833 = vsel %vm919, %v5782, %v5775
    %v5834 = vsel %vm922, %v5789, %v5833
    %v5835 = vsel %vm925, %v5796, %v5834
    %v5836 = vsel %vm928, %v5803, %v5835
    %v5837 = vsel %vm931, %v5810, %v5836
    %v5838 = vsel %vm934, %v5817, %v5837
    %v5839 = vsel %vm937, %v5824, %v5838
    %5841 = vst.msk [vmem:[#allocation10] sm:$0xff] %vm97, %v5839
    // Predicated region
    $region46: #{tpu_custom_call.1} parent=1 // pred_check
      _
    $region47: #{tpu_custom_call.1} parent=1 // pred_check_branch
      %5843 = sbr.rel (0) target = $region49
    $region48: #{tpu_custom_call.1} parent=1 // pred_region
      %s5845 = ssub.s32 128, 128
      %5846 = vsyncadd [#allocation7], %s5845
      %s5848 = sshll.u32 [#allocation10], 4
      %s5849 = int_to_ptr.vmem [resolvable:$true] %s5848
      %5851 = dma.vmem_to_hbm [thread:$0]  %s5849, 128, %s9, [#allocation7]
    $region49: #{tpu_custom_call.1} parent=1 // pred_fallthru
      _
    // Predicated region
    $region50: #{tpu_custom_call.1} parent=1 // pred_check
      _
    $region51: #{tpu_custom_call.1} parent=1 // pred_check_branch
      %5853 = sbr.rel (0) target = $region53
    $region52: #{tpu_custom_call.1} parent=1 // pred_region
      %5854 = dma.done [#allocation7], 128
    $region53: #{tpu_custom_call.1} parent=1 // pred_fallthru
      _
    %5855 = vsyncpa [#allocation6], 1
    %5856 = vsyncpa [#allocation9], 1
    %5857 = vsyncpa [#allocation7], 1

</llo_original>
